<compile_context>
chip_gen: v7x
topology: tpu7x:2x2x1
jax: 0.10.0
libtpu: 0.0.40
codegen_flags: <defaults>
</compile_context>

<pallas_src>
import math

import jax
import jax.numpy as jnp
from jax.experimental import pallas as pl
from jax.experimental.pallas import tpu as pltpu  # noqa: F401  (TPU backend)

# ----------------------------- configuration -----------------------------------
N_NODES = 16
N_EDGES = 48
INPUT_DIM = 32
HIDDEN_DIM = 32       # residual/out_fc in the module require input==hidden==output
OUTPUT_DIM = 32
N_HEADS = 4
HEAD_DIM = OUTPUT_DIM // N_HEADS
EDGE_FEAT_DIM = 4
R_FEAT_DIM = 16
KV_INPUT_DIM = 2 * INPUT_DIM + EDGE_FEAT_DIM + R_FEAT_DIM
LN_EPS = 1e-5
NEG_BIG = 1e30


# ------------------------------ fused kernel ------------------------------------
def x2h_fused_kernel(
    # data
    h_ref, r_ref, ef_ref, dst_row_ref, dst_col_ref, src_col_ref,
    # q MLP
    wq1_ref, bq1_ref, gq_ref, beq_ref, wq2_ref, bq2_ref,
    # fused k|v first layer (split by kv_input slab) + per-half LN params
    wkv1_e_ref, wkv1_r_ref, wkv1_hi_ref, wkv1_hj_ref, bkv1_ref, gkv_ref, bekv_ref,
    # per-half averaging matrix + zero-extended second-layer weights
    m_avg_ref, wk2_ref, bk2_ref, wv2_ref, bv2_ref,
    # ew net (lane-broadcast)
    wew_ref, bew_ref,
    # head sum (scaled) / head broadcast matrices
    hsum_ref, hbc_ref,
    # out MLP ([agg | h] split weights)
    wo1_a_ref, wo1_h_ref, bo1_ref, go_ref, beo_ref, wo2_ref, bo2_ref,
    # output
    o_ref,
):
    f32 = jnp.float32
    h = h_ref[...]                         # [N, C]
    r = r_ref[...]                         # [E, R]
    ef = ef_ref[...]                       # [E, F]
    n = h.shape[0]
    e = r.shape[0]

    def dot(a, b):
        return jnp.dot(a, b, preferred_element_type=f32)

    def ln(x, g, b):
        mu = jnp.mean(x, axis=-1, keepdims=True)
        var = jnp.mean((x - mu) ** 2, axis=-1, keepdims=True)
        return (x - mu) * jax.lax.rsqrt(var + LN_EPS) * g + b

    # ---- one-hot scatter/gather matrices built in-kernel (MXU friendly) -------
    iota_ne = jax.lax.broadcasted_iota(jnp.int32, (n, e), 0)
    oh = (iota_ne == dst_row_ref[...]).astype(f32)            # [N,E] scatter by dst
    iota_en = jax.lax.broadcasted_iota(jnp.int32, (e, n), 1)
    gdst = (iota_en == dst_col_ref[...]).astype(f32)          # [E,N] gather at dst
    gsrc = (iota_en == src_col_ref[...]).astype(f32)          # [E,N] gather at src

    # ---- q MLP on nodes: Linear -> LN -> ReLU -> Linear, then gather to edges -
    qmid = dot(h, wq1_ref[...]) + bq1_ref[...]
    qmid = jnp.maximum(ln(qmid, gq_ref[...], beq_ref[...]), 0.0)
    q = dot(qmid, wq2_ref[...]) + bq2_ref[...]                # [N,D]
    q_dst = dot(gdst, q)                                      # [E,D]

    # ---- fused k|v first layer: shared kv_input slabs, 2*hidden wide output ----
    kv_mid = (dot(ef, wkv1_e_ref[...])
              + dot(r, wkv1_r_ref[...])
              + dot(gdst, dot(h, wkv1_hi_ref[...]))           # h[dst] @ W1_hi
              + dot(gsrc, dot(h, wkv1_hj_ref[...]))           # h[src] @ W1_hj
              + bkv1_ref[...])                                # [E, 2*hidden]
    # per-half LayerNorm via block-averaging matmul (keeps slab 64 lanes wide)
    m_avg = m_avg_ref[...]
    mu = dot(kv_mid, m_avg)
    cent = kv_mid - mu
    var = dot(cent * cent, m_avg)
    kv_act = jnp.maximum(
        cent * jax.lax.rsqrt(var + LN_EPS) * gkv_ref[...] + bekv_ref[...], 0.0)
    k = dot(kv_act, wk2_ref[...]) + bk2_ref[...]              # [E,D]
    v = dot(kv_act, wv2_ref[...]) + bv2_ref[...]              # [E,D]

    # ---- ew_net: sigmoid(Linear(r_feat)), weights lane-broadcast to D ----------
    ew = jax.nn.sigmoid(dot(r, wew_ref[...]) + bew_ref[...])  # [E,D]
    v = v * ew

    # ---- scatter_softmax over dst groups (dense one-hot matmul form) -----------
    scores = dot(q_dst * k, hsum_ref[...])                    # [E,H] (1/sqrt(dh) folded in)
    neg = (oh - 1.0) * NEG_BIG                                # [N,E]: 0 on own edges, -1e30 else
    masked = scores.T[None, :, :] + neg[:, None, :]           # [N,H,E] additive mask
    mx_n = jnp.max(masked, axis=-1)                           # [N,H] per-dst per-head max
    p = jnp.exp(scores - dot(gdst, mx_n))                     # [E,H]
    den_e = dot(gdst, dot(oh, p))                             # [E,H]
    alpha = p * pl.reciprocal(den_e, approx=False)            # [E,H]
    m = dot(alpha, hbc_ref[...]) * v                          # [E,D]
    agg = dot(oh, m)                                          # [N,D] scatter_sum by dst

    # ---- out MLP on [agg | h] (split weights, no concat) + residual ------------
    omid = dot(agg, wo1_a_ref[...]) + dot(h, wo1_h_ref[...]) + bo1_ref[...]
    omid = jnp.maximum(ln(omid, go_ref[...], beo_ref[...]), 0.0)
    o_ref[...] = dot(omid, wo2_ref[...]) + bo2_ref[...] + h


# --------------------------- host-side weight prep -------------------------------
def _prep_weights(params):
    wq1, bq1, gq, beq, wq2, bq2 = params["hq"]
    wk1, bk1, gk, bek, wk2, bk2 = params["hk"]
    wv1, bv1, gv, bev, wv2, bv2 = params["hv"]
    wo1, bo1, go, beo, wo2, bo2 = params["out"]

    hdim, d = HIDDEN_DIM, OUTPUT_DIM
    # kv_input column layout in the module: [edge_feat | r_feat | h_dst | h_src]
    s1 = EDGE_FEAT_DIM
    s2 = EDGE_FEAT_DIM + R_FEAT_DIM
    s3 = EDGE_FEAT_DIM + R_FEAT_DIM + INPUT_DIM

    wkv1 = jnp.concatenate([wk1, wv1], axis=1)                      # [84, 2*hidden]
    wkv1_e, wkv1_r = wkv1[:s1], wkv1[s1:s2]
    wkv1_hi, wkv1_hj = wkv1[s2:s3], wkv1[s3:]
    bkv1 = jnp.concatenate([bk1, bv1], axis=1)
    gkv = jnp.concatenate([gk, gv], axis=1)
    bekv = jnp.concatenate([bek, bev], axis=1)

    # block-diagonal per-half averaging matrix for the fused LayerNorm stats
    m_avg = jnp.kron(jnp.eye(2, dtype=jnp.float32),
                     jnp.full((hdim, hdim), 1.0 / hdim, jnp.float32))   # [2h, 2h]
    zeros = jnp.zeros((hdim, d), jnp.float32)
    wk2_ext = jnp.concatenate([wk2, zeros], axis=0)                 # [2h, d]
    wv2_ext = jnp.concatenate([zeros, wv2], axis=0)                 # [2h, d]

    # ew net: broadcast the single output column across all D lanes
    wew_b = jnp.tile(params["ew_w"], (1, d))                        # [R, D]
    bew_b = jnp.tile(params["ew_b"].reshape(1, 1), (1, d))          # [1, D]

    # per-head sum (with 1/sqrt(head_dim) folded in) and head-broadcast matrices
    head_of = jnp.arange(d) // HEAD_DIM
    hsum = (head_of[:, None] == jnp.arange(N_HEADS)[None, :]).astype(jnp.float32)
    hsum = hsum * (1.0 / math.sqrt(HEAD_DIM))                       # [D, H]
    hbc = (jnp.arange(N_HEADS)[:, None] == head_of[None, :]).astype(jnp.float32)  # [H, D]

    # out MLP input layout: [agg | h]
    wo1_a, wo1_h = wo1[:hdim], wo1[hdim:]

    return (wq1, bq1, gq, beq, wq2, bq2,
            wkv1_e, wkv1_r, wkv1_hi, wkv1_hj, bkv1, gkv, bekv,
            m_avg, wk2_ext, bk2, wv2_ext, bv2,
            wew_b, bew_b, hsum, hbc,
            wo1_a, wo1_h, bo1, go, beo, wo2, bo2)


# ------------------------------- full forward -------------------------------------
def forward_pallas(params, h, r_feat, edge_feat, edge_index):
    e = r_feat.shape[0]
    src = edge_index[0].astype(jnp.int32)
    dst = edge_index[1].astype(jnp.int32)
    dst_row = dst.reshape(1, e)
    dst_col = dst.reshape(e, 1)
    src_col = src.reshape(e, 1)

    args = (h, r_feat, edge_feat, dst_row, dst_col, src_col) + _prep_weights(params)
    # Single fused kernel, no grid: every operand is a full-array VMEM block.
    return pl.pallas_call(
        x2h_fused_kernel,
        out_shape=jax.ShapeDtypeStruct((h.shape[0], HIDDEN_DIM), jnp.float32),
    )(*args)


# ------------------------------ pure-JAX reference --------------------------------
def _mlp_ref(x, p):
    w1, b1, g, be, w2, b2 = p
    hp = jax.lax.Precision.HIGHEST
    m = jnp.dot(x, w1, precision=hp) + b1
    mu = jnp.mean(m, axis=-1, keepdims=True)
    var = jnp.mean((m - mu) ** 2, axis=-1, keepdims=True)
    m = (m - mu) * jax.lax.rsqrt(var + LN_EPS) * g + be
    m = jnp.maximum(m, 0.0)
    return jnp.dot(m, w2, precision=hp) + b2


def forward_reference(params, h, r_feat, edge_feat, edge_index):
    hp = jax.lax.Precision.HIGHEST
    src, dst = edge_index[0], edge_index[1]
    hi, hj = h[dst], h[src]
    kv_input = jnp.concatenate([edge_feat, r_feat, hi, hj], axis=-1)
    k = _mlp_ref(kv_input, params["hk"]).reshape(-1, N_HEADS, HEAD_DIM)
    v = _mlp_ref(kv_input, params["hv"])
    e_w = jax.nn.sigmoid(jnp.dot(r_feat, params["ew_w"], precision=hp) + params["ew_b"])
    v = (v * e_w).reshape(-1, N_HEADS, HEAD_DIM)
    q = _mlp_ref(h, params["hq"]).reshape(-1, N_HEADS, HEAD_DIM)
    scores = (q[dst] * k / jnp.sqrt(jnp.float32(HEAD_DIM))).sum(-1)        # [E, H]
    mx = jax.ops.segment_max(scores, dst, num_segments=N_NODES)
    p = jnp.exp(scores - mx[dst])
    den = jax.ops.segment_sum(p, dst, num_segments=N_NODES)
    alpha = p / den[dst]
    m = alpha[..., None] * v
    out = jax.ops.segment_sum(m, dst, num_segments=N_NODES).reshape(N_NODES, OUTPUT_DIM)
    out = _mlp_ref(jnp.concatenate([out, h], axis=-1), params["out"])
    return out + h


# ---------------------------------- params ----------------------------------------
def init_mlp_params(key, din, dhid, dout):
    k1, k2, k3, k4, k5, k6 = jax.random.split(key, 6)
    w1 = jax.random.normal(k1, (din, dhid), jnp.float32) / jnp.sqrt(jnp.float32(din))
    b1 = 0.1 * jax.random.normal(k2, (1, dhid), jnp.float32)
    g = 1.0 + 0.1 * jax.random.normal(k3, (1, dhid), jnp.float32)
    be = 0.1 * jax.random.normal(k4, (1, dhid), jnp.float32)
    w2 = jax.random.normal(k5, (dhid, dout), jnp.float32) / jnp.sqrt(jnp.float32(dhid))
    b2 = 0.1 * jax.random.normal(k6, (1, dout), jnp.float32)
    return (w1, b1, g, be, w2, b2)


if __name__ == "__main__":
    root = jax.random.PRNGKey(0)
    keys = jax.random.split(root, 11)

    params = {
        "hk": init_mlp_params(keys[0], KV_INPUT_DIM, HIDDEN_DIM, OUTPUT_DIM),
        "hv": init_mlp_params(keys[1], KV_INPUT_DIM, HIDDEN_DIM, OUTPUT_DIM),
        "hq": init_mlp_params(keys[2], INPUT_DIM, HIDDEN_DIM, OUTPUT_DIM),
        "out": init_mlp_params(keys[3], 2 * HIDDEN_DIM, HIDDEN_DIM, HIDDEN_DIM),
        "ew_w": jax.random.normal(keys[4], (R_FEAT_DIM, 1), jnp.float32)
                / jnp.sqrt(jnp.float32(R_FEAT_DIM)),
        "ew_b": 0.1 * jax.random.normal(keys[5], (1, 1), jnp.float32),
    }

    h = jax.random.normal(keys[6], (N_NODES, INPUT_DIM), jnp.float32)
    r_feat = jax.random.normal(keys[7], (N_EDGES, R_FEAT_DIM), jnp.float32)
    edge_feat = jax.random.normal(keys[8], (N_EDGES, EDGE_FEAT_DIM), jnp.float32)
    src = jax.random.randint(keys[9], (N_EDGES,), 0, N_NODES, dtype=jnp.int32)
    dst = jax.random.randint(keys[10], (N_EDGES,), 0, N_NODES, dtype=jnp.int32)
    edge_index = jnp.stack([src, dst], axis=0)

    out = jax.jit(forward_pallas)(params, h, r_feat, edge_feat, edge_index)
    out = jax.block_until_ready(out)

    ref = forward_reference(params, h, r_feat, edge_feat, edge_index)
    assert out.shape == (N_NODES, HIDDEN_DIM)
    max_diff = jnp.max(jnp.abs(out - ref))
    assert jnp.allclose(out, ref, rtol=5e-3, atol=5e-3), f"max abs diff {max_diff}"
    print("KERNEL_OK")
</pallas_src>

<mosaic_0001>
module attributes {stable_mosaic.version = 11 : i64} {
  func.func @x2h_fused_kernel(%arg0: memref<16x32xf32, #tpu.memory_space<vmem>>, %arg1: memref<48x16xf32, #tpu.memory_space<vmem>>, %arg2: memref<48x4xf32, #tpu.memory_space<vmem>>, %arg3: memref<1x48xi32, #tpu.memory_space<vmem>>, %arg4: memref<48x1xi32, #tpu.memory_space<vmem>>, %arg5: memref<48x1xi32, #tpu.memory_space<vmem>>, %arg6: memref<32x32xf32, #tpu.memory_space<vmem>>, %arg7: memref<1x32xf32, #tpu.memory_space<vmem>>, %arg8: memref<1x32xf32, #tpu.memory_space<vmem>>, %arg9: memref<1x32xf32, #tpu.memory_space<vmem>>, %arg10: memref<32x32xf32, #tpu.memory_space<vmem>>, %arg11: memref<1x32xf32, #tpu.memory_space<vmem>>, %arg12: memref<4x64xf32, #tpu.memory_space<vmem>>, %arg13: memref<16x64xf32, #tpu.memory_space<vmem>>, %arg14: memref<32x64xf32, #tpu.memory_space<vmem>>, %arg15: memref<32x64xf32, #tpu.memory_space<vmem>>, %arg16: memref<1x64xf32, #tpu.memory_space<vmem>>, %arg17: memref<1x64xf32, #tpu.memory_space<vmem>>, %arg18: memref<1x64xf32, #tpu.memory_space<vmem>>, %arg19: memref<64x64xf32, #tpu.memory_space<vmem>>, %arg20: memref<64x32xf32, #tpu.memory_space<vmem>>, %arg21: memref<1x32xf32, #tpu.memory_space<vmem>>, %arg22: memref<64x32xf32, #tpu.memory_space<vmem>>, %arg23: memref<1x32xf32, #tpu.memory_space<vmem>>, %arg24: memref<16x32xf32, #tpu.memory_space<vmem>>, %arg25: memref<1x32xf32, #tpu.memory_space<vmem>>, %arg26: memref<32x4xf32, #tpu.memory_space<vmem>>, %arg27: memref<4x32xf32, #tpu.memory_space<vmem>>, %arg28: memref<32x32xf32, #tpu.memory_space<vmem>>, %arg29: memref<32x32xf32, #tpu.memory_space<vmem>>, %arg30: memref<1x32xf32, #tpu.memory_space<vmem>>, %arg31: memref<1x32xf32, #tpu.memory_space<vmem>>, %arg32: memref<1x32xf32, #tpu.memory_space<vmem>>, %arg33: memref<32x32xf32, #tpu.memory_space<vmem>>, %arg34: memref<1x32xf32, #tpu.memory_space<vmem>>, %arg35: memref<16x32xf32, #tpu.memory_space<vmem>>) attributes {dimension_semantics = [], scalar_prefetch = 0 : i64, scratch_operands = 0 : i64, tpu.core_type = #tpu.core_type<tc>} {
    %c0 = arith.constant 0 : index
    %c0_0 = arith.constant 0 : index
    %0 = vector.load %arg0[%c0, %c0_0] : memref<16x32xf32, #tpu.memory_space<vmem>>, vector<16x32xf32>
    %c0_1 = arith.constant 0 : index
    %c0_2 = arith.constant 0 : index
    %1 = vector.load %arg1[%c0_1, %c0_2] : memref<48x16xf32, #tpu.memory_space<vmem>>, vector<48x16xf32>
    %c0_3 = arith.constant 0 : index
    %c0_4 = arith.constant 0 : index
    %2 = vector.load %arg2[%c0_3, %c0_4] : memref<48x4xf32, #tpu.memory_space<vmem>>, vector<48x4xf32>
    %3 = tpu.iota {dimensions = array<i32: 0>} : vector<16x48xi32>
    %c0_5 = arith.constant 0 : index
    %c0_6 = arith.constant 0 : index
    %4 = vector.load %arg3[%c0_5, %c0_6] : memref<1x48xi32, #tpu.memory_space<vmem>>, vector<1x48xi32>
    %5 = vector.broadcast %4 : vector<1x48xi32> to vector<16x48xi32>
    %6 = arith.cmpi eq, %3, %5 : vector<16x48xi32>
    %7 = arith.extui %6 : vector<16x48xi1> to vector<16x48xi32>
    %8 = arith.sitofp %7 : vector<16x48xi32> to vector<16x48xf32>
    %9 = tpu.iota {dimensions = array<i32: 1>} : vector<48x16xi32>
    %c0_7 = arith.constant 0 : index
    %c0_8 = arith.constant 0 : index
    %10 = vector.load %arg4[%c0_7, %c0_8] : memref<48x1xi32, #tpu.memory_space<vmem>>, vector<48x1xi32>
    %11 = vector.broadcast %10 : vector<48x1xi32> to vector<48x16xi32>
    %12 = arith.cmpi eq, %9, %11 : vector<48x16xi32>
    %13 = arith.extui %12 : vector<48x16xi1> to vector<48x16xi32>
    %14 = arith.sitofp %13 : vector<48x16xi32> to vector<48x16xf32>
    %c0_9 = arith.constant 0 : index
    %c0_10 = arith.constant 0 : index
    %15 = vector.load %arg5[%c0_9, %c0_10] : memref<48x1xi32, #tpu.memory_space<vmem>>, vector<48x1xi32>
    %16 = vector.broadcast %15 : vector<48x1xi32> to vector<48x16xi32>
    %17 = arith.cmpi eq, %9, %16 : vector<48x16xi32>
    %18 = arith.extui %17 : vector<48x16xi1> to vector<48x16xi32>
    %19 = arith.sitofp %18 : vector<48x16xi32> to vector<48x16xf32>
    %c0_11 = arith.constant 0 : index
    %c0_12 = arith.constant 0 : index
    %20 = vector.load %arg6[%c0_11, %c0_12] : memref<32x32xf32, #tpu.memory_space<vmem>>, vector<32x32xf32>
    %cst = arith.constant dense<0.000000e+00> : vector<16x32xf32>
    %21 = tpu.matmul %0, %20, %cst {dimension_numbers = #tpu.dot_dimension_numbers<[1], [0], [0], [1], [0, 0, 1, 1], [], []>} : vector<16x32xf32>, vector<32x32xf32>, vector<16x32xf32> -> vector<16x32xf32>
    %c0_13 = arith.constant 0 : index
    %c0_14 = arith.constant 0 : index
    %22 = vector.load %arg7[%c0_13, %c0_14] : memref<1x32xf32, #tpu.memory_space<vmem>>, vector<1x32xf32>
    %23 = vector.broadcast %22 : vector<1x32xf32> to vector<16x32xf32>
    %24 = arith.addf %21, %23 : vector<16x32xf32>
    %c0_15 = arith.constant 0 : index
    %c0_16 = arith.constant 0 : index
    %25 = vector.load %arg8[%c0_15, %c0_16] : memref<1x32xf32, #tpu.memory_space<vmem>>, vector<1x32xf32>
    %c0_17 = arith.constant 0 : index
    %c0_18 = arith.constant 0 : index
    %26 = vector.load %arg9[%c0_17, %c0_18] : memref<1x32xf32, #tpu.memory_space<vmem>>, vector<1x32xf32>
    %cst_19 = arith.constant dense<0.000000e+00> : vector<16xf32>
    %27 = vector.multi_reduction <add>, %24, %cst_19 [1] : vector<16x32xf32> to vector<16xf32>
    %28 = vector.shape_cast %27 : vector<16xf32> to vector<16x1xf32>
    %cst_20 = arith.constant 3.200000e+01 : f32
    %29 = vector.broadcast %cst_20 : f32 to vector<16x1xf32>
    %30 = arith.divf %28, %29 : vector<16x1xf32>
    %31 = vector.broadcast %30 : vector<16x1xf32> to vector<16x32xf32>
    %32 = arith.subf %24, %31 : vector<16x32xf32>
    %33 = arith.mulf %32, %32 : vector<16x32xf32>
    %cst_21 = arith.constant dense<0.000000e+00> : vector<16xf32>
    %34 = vector.multi_reduction <add>, %33, %cst_21 [1] : vector<16x32xf32> to vector<16xf32>
    %35 = vector.shape_cast %34 : vector<16xf32> to vector<16x1xf32>
    %cst_22 = arith.constant 3.200000e+01 : f32
    %36 = vector.broadcast %cst_22 : f32 to vector<16x1xf32>
    %37 = arith.divf %35, %36 : vector<16x1xf32>
    %38 = vector.broadcast %30 : vector<16x1xf32> to vector<16x32xf32>
    %39 = arith.subf %24, %38 : vector<16x32xf32>
    %cst_23 = arith.constant 9.99999974E-6 : f32
    %40 = vector.broadcast %cst_23 : f32 to vector<16x1xf32>
    %41 = arith.addf %37, %40 : vector<16x1xf32>
    %42 = math.rsqrt %41 : vector<16x1xf32>
    %43 = vector.broadcast %42 : vector<16x1xf32> to vector<16x32xf32>
    %44 = arith.mulf %39, %43 : vector<16x32xf32>
    %45 = vector.broadcast %25 : vector<1x32xf32> to vector<16x32xf32>
    %46 = arith.mulf %44, %45 : vector<16x32xf32>
    %47 = vector.broadcast %26 : vector<1x32xf32> to vector<16x32xf32>
    %48 = arith.addf %46, %47 : vector<16x32xf32>
    %cst_24 = arith.constant 0.000000e+00 : f32
    %49 = vector.broadcast %cst_24 : f32 to vector<16x32xf32>
    %50 = arith.maximumf %48, %49 : vector<16x32xf32>
    %c0_25 = arith.constant 0 : index
    %c0_26 = arith.constant 0 : index
    %51 = vector.load %arg10[%c0_25, %c0_26] : memref<32x32xf32, #tpu.memory_space<vmem>>, vector<32x32xf32>
    %cst_27 = arith.constant dense<0.000000e+00> : vector<16x32xf32>
    %52 = tpu.matmul %50, %51, %cst_27 {dimension_numbers = #tpu.dot_dimension_numbers<[1], [0], [0], [1], [0, 0, 1, 1], [], []>} : vector<16x32xf32>, vector<32x32xf32>, vector<16x32xf32> -> vector<16x32xf32>
    %c0_28 = arith.constant 0 : index
    %c0_29 = arith.constant 0 : index
    %53 = vector.load %arg11[%c0_28, %c0_29] : memref<1x32xf32, #tpu.memory_space<vmem>>, vector<1x32xf32>
    %54 = vector.broadcast %53 : vector<1x32xf32> to vector<16x32xf32>
    %55 = arith.addf %52, %54 : vector<16x32xf32>
    %cst_30 = arith.constant dense<0.000000e+00> : vector<48x32xf32>
    %56 = tpu.matmul %14, %55, %cst_30 {dimension_numbers = #tpu.dot_dimension_numbers<[1], [0], [0], [1], [0, 0, 1, 1], [], []>} : vector<48x16xf32>, vector<16x32xf32>, vector<48x32xf32> -> vector<48x32xf32>
    %c0_31 = arith.constant 0 : index
    %c0_32 = arith.constant 0 : index
    %57 = vector.load %arg12[%c0_31, %c0_32] : memref<4x64xf32, #tpu.memory_space<vmem>>, vector<4x64xf32>
    %cst_33 = arith.constant dense<0.000000e+00> : vector<48x64xf32>
    %58 = tpu.matmul %2, %57, %cst_33 {dimension_numbers = #tpu.dot_dimension_numbers<[1], [0], [0], [1], [0, 0, 1, 1], [], []>} : vector<48x4xf32>, vector<4x64xf32>, vector<48x64xf32> -> vector<48x64xf32>
    %c0_34 = arith.constant 0 : index
    %c0_35 = arith.constant 0 : index
    %59 = vector.load %arg13[%c0_34, %c0_35] : memref<16x64xf32, #tpu.memory_space<vmem>>, vector<16x64xf32>
    %cst_36 = arith.constant dense<0.000000e+00> : vector<48x64xf32>
    %60 = tpu.matmul %1, %59, %cst_36 {dimension_numbers = #tpu.dot_dimension_numbers<[1], [0], [0], [1], [0, 0, 1, 1], [], []>} : vector<48x16xf32>, vector<16x64xf32>, vector<48x64xf32> -> vector<48x64xf32>
    %61 = arith.addf %58, %60 : vector<48x64xf32>
    %c0_37 = arith.constant 0 : index
    %c0_38 = arith.constant 0 : index
    %62 = vector.load %arg14[%c0_37, %c0_38] : memref<32x64xf32, #tpu.memory_space<vmem>>, vector<32x64xf32>
    %cst_39 = arith.constant dense<0.000000e+00> : vector<16x64xf32>
    %63 = tpu.matmul %0, %62, %cst_39 {dimension_numbers = #tpu.dot_dimension_numbers<[1], [0], [0], [1], [0, 0, 1, 1], [], []>} : vector<16x32xf32>, vector<32x64xf32>, vector<16x64xf32> -> vector<16x64xf32>
    %cst_40 = arith.constant dense<0.000000e+00> : vector<48x64xf32>
    %64 = tpu.matmul %14, %63, %cst_40 {dimension_numbers = #tpu.dot_dimension_numbers<[1], [0], [0], [1], [0, 0, 1, 1], [], []>} : vector<48x16xf32>, vector<16x64xf32>, vector<48x64xf32> -> vector<48x64xf32>
    %65 = arith.addf %61, %64 : vector<48x64xf32>
    %c0_41 = arith.constant 0 : index
    %c0_42 = arith.constant 0 : index
    %66 = vector.load %arg15[%c0_41, %c0_42] : memref<32x64xf32, #tpu.memory_space<vmem>>, vector<32x64xf32>
    %cst_43 = arith.constant dense<0.000000e+00> : vector<16x64xf32>
    %67 = tpu.matmul %0, %66, %cst_43 {dimension_numbers = #tpu.dot_dimension_numbers<[1], [0], [0], [1], [0, 0, 1, 1], [], []>} : vector<16x32xf32>, vector<32x64xf32>, vector<16x64xf32> -> vector<16x64xf32>
    %cst_44 = arith.constant dense<0.000000e+00> : vector<48x64xf32>
    %68 = tpu.matmul %19, %67, %cst_44 {dimension_numbers = #tpu.dot_dimension_numbers<[1], [0], [0], [1], [0, 0, 1, 1], [], []>} : vector<48x16xf32>, vector<16x64xf32>, vector<48x64xf32> -> vector<48x64xf32>
    %69 = arith.addf %65, %68 : vector<48x64xf32>
    %c0_45 = arith.constant 0 : index
    %c0_46 = arith.constant 0 : index
    %70 = vector.load %arg16[%c0_45, %c0_46] : memref<1x64xf32, #tpu.memory_space<vmem>>, vector<1x64xf32>
    %71 = vector.broadcast %70 : vector<1x64xf32> to vector<48x64xf32>
    %72 = arith.addf %69, %71 : vector<48x64xf32>
    %c0_47 = arith.constant 0 : index
    %c0_48 = arith.constant 0 : index
    %73 = vector.load %arg19[%c0_47, %c0_48] : memref<64x64xf32, #tpu.memory_space<vmem>>, vector<64x64xf32>
    %cst_49 = arith.constant dense<0.000000e+00> : vector<48x64xf32>
    %74 = tpu.matmul %72, %73, %cst_49 {dimension_numbers = #tpu.dot_dimension_numbers<[1], [0], [0], [1], [0, 0, 1, 1], [], []>} : vector<48x64xf32>, vector<64x64xf32>, vector<48x64xf32> -> vector<48x64xf32>
    %75 = arith.subf %72, %74 : vector<48x64xf32>
    %76 = arith.mulf %75, %75 : vector<48x64xf32>
    %cst_50 = arith.constant dense<0.000000e+00> : vector<48x64xf32>
    %77 = tpu.matmul %76, %73, %cst_50 {dimension_numbers = #tpu.dot_dimension_numbers<[1], [0], [0], [1], [0, 0, 1, 1], [], []>} : vector<48x64xf32>, vector<64x64xf32>, vector<48x64xf32> -> vector<48x64xf32>
    %cst_51 = arith.constant 9.99999974E-6 : f32
    %78 = vector.broadcast %cst_51 : f32 to vector<48x64xf32>
    %79 = arith.addf %77, %78 : vector<48x64xf32>
    %80 = math.rsqrt %79 : vector<48x64xf32>
    %81 = arith.mulf %75, %80 : vector<48x64xf32>
    %c0_52 = arith.constant 0 : index
    %c0_53 = arith.constant 0 : index
    %82 = vector.load %arg17[%c0_52, %c0_53] : memref<1x64xf32, #tpu.memory_space<vmem>>, vector<1x64xf32>
    %83 = vector.broadcast %82 : vector<1x64xf32> to vector<48x64xf32>
    %84 = arith.mulf %81, %83 : vector<48x64xf32>
    %c0_54 = arith.constant 0 : index
    %c0_55 = arith.constant 0 : index
    %85 = vector.load %arg18[%c0_54, %c0_55] : memref<1x64xf32, #tpu.memory_space<vmem>>, vector<1x64xf32>
    %86 = vector.broadcast %85 : vector<1x64xf32> to vector<48x64xf32>
    %87 = arith.addf %84, %86 : vector<48x64xf32>
    %cst_56 = arith.constant 0.000000e+00 : f32
    %88 = vector.broadcast %cst_56 : f32 to vector<48x64xf32>
    %89 = arith.maximumf %87, %88 : vector<48x64xf32>
    %c0_57 = arith.constant 0 : index
    %c0_58 = arith.constant 0 : index
    %90 = vector.load %arg20[%c0_57, %c0_58] : memref<64x32xf32, #tpu.memory_space<vmem>>, vector<64x32xf32>
    %cst_59 = arith.constant dense<0.000000e+00> : vector<48x32xf32>
    %91 = tpu.matmul %89, %90, %cst_59 {dimension_numbers = #tpu.dot_dimension_numbers<[1], [0], [0], [1], [0, 0, 1, 1], [], []>} : vector<48x64xf32>, vector<64x32xf32>, vector<48x32xf32> -> vector<48x32xf32>
    %c0_60 = arith.constant 0 : index
    %c0_61 = arith.constant 0 : index
    %92 = vector.load %arg21[%c0_60, %c0_61] : memref<1x32xf32, #tpu.memory_space<vmem>>, vector<1x32xf32>
    %93 = vector.broadcast %92 : vector<1x32xf32> to vector<48x32xf32>
    %94 = arith.addf %91, %93 : vector<48x32xf32>
    %c0_62 = arith.constant 0 : index
    %c0_63 = arith.constant 0 : index
    %95 = vector.load %arg22[%c0_62, %c0_63] : memref<64x32xf32, #tpu.memory_space<vmem>>, vector<64x32xf32>
    %cst_64 = arith.constant dense<0.000000e+00> : vector<48x32xf32>
    %96 = tpu.matmul %89, %95, %cst_64 {dimension_numbers = #tpu.dot_dimension_numbers<[1], [0], [0], [1], [0, 0, 1, 1], [], []>} : vector<48x64xf32>, vector<64x32xf32>, vector<48x32xf32> -> vector<48x32xf32>
    %c0_65 = arith.constant 0 : index
    %c0_66 = arith.constant 0 : index
    %97 = vector.load %arg23[%c0_65, %c0_66] : memref<1x32xf32, #tpu.memory_space<vmem>>, vector<1x32xf32>
    %98 = vector.broadcast %97 : vector<1x32xf32> to vector<48x32xf32>
    %99 = arith.addf %96, %98 : vector<48x32xf32>
    %c0_67 = arith.constant 0 : index
    %c0_68 = arith.constant 0 : index
    %100 = vector.load %arg24[%c0_67, %c0_68] : memref<16x32xf32, #tpu.memory_space<vmem>>, vector<16x32xf32>
    %cst_69 = arith.constant dense<0.000000e+00> : vector<48x32xf32>
    %101 = tpu.matmul %1, %100, %cst_69 {dimension_numbers = #tpu.dot_dimension_numbers<[1], [0], [0], [1], [0, 0, 1, 1], [], []>} : vector<48x16xf32>, vector<16x32xf32>, vector<48x32xf32> -> vector<48x32xf32>
    %c0_70 = arith.constant 0 : index
    %c0_71 = arith.constant 0 : index
    %102 = vector.load %arg25[%c0_70, %c0_71] : memref<1x32xf32, #tpu.memory_space<vmem>>, vector<1x32xf32>
    %103 = vector.broadcast %102 : vector<1x32xf32> to vector<48x32xf32>
    %104 = arith.addf %101, %103 : vector<48x32xf32>
    %105 = arith.negf %104 : vector<48x32xf32>
    %106 = math.exp %105 : vector<48x32xf32>
    %cst_72 = arith.constant 1.000000e+00 : f32
    %107 = vector.broadcast %cst_72 : f32 to vector<48x32xf32>
    %108 = arith.addf %107, %106 : vector<48x32xf32>
    %109 = arith.divf %107, %108 : vector<48x32xf32>
    %110 = arith.mulf %99, %109 : vector<48x32xf32>
    %111 = arith.mulf %56, %94 : vector<48x32xf32>
    %c0_73 = arith.constant 0 : index
    %c0_74 = arith.constant 0 : index
    %112 = vector.load %arg26[%c0_73, %c0_74] : memref<32x4xf32, #tpu.memory_space<vmem>>, vector<32x4xf32>
    %cst_75 = arith.constant dense<0.000000e+00> : vector<48x4xf32>
    %113 = tpu.matmul %111, %112, %cst_75 {dimension_numbers = #tpu.dot_dimension_numbers<[1], [0], [0], [1], [0, 0, 1, 1], [], []>} : vector<48x32xf32>, vector<32x4xf32>, vector<48x4xf32> -> vector<48x4xf32>
    %cst_76 = arith.constant 1.000000e+00 : f32
    %114 = vector.broadcast %cst_76 : f32 to vector<16x48xf32>
    %115 = arith.subf %8, %114 : vector<16x48xf32>
    %cst_77 = arith.constant 1.000000e+30 : f32
    %116 = vector.broadcast %cst_77 : f32 to vector<16x48xf32>
    %117 = arith.mulf %115, %116 : vector<16x48xf32>
    %118 = tpu.transpose %113, [1, 0] : vector<48x4xf32> -> vector<4x48xf32>
    %119 = vector.shape_cast %118 : vector<4x48xf32> to vector<1x4x48xf32>
    %120 = vector.shape_cast %117 : vector<16x48xf32> to vector<16x1x48xf32>
    %121 = vector.broadcast %119 : vector<1x4x48xf32> to vector<16x4x48xf32>
    %122 = vector.broadcast %120 : vector<16x1x48xf32> to vector<16x4x48xf32>
    %123 = arith.addf %121, %122 : vector<16x4x48xf32>
    %cst_78 = arith.constant dense<0xFF800000> : vector<16x4xf32>
    %124 = vector.multi_reduction <maximumf>, %123, %cst_78 [2] : vector<16x4x48xf32> to vector<16x4xf32>
    %cst_79 = arith.constant dense<0.000000e+00> : vector<48x4xf32>
    %125 = tpu.matmul %14, %124, %cst_79 {dimension_numbers = #tpu.dot_dimension_numbers<[1], [0], [0], [1], [0, 0, 1, 1], [], []>} : vector<48x16xf32>, vector<16x4xf32>, vector<48x4xf32> -> vector<48x4xf32>
    %126 = arith.subf %113, %125 : vector<48x4xf32>
    %127 = math.exp %126 : vector<48x4xf32>
    %cst_80 = arith.constant dense<0.000000e+00> : vector<16x4xf32>
    %128 = tpu.matmul %8, %127, %cst_80 {dimension_numbers = #tpu.dot_dimension_numbers<[1], [0], [0], [1], [0, 0, 1, 1], [], []>} : vector<16x48xf32>, vector<48x4xf32>, vector<16x4xf32> -> vector<16x4xf32>
    %cst_81 = arith.constant dense<0.000000e+00> : vector<48x4xf32>
    %129 = tpu.matmul %14, %128, %cst_81 {dimension_numbers = #tpu.dot_dimension_numbers<[1], [0], [0], [1], [0, 0, 1, 1], [], []>} : vector<48x16xf32>, vector<16x4xf32>, vector<48x4xf32> -> vector<48x4xf32>
    %130 = tpu.reciprocal %129 : vector<48x4xf32> -> vector<48x4xf32>
    %131 = arith.mulf %127, %130 : vector<48x4xf32>
    %c0_82 = arith.constant 0 : index
    %c0_83 = arith.constant 0 : index
    %132 = vector.load %arg27[%c0_82, %c0_83] : memref<4x32xf32, #tpu.memory_space<vmem>>, vector<4x32xf32>
    %cst_84 = arith.constant dense<0.000000e+00> : vector<48x32xf32>
    %133 = tpu.matmul %131, %132, %cst_84 {dimension_numbers = #tpu.dot_dimension_numbers<[1], [0], [0], [1], [0, 0, 1, 1], [], []>} : vector<48x4xf32>, vector<4x32xf32>, vector<48x32xf32> -> vector<48x32xf32>
    %134 = arith.mulf %133, %110 : vector<48x32xf32>
    %cst_85 = arith.constant dense<0.000000e+00> : vector<16x32xf32>
    %135 = tpu.matmul %8, %134, %cst_85 {dimension_numbers = #tpu.dot_dimension_numbers<[1], [0], [0], [1], [0, 0, 1, 1], [], []>} : vector<16x48xf32>, vector<48x32xf32>, vector<16x32xf32> -> vector<16x32xf32>
    %c0_86 = arith.constant 0 : index
    %c0_87 = arith.constant 0 : index
    %136 = vector.load %arg28[%c0_86, %c0_87] : memref<32x32xf32, #tpu.memory_space<vmem>>, vector<32x32xf32>
    %cst_88 = arith.constant dense<0.000000e+00> : vector<16x32xf32>
    %137 = tpu.matmul %135, %136, %cst_88 {dimension_numbers = #tpu.dot_dimension_numbers<[1], [0], [0], [1], [0, 0, 1, 1], [], []>} : vector<16x32xf32>, vector<32x32xf32>, vector<16x32xf32> -> vector<16x32xf32>
    %c0_89 = arith.constant 0 : index
    %c0_90 = arith.constant 0 : index
    %138 = vector.load %arg29[%c0_89, %c0_90] : memref<32x32xf32, #tpu.memory_space<vmem>>, vector<32x32xf32>
    %cst_91 = arith.constant dense<0.000000e+00> : vector<16x32xf32>
    %139 = tpu.matmul %0, %138, %cst_91 {dimension_numbers = #tpu.dot_dimension_numbers<[1], [0], [0], [1], [0, 0, 1, 1], [], []>} : vector<16x32xf32>, vector<32x32xf32>, vector<16x32xf32> -> vector<16x32xf32>
    %140 = arith.addf %137, %139 : vector<16x32xf32>
    %c0_92 = arith.constant 0 : index
    %c0_93 = arith.constant 0 : index
    %141 = vector.load %arg30[%c0_92, %c0_93] : memref<1x32xf32, #tpu.memory_space<vmem>>, vector<1x32xf32>
    %142 = vector.broadcast %141 : vector<1x32xf32> to vector<16x32xf32>
    %143 = arith.addf %140, %142 : vector<16x32xf32>
    %c0_94 = arith.constant 0 : index
    %c0_95 = arith.constant 0 : index
    %144 = vector.load %arg31[%c0_94, %c0_95] : memref<1x32xf32, #tpu.memory_space<vmem>>, vector<1x32xf32>
    %c0_96 = arith.constant 0 : index
    %c0_97 = arith.constant 0 : index
    %145 = vector.load %arg32[%c0_96, %c0_97] : memref<1x32xf32, #tpu.memory_space<vmem>>, vector<1x32xf32>
    %cst_98 = arith.constant dense<0.000000e+00> : vector<16xf32>
    %146 = vector.multi_reduction <add>, %143, %cst_98 [1] : vector<16x32xf32> to vector<16xf32>
    %147 = vector.shape_cast %146 : vector<16xf32> to vector<16x1xf32>
    %cst_99 = arith.constant 3.200000e+01 : f32
    %148 = vector.broadcast %cst_99 : f32 to vector<16x1xf32>
    %149 = arith.divf %147, %148 : vector<16x1xf32>
    %150 = vector.broadcast %149 : vector<16x1xf32> to vector<16x32xf32>
    %151 = arith.subf %143, %150 : vector<16x32xf32>
    %152 = arith.mulf %151, %151 : vector<16x32xf32>
    %cst_100 = arith.constant dense<0.000000e+00> : vector<16xf32>
    %153 = vector.multi_reduction <add>, %152, %cst_100 [1] : vector<16x32xf32> to vector<16xf32>
    %154 = vector.shape_cast %153 : vector<16xf32> to vector<16x1xf32>
    %cst_101 = arith.constant 3.200000e+01 : f32
    %155 = vector.broadcast %cst_101 : f32 to vector<16x1xf32>
    %156 = arith.divf %154, %155 : vector<16x1xf32>
    %157 = vector.broadcast %149 : vector<16x1xf32> to vector<16x32xf32>
    %158 = arith.subf %143, %157 : vector<16x32xf32>
    %cst_102 = arith.constant 9.99999974E-6 : f32
    %159 = vector.broadcast %cst_102 : f32 to vector<16x1xf32>
    %160 = arith.addf %156, %159 : vector<16x1xf32>
    %161 = math.rsqrt %160 : vector<16x1xf32>
    %162 = vector.broadcast %161 : vector<16x1xf32> to vector<16x32xf32>
    %163 = arith.mulf %158, %162 : vector<16x32xf32>
    %164 = vector.broadcast %144 : vector<1x32xf32> to vector<16x32xf32>
    %165 = arith.mulf %163, %164 : vector<16x32xf32>
    %166 = vector.broadcast %145 : vector<1x32xf32> to vector<16x32xf32>
    %167 = arith.addf %165, %166 : vector<16x32xf32>
    %cst_103 = arith.constant 0.000000e+00 : f32
    %168 = vector.broadcast %cst_103 : f32 to vector<16x32xf32>
    %169 = arith.maximumf %167, %168 : vector<16x32xf32>
    %c0_104 = arith.constant 0 : index
    %c0_105 = arith.constant 0 : index
    %170 = vector.load %arg33[%c0_104, %c0_105] : memref<32x32xf32, #tpu.memory_space<vmem>>, vector<32x32xf32>
    %cst_106 = arith.constant dense<0.000000e+00> : vector<16x32xf32>
    %171 = tpu.matmul %169, %170, %cst_106 {dimension_numbers = #tpu.dot_dimension_numbers<[1], [0], [0], [1], [0, 0, 1, 1], [], []>} : vector<16x32xf32>, vector<32x32xf32>, vector<16x32xf32> -> vector<16x32xf32>
    %c0_107 = arith.constant 0 : index
    %c0_108 = arith.constant 0 : index
    %172 = vector.load %arg34[%c0_107, %c0_108] : memref<1x32xf32, #tpu.memory_space<vmem>>, vector<1x32xf32>
    %173 = vector.broadcast %172 : vector<1x32xf32> to vector<16x32xf32>
    %174 = arith.addf %171, %173 : vector<16x32xf32>
    %175 = arith.addf %174, %0 : vector<16x32xf32>
    %c0_109 = arith.constant 0 : index
    %c0_110 = arith.constant 0 : index
    %176 = vector.load %arg35[%c0_109, %c0_110] : memref<16x32xf32, #tpu.memory_space<vmem>>, vector<16x32xf32>
    tpu.vector_store %arg35[%c0_109, %c0_110], %175 {strides = array<i32>} : memref<16x32xf32, #tpu.memory_space<vmem>>, vector<16x32xf32>,
    return
  }
}

</mosaic_0001>

<llo_original>
// kernel: forward_pallas.1
$region0: #{forward_pallas.1}
  #allocation0 [shape = 'u32[]', space=smem, size = 0x4, offset = 0x4, fixed_abs, tag = 'smem constant byte address 0x4 - core index']
  #allocation1 [shape = 'u32[144,128]{1,0:T(1,128)}', space=vmem, size = 0x12000, scoped, tag = 'internal scratch']
  %s0 = inlined_call_operand.smem [shape: u32[36], index: -1, kind: input, shape index: {}]
  %s1 = sld [smem:[%s0]]
  %s2 = scalar_lea.smem %s0, 1
  %s3 = sld [smem:[%s2]]
  %s4 = scalar_lea.smem %s0, 2
  %s5 = sld [smem:[%s4]]
  %s6 = scalar_lea.smem %s0, 3
  %s7 = sld [smem:[%s6]]
  %s8 = scalar_lea.smem %s0, 4
  %s9 = sld [smem:[%s8]]
  %s10 = scalar_lea.smem %s0, 5
  %s11 = sld [smem:[%s10]]
  %s12 = scalar_lea.smem %s0, 6
  %s13 = sld [smem:[%s12]]
  %s14 = scalar_lea.smem %s0, 7
  %s15 = sld [smem:[%s14]]
  %s16 = scalar_lea.smem %s0, 8
  %s17 = sld [smem:[%s16]]
  %s18 = scalar_lea.smem %s0, 9
  %s19 = sld [smem:[%s18]]
  %s20 = scalar_lea.smem %s0, 10
  %s21 = sld [smem:[%s20]]
  %s22 = scalar_lea.smem %s0, 11
  %s23 = sld [smem:[%s22]]
  %s24 = scalar_lea.smem %s0, 12
  %s25 = sld [smem:[%s24]]
  %s26 = scalar_lea.smem %s0, 13
  %s27 = sld [smem:[%s26]]
  %s28 = scalar_lea.smem %s0, 14
  %s29 = sld [smem:[%s28]]
  %s30 = scalar_lea.smem %s0, 15
  %s31 = sld [smem:[%s30]]
  %s32 = scalar_lea.smem %s0, 16
  %s33 = sld [smem:[%s32]]
  %s34 = scalar_lea.smem %s0, 17
  %s35 = sld [smem:[%s34]]
  %s36 = scalar_lea.smem %s0, 18
  %s37 = sld [smem:[%s36]]
  %s38 = scalar_lea.smem %s0, 19
  %s39 = sld [smem:[%s38]]
  %s40 = scalar_lea.smem %s0, 20
  %s41 = sld [smem:[%s40]]
  %s42 = scalar_lea.smem %s0, 21
  %s43 = sld [smem:[%s42]]
  %s44 = scalar_lea.smem %s0, 22
  %s45 = sld [smem:[%s44]]
  %s46 = scalar_lea.smem %s0, 23
  %s47 = sld [smem:[%s46]]
  %s48 = scalar_lea.smem %s0, 24
  %s49 = sld [smem:[%s48]]
  %s50 = scalar_lea.smem %s0, 25
  %s51 = sld [smem:[%s50]]
  %s52 = scalar_lea.smem %s0, 26
  %s53 = sld [smem:[%s52]]
  %s54 = scalar_lea.smem %s0, 27
  %s55 = sld [smem:[%s54]]
  %s56 = scalar_lea.smem %s0, 28
  %s57 = sld [smem:[%s56]]
  %s58 = scalar_lea.smem %s0, 29
  %s59 = sld [smem:[%s58]]
  %s60 = scalar_lea.smem %s0, 30
  %s61 = sld [smem:[%s60]]
  %s62 = scalar_lea.smem %s0, 31
  %s63 = sld [smem:[%s62]]
  %s64 = scalar_lea.smem %s0, 32
  %s65 = sld [smem:[%s64]]
  %s66 = scalar_lea.smem %s0, 33
  %s67 = sld [smem:[%s66]]
  %s68 = scalar_lea.smem %s0, 34
  %s69 = sld [smem:[%s68]]
  %s70 = scalar_lea.smem %s0, 35
  %s71 = sld [smem:[%s70]]
  %s72 = sld [smem:[#allocation0]]
  $region150: #{forward_pallas.1} parent=0
    _
  %s74 = ssub.s32 1, %s72
  %s75 = scalar_select 0, %s74, %s72
  $region1: #{forward_pallas.1} parent=0
    #allocation2 [shape = 'u8[8192]{0}', space=vmem, size = 0x2000, scoped, tag = 'output window, operand 0, single buffered']
    #allocation3 [shape = 's32[1]{0}', space=sflag, size = 0x4, scoped, tag = 'scoped memory for forward_pallas.1']
    %76 = vsyncpa [#allocation3], 0
    // Predicated region
    $region2: #{forward_pallas.1} parent=1 // pred_check
      _
    $region3: #{forward_pallas.1} parent=1 // pred_check_branch
      %78 = sbr.rel (0) target = $region5
    $region4: #{forward_pallas.1} parent=1 // pred_region
      _
    $region5: #{forward_pallas.1} parent=1 // pred_fallthru
      _
    // Predicated region
    $region6: #{forward_pallas.1} parent=1 // pred_check
      _
    $region7: #{forward_pallas.1} parent=1 // pred_check_branch
      %80 = sbr.rel (0) target = $region9
    $region8: #{forward_pallas.1} parent=1 // pred_region
      _
    $region9: #{forward_pallas.1} parent=1 // pred_fallthru
      _
    // Predicated region
    $region10: #{forward_pallas.1} parent=1 // pred_check
      _
    $region11: #{forward_pallas.1} parent=1 // pred_check_branch
      %82 = sbr.rel (0) target = $region13
    $region12: #{forward_pallas.1} parent=1 // pred_region
      _
    $region13: #{forward_pallas.1} parent=1 // pred_fallthru
      _
    // Predicated region
    $region14: #{forward_pallas.1} parent=1 // pred_check
      _
    $region15: #{forward_pallas.1} parent=1 // pred_check_branch
      %84 = sbr.rel (0) target = $region17
    $region16: #{forward_pallas.1} parent=1 // pred_region
      _
    $region17: #{forward_pallas.1} parent=1 // pred_fallthru
      _
    // Predicated region
    $region18: #{forward_pallas.1} parent=1 // pred_check
      _
    $region19: #{forward_pallas.1} parent=1 // pred_check_branch
      %86 = sbr.rel (0) target = $region21
    $region20: #{forward_pallas.1} parent=1 // pred_region
      _
    $region21: #{forward_pallas.1} parent=1 // pred_fallthru
      _
    // Predicated region
    $region22: #{forward_pallas.1} parent=1 // pred_check
      _
    $region23: #{forward_pallas.1} parent=1 // pred_check_branch
      %88 = sbr.rel (0) target = $region25
    $region24: #{forward_pallas.1} parent=1 // pred_region
      _
    $region25: #{forward_pallas.1} parent=1 // pred_fallthru
      _
    // Predicated region
    $region26: #{forward_pallas.1} parent=1 // pred_check
      _
    $region27: #{forward_pallas.1} parent=1 // pred_check_branch
      %90 = sbr.rel (0) target = $region29
    $region28: #{forward_pallas.1} parent=1 // pred_region
      _
    $region29: #{forward_pallas.1} parent=1 // pred_fallthru
      _
    // Predicated region
    $region30: #{forward_pallas.1} parent=1 // pred_check
      _
    $region31: #{forward_pallas.1} parent=1 // pred_check_branch
      %92 = sbr.rel (0) target = $region33
    $region32: #{forward_pallas.1} parent=1 // pred_region
      _
    $region33: #{forward_pallas.1} parent=1 // pred_fallthru
      _
    // Predicated region
    $region34: #{forward_pallas.1} parent=1 // pred_check
      _
    $region35: #{forward_pallas.1} parent=1 // pred_check_branch
      %94 = sbr.rel (0) target = $region37
    $region36: #{forward_pallas.1} parent=1 // pred_region
      _
    $region37: #{forward_pallas.1} parent=1 // pred_fallthru
      _
    // Predicated region
    $region38: #{forward_pallas.1} parent=1 // pred_check
      _
    $region39: #{forward_pallas.1} parent=1 // pred_check_branch
      %96 = sbr.rel (0) target = $region41
    $region40: #{forward_pallas.1} parent=1 // pred_region
      _
    $region41: #{forward_pallas.1} parent=1 // pred_fallthru
      _
    // Predicated region
    $region42: #{forward_pallas.1} parent=1 // pred_check
      _
    $region43: #{forward_pallas.1} parent=1 // pred_check_branch
      %98 = sbr.rel (0) target = $region45
    $region44: #{forward_pallas.1} parent=1 // pred_region
      _
    $region45: #{forward_pallas.1} parent=1 // pred_fallthru
      _
    // Predicated region
    $region46: #{forward_pallas.1} parent=1 // pred_check
      _
    $region47: #{forward_pallas.1} parent=1 // pred_check_branch
      %100 = sbr.rel (0) target = $region49
    $region48: #{forward_pallas.1} parent=1 // pred_region
      _
    $region49: #{forward_pallas.1} parent=1 // pred_fallthru
      _
    // Predicated region
    $region50: #{forward_pallas.1} parent=1 // pred_check
      _
    $region51: #{forward_pallas.1} parent=1 // pred_check_branch
      %102 = sbr.rel (0) target = $region53
    $region52: #{forward_pallas.1} parent=1 // pred_region
      _
    $region53: #{forward_pallas.1} parent=1 // pred_fallthru
      _
    // Predicated region
    $region54: #{forward_pallas.1} parent=1 // pred_check
      _
    $region55: #{forward_pallas.1} parent=1 // pred_check_branch
      %104 = sbr.rel (0) target = $region57
    $region56: #{forward_pallas.1} parent=1 // pred_region
      _
    $region57: #{forward_pallas.1} parent=1 // pred_fallthru
      _
    // Predicated region
    $region58: #{forward_pallas.1} parent=1 // pred_check
      _
    $region59: #{forward_pallas.1} parent=1 // pred_check_branch
      %106 = sbr.rel (0) target = $region61
    $region60: #{forward_pallas.1} parent=1 // pred_region
      _
    $region61: #{forward_pallas.1} parent=1 // pred_fallthru
      _
    // Predicated region
    $region62: #{forward_pallas.1} parent=1 // pred_check
      _
    $region63: #{forward_pallas.1} parent=1 // pred_check_branch
      %108 = sbr.rel (0) target = $region65
    $region64: #{forward_pallas.1} parent=1 // pred_region
      _
    $region65: #{forward_pallas.1} parent=1 // pred_fallthru
      _
    // Predicated region
    $region66: #{forward_pallas.1} parent=1 // pred_check
      _
    $region67: #{forward_pallas.1} parent=1 // pred_check_branch
      %110 = sbr.rel (0) target = $region69
    $region68: #{forward_pallas.1} parent=1 // pred_region
      _
    $region69: #{forward_pallas.1} parent=1 // pred_fallthru
      _
    // Predicated region
    $region70: #{forward_pallas.1} parent=1 // pred_check
      _
    $region71: #{forward_pallas.1} parent=1 // pred_check_branch
      %112 = sbr.rel (0) target = $region73
    $region72: #{forward_pallas.1} parent=1 // pred_region
      _
    $region73: #{forward_pallas.1} parent=1 // pred_fallthru
      _
    // Predicated region
    $region74: #{forward_pallas.1} parent=1 // pred_check
      _
    $region75: #{forward_pallas.1} parent=1 // pred_check_branch
      %114 = sbr.rel (0) target = $region77
    $region76: #{forward_pallas.1} parent=1 // pred_region
      _
    $region77: #{forward_pallas.1} parent=1 // pred_fallthru
      _
    // Predicated region
    $region78: #{forward_pallas.1} parent=1 // pred_check
      _
    $region79: #{forward_pallas.1} parent=1 // pred_check_branch
      %116 = sbr.rel (0) target = $region81
    $region80: #{forward_pallas.1} parent=1 // pred_region
      _
    $region81: #{forward_pallas.1} parent=1 // pred_fallthru
      _
    // Predicated region
    $region82: #{forward_pallas.1} parent=1 // pred_check
      _
    $region83: #{forward_pallas.1} parent=1 // pred_check_branch
      %118 = sbr.rel (0) target = $region85
    $region84: #{forward_pallas.1} parent=1 // pred_region
      _
    $region85: #{forward_pallas.1} parent=1 // pred_fallthru
      _
    // Predicated region
    $region86: #{forward_pallas.1} parent=1 // pred_check
      _
    $region87: #{forward_pallas.1} parent=1 // pred_check_branch
      %120 = sbr.rel (0) target = $region89
    $region88: #{forward_pallas.1} parent=1 // pred_region
      _
    $region89: #{forward_pallas.1} parent=1 // pred_fallthru
      _
    // Predicated region
    $region90: #{forward_pallas.1} parent=1 // pred_check
      _
    $region91: #{forward_pallas.1} parent=1 // pred_check_branch
      %122 = sbr.rel (0) target = $region93
    $region92: #{forward_pallas.1} parent=1 // pred_region
      _
    $region93: #{forward_pallas.1} parent=1 // pred_fallthru
      _
    // Predicated region
    $region94: #{forward_pallas.1} parent=1 // pred_check
      _
    $region95: #{forward_pallas.1} parent=1 // pred_check_branch
      %124 = sbr.rel (0) target = $region97
    $region96: #{forward_pallas.1} parent=1 // pred_region
      _
    $region97: #{forward_pallas.1} parent=1 // pred_fallthru
      _
    // Predicated region
    $region98: #{forward_pallas.1} parent=1 // pred_check
      _
    $region99: #{forward_pallas.1} parent=1 // pred_check_branch
      %126 = sbr.rel (0) target = $region101
    $region100: #{forward_pallas.1} parent=1 // pred_region
      _
    $region101: #{forward_pallas.1} parent=1 // pred_fallthru
      _
    // Predicated region
    $region102: #{forward_pallas.1} parent=1 // pred_check
      _
    $region103: #{forward_pallas.1} parent=1 // pred_check_branch
      %128 = sbr.rel (0) target = $region105
    $region104: #{forward_pallas.1} parent=1 // pred_region
      _
    $region105: #{forward_pallas.1} parent=1 // pred_fallthru
      _
    // Predicated region
    $region106: #{forward_pallas.1} parent=1 // pred_check
      _
    $region107: #{forward_pallas.1} parent=1 // pred_check_branch
      %130 = sbr.rel (0) target = $region109
    $region108: #{forward_pallas.1} parent=1 // pred_region
      _
    $region109: #{forward_pallas.1} parent=1 // pred_fallthru
      _
    // Predicated region
    $region110: #{forward_pallas.1} parent=1 // pred_check
      _
    $region111: #{forward_pallas.1} parent=1 // pred_check_branch
      %132 = sbr.rel (0) target = $region113
    $region112: #{forward_pallas.1} parent=1 // pred_region
      _
    $region113: #{forward_pallas.1} parent=1 // pred_fallthru
      _
    // Predicated region
    $region114: #{forward_pallas.1} parent=1 // pred_check
      _
    $region115: #{forward_pallas.1} parent=1 // pred_check_branch
      %134 = sbr.rel (0) target = $region117
    $region116: #{forward_pallas.1} parent=1 // pred_region
      _
    $region117: #{forward_pallas.1} parent=1 // pred_fallthru
      _
    // Predicated region
    $region118: #{forward_pallas.1} parent=1 // pred_check
      _
    $region119: #{forward_pallas.1} parent=1 // pred_check_branch
      %136 = sbr.rel (0) target = $region121
    $region120: #{forward_pallas.1} parent=1 // pred_region
      _
    $region121: #{forward_pallas.1} parent=1 // pred_fallthru
      _
    // Predicated region
    $region122: #{forward_pallas.1} parent=1 // pred_check
      _
    $region123: #{forward_pallas.1} parent=1 // pred_check_branch
      %138 = sbr.rel (0) target = $region125
    $region124: #{forward_pallas.1} parent=1 // pred_region
      _
    $region125: #{forward_pallas.1} parent=1 // pred_fallthru
      _
    // Predicated region
    $region126: #{forward_pallas.1} parent=1 // pred_check
      _
    $region127: #{forward_pallas.1} parent=1 // pred_check_branch
      %140 = sbr.rel (0) target = $region129
    $region128: #{forward_pallas.1} parent=1 // pred_region
      _
    $region129: #{forward_pallas.1} parent=1 // pred_fallthru
      _
    // Predicated region
    $region130: #{forward_pallas.1} parent=1 // pred_check
      _
    $region131: #{forward_pallas.1} parent=1 // pred_check_branch
      %142 = sbr.rel (0) target = $region133
    $region132: #{forward_pallas.1} parent=1 // pred_region
      _
    $region133: #{forward_pallas.1} parent=1 // pred_fallthru
      _
    // Predicated region
    $region134: #{forward_pallas.1} parent=1 // pred_check
      _
    $region135: #{forward_pallas.1} parent=1 // pred_check_branch
      %144 = sbr.rel (0) target = $region137
    $region136: #{forward_pallas.1} parent=1 // pred_region
      _
    $region137: #{forward_pallas.1} parent=1 // pred_fallthru
      _
    // Predicated region
    $region138: #{forward_pallas.1} parent=1 // pred_check
      _
    $region139: #{forward_pallas.1} parent=1 // pred_check_branch
      %146 = sbr.rel (0) target = $region141
    $region140: #{forward_pallas.1} parent=1 // pred_region
      _
    $region141: #{forward_pallas.1} parent=1 // pred_fallthru
      _
    %v147 = vld [vmem:[%s1] sm:$0xff]
    %v148 = vld [vmem:[%s1 + $0x8] sm:$0xff]
    %v149 = vld [vmem:[%s3] sm:$0xff]
    %v150 = vld [vmem:[%s3 + $0x8] sm:$0xff]
    %v151 = vld [vmem:[%s3 + $0x10] sm:$0xff]
    %v152 = vld [vmem:[%s3 + $0x18] sm:$0xff]
    %v153 = vld [vmem:[%s3 + $0x20] sm:$0xff]
    %v154 = vld [vmem:[%s3 + $0x28] sm:$0xff]
    %v155 = vld [vmem:[%s5] sm:$0xff]
    %v156 = vld [vmem:[%s5 + $0x8] sm:$0xff]
    %v157 = vld [vmem:[%s5 + $0x10] sm:$0xff]
    %v158 = vld [vmem:[%s5 + $0x18] sm:$0xff]
    %v159 = vld [vmem:[%s5 + $0x20] sm:$0xff]
    %v160 = vld [vmem:[%s5 + $0x28] sm:$0xff]
    %v161 = vlaneseq
    %v162 = vshrl.u32 %v161, 7
    %v163 = vadd.s32 %v162, 8
    %v164 = vld [vmem:[%s7] sm:$0x1]
    %v165 = vlaneseq
    %v166 = vshrl.u32 %v165, 7
    %v167 = vsub.s32 0, %v166
    %v168 = vrot.slane %v164, %v167
    %vm169 = vcmp.eq.s32.totalorder %v162, %v168
    %vm170 = vcmp.eq.s32.totalorder %v163, %v168
    %v171 = vsel %vm169, 1, 0
    %v172 = vsel %vm170, 1, 0
    %v173 = vcvt.s32.f32 %v171
    %v174 = vcvt.s32.f32 %v172
    %v175 = vlaneseq
    %v176 = vand.u32 %v175, 127
    %v177 = vld [vmem:[%s9] sm:$0xff]
    %v178 = vld [vmem:[%s9 + $0x8] sm:$0xff]
    %v179 = vld [vmem:[%s9 + $0x10] sm:$0xff]
    %v180 = vld [vmem:[%s9 + $0x18] sm:$0xff]
    %v181 = vld [vmem:[%s9 + $0x20] sm:$0xff]
    %v182 = vld [vmem:[%s9 + $0x28] sm:$0xff]
    %183 = vset.pattern.permute.xlu0 0
    %184 = vperm.xlu0 %183, %v177
    %v185 = vpop.permute.xlu0 %184
    %186 = vset.pattern.permute.xlu0 0
    %187 = vperm.xlu0 %186, %v178
    %v188 = vpop.permute.xlu0 %187
    %189 = vset.pattern.permute.xlu0 0
    %190 = vperm.xlu0 %189, %v179
    %v191 = vpop.permute.xlu0 %190
    %192 = vset.pattern.permute.xlu0 0
    %193 = vperm.xlu0 %192, %v180
    %v194 = vpop.permute.xlu0 %193
    %195 = vset.pattern.permute.xlu0 0
    %196 = vperm.xlu0 %195, %v181
    %v197 = vpop.permute.xlu0 %196
    %198 = vset.pattern.permute.xlu0 0
    %199 = vperm.xlu0 %198, %v182
    %v200 = vpop.permute.xlu0 %199
    %vm201 = vcmp.eq.s32.totalorder %v176, %v185
    %vm202 = vcmp.eq.s32.totalorder %v176, %v188
    %vm203 = vcmp.eq.s32.totalorder %v176, %v191
    %vm204 = vcmp.eq.s32.totalorder %v176, %v194
    %vm205 = vcmp.eq.s32.totalorder %v176, %v197
    %vm206 = vcmp.eq.s32.totalorder %v176, %v200
    %v207 = vsel %vm201, 1, 0
    %v208 = vsel %vm202, 1, 0
    %v209 = vsel %vm203, 1, 0
    %v210 = vsel %vm204, 1, 0
    %v211 = vsel %vm205, 1, 0
    %v212 = vsel %vm206, 1, 0
    %v213 = vcvt.s32.f32 %v207
    %v214 = vcvt.s32.f32 %v208
    %v215 = vcvt.s32.f32 %v209
    %v216 = vcvt.s32.f32 %v210
    %v217 = vcvt.s32.f32 %v211
    %v218 = vcvt.s32.f32 %v212
    %v219 = vld [vmem:[%s11] sm:$0xff]
    %v220 = vld [vmem:[%s11 + $0x8] sm:$0xff]
    %v221 = vld [vmem:[%s11 + $0x10] sm:$0xff]
    %v222 = vld [vmem:[%s11 + $0x18] sm:$0xff]
    %v223 = vld [vmem:[%s11 + $0x20] sm:$0xff]
    %v224 = vld [vmem:[%s11 + $0x28] sm:$0xff]
    %225 = vset.pattern.permute.xlu0 0
    %226 = vperm.xlu0 %225, %v219
    %v227 = vpop.permute.xlu0 %226
    %228 = vset.pattern.permute.xlu0 0
    %229 = vperm.xlu0 %228, %v220
    %v230 = vpop.permute.xlu0 %229
    %231 = vset.pattern.permute.xlu0 0
    %232 = vperm.xlu0 %231, %v221
    %v233 = vpop.permute.xlu0 %232
    %234 = vset.pattern.permute.xlu0 0
    %235 = vperm.xlu0 %234, %v222
    %v236 = vpop.permute.xlu0 %235
    %237 = vset.pattern.permute.xlu0 0
    %238 = vperm.xlu0 %237, %v223
    %v239 = vpop.permute.xlu0 %238
    %240 = vset.pattern.permute.xlu0 0
    %241 = vperm.xlu0 %240, %v224
    %v242 = vpop.permute.xlu0 %241
    %vm243 = vcmp.eq.s32.totalorder %v176, %v227
    %vm244 = vcmp.eq.s32.totalorder %v176, %v230
    %vm245 = vcmp.eq.s32.totalorder %v176, %v233
    %vm246 = vcmp.eq.s32.totalorder %v176, %v236
    %vm247 = vcmp.eq.s32.totalorder %v176, %v239
    %vm248 = vcmp.eq.s32.totalorder %v176, %v242
    %v249 = vsel %vm243, 1, 0
    %v250 = vsel %vm244, 1, 0
    %v251 = vsel %vm245, 1, 0
    %v252 = vsel %vm246, 1, 0
    %v253 = vsel %vm247, 1, 0
    %v254 = vsel %vm248, 1, 0
    %v255 = vcvt.s32.f32 %v249
    %v256 = vcvt.s32.f32 %v250
    %v257 = vcvt.s32.f32 %v251
    %v258 = vcvt.s32.f32 %v252
    %v259 = vcvt.s32.f32 %v253
    %v260 = vcvt.s32.f32 %v254
    %v261 = vld [vmem:[%s13] sm:$0xff]
    %v262 = vld [vmem:[%s13 + $0x8] sm:$0xff]
    %v263 = vld [vmem:[%s13 + $0x10] sm:$0xff]
    %v264 = vld [vmem:[%s13 + $0x18] sm:$0xff]
    %v265 = vld [vmem:[%s15] sm:$0x1]
    %v267 = vlaneseq
    %v268 = vshrl.u32 %v267, 7
    %v269 = vsub.s32 0, %v268
    %v270 = vrot.slane %v265, %v269
    %vm272 = vcmask 261120
    %v274 = vsel %vm272, %v147, 0
    %v277 = vsel %vm272, %v148, 0
    %279 = vmatprep.subr.mxu0 0.0
    %280 = vmatpush1.msra.mxu0 %v261
    %281 = vmatprep.subr.mxu0 0.0
    %282 = vmatpush1.msra.mxu0 %v262
    %283 = vmatprep.subr.mxu0 0.0
    %284 = vmatpush1.msra.mxu0 %v263
    %285 = vmatprep.subr.mxu0 0.0
    %286 = vmatpush1.msra.mxu0 %v264
    %287 = vmatprep.subr.mxu0 0.0
    %288 = vmatpush1.msra.mxu0 0.0
    %289 = vmatprep.subr.mxu0 0.0
    %290 = vmatpush1.msra.mxu0 0.0
    %291 = vmatprep.subr.mxu0 0.0
    %292 = vmatpush1.msra.mxu0 0.0
    %293 = vmatprep.subr.mxu0 0.0
    %294 = vmatpush1.msra.mxu0 0.0
    %295 = vmatprep.subr.mxu0 0.0
    %296 = vmatpush1.msra.mxu0 0.0
    %297 = vmatprep.subr.mxu0 0.0
    %298 = vmatpush1.msra.mxu0 0.0
    %299 = vmatprep.subr.mxu0 0.0
    %300 = vmatpush1.msra.mxu0 0.0
    %301 = vmatprep.subr.mxu0 0.0
    %302 = vmatpush1.msra.mxu0 0.0
    %303 = vmatprep.subr.mxu0 0.0
    %304 = vmatpush1.msra.mxu0 0.0
    %305 = vmatprep.subr.mxu0 0.0
    %306 = vmatpush1.msra.mxu0 0.0
    %307 = vmatprep.subr.mxu0 0.0
    %308 = vmatpush1.msra.mxu0 0.0
    %309 = vmatprep.subr.mxu0 0.0
    %310 = vmatpush1.msra.mxu0 0.0
    %311 = vmatprep.subr.mxu0 0.0
    %312 = vmatpush1.msra.mxu0 0.0
    %313 = vmatprep.subr.mxu0 0.0
    %314 = vmatpush1.msra.mxu0 0.0
    %315 = vmatprep.subr.mxu0 0.0
    %316 = vmatpush1.msra.mxu0 0.0
    %317 = vmatprep.subr.mxu0 0.0
    %318 = vmatpush1.msra.mxu0 0.0
    %319 = vmatprep.subr.mxu0 0.0
    %320 = vmatpush1.msra.mxu0 0.0
    %321 = vmatprep.subr.mxu0 0.0
    %322 = vmatpush1.msra.mxu0 0.0
    %323 = vmatprep.subr.mxu0 0.0
    %324 = vmatpush1.msra.mxu0 0.0
    %325 = vmatprep.subr.mxu0 0.0
    %326 = vmatpush1.msra.mxu0 0.0
    %327 = vmatprep.subr.mxu0 0.0
    %328 = vmatpush1.msra.mxu0 0.0
    %329 = vmatprep.subr.mxu0 0.0
    %330 = vmatpush1.msra.mxu0 0.0
    %331 = vmatprep.subr.mxu0 0.0
    %332 = vmatpush1.msra.mxu0 0.0
    %333 = vmatprep.subr.mxu0 0.0
    %334 = vmatpush1.msra.mxu0 0.0
    %335 = vmatprep.subr.mxu0 0.0
    %336 = vmatpush1.msra.mxu0 0.0
    %337 = vmatprep.subr.mxu0 0.0
    %338 = vmatpush1.msra.mxu0 0.0
    %339 = vmatprep.subr.mxu0 0.0
    %340 = vmatpush1.msra.mxu0 0.0
    %341 = vmatprep.subr.mxu0 0.0
    %342 = vmatpush1.msra.mxu0 0.0
    %343 = vmatprep.mubr.f32.mxu0 0.0
    %344 = vmatmul.mubr.f32.gmra.mrb[0].mxu0 %v274
    %v345 = vpop.f32.mrb[0].mxu0
    %v346 = vadd.f32 %v270, %v345
    %v347 = vpop.f32.mrb[0].mxu0
    %348 = vmatprep.mubr.f32.mxu0 0.0
    %349 = vmatmul.mubr.f32.gmra.mrb[0].mxu0 %v277
    %v350 = vpop.f32.mrb[0].mxu0
    %v351 = vadd.f32 %v270, %v350
    %v352 = vpop.f32.mrb[0].mxu0
    %353 = vdwg.mxu0
    %v354 = vld [vmem:[%s17] sm:$0x1]
    %v355 = vld [vmem:[%s19] sm:$0x1]
    %v356 = vsel %vm272, %v346, 0.0
    %357 = vadd.xlane.f32.xlu0 %v356
    %v358 = vpop.xlane.xlu0 %357
    %v359 = vsel %vm272, %v351, 0.0
    %360 = vadd.xlane.f32.xlu0 %v359
    %v361 = vpop.xlane.xlu0 %360
    %v362 = vrcp.pop 32.0
    %v363 = vmul.f32 %v358, %v362
    %v364 = vmul.f32 %v361, %v362
    %v365 = vsub.f32 %v346, %v363
    %v366 = vsub.f32 %v351, %v364
    %v367 = vmul.f32 %v365, %v365
    %v368 = vmul.f32 %v366, %v366
    %v369 = vsel %vm272, %v367, 0.0
    %370 = vadd.xlane.f32.xlu0 %v369
    %v371 = vpop.xlane.xlu0 %370
    %v372 = vsel %vm272, %v368, 0.0
    %373 = vadd.xlane.f32.xlu0 %v372
    %v374 = vpop.xlane.xlu0 %373
    %v375 = vmul.f32 %v371, %v362
    %v376 = vmul.f32 %v374, %v362
    %v377 = vadd.f32 %v375, 1e-05
    %v378 = vadd.f32 %v376, 1e-05
    %v379 = vrsqrt.pop %v377
    %v380 = vrsqrt.pop %v378
    %v381 = vmul.f32 %v365, %v379
    %v382 = vmul.f32 %v366, %v380
    %v384 = vlaneseq
    %v385 = vshrl.u32 %v384, 7
    %v386 = vsub.s32 0, %v385
    %v387 = vrot.slane %v354, %v386
    %v389 = vmul.f32 %v381, %v387
    %v390 = vmul.f32 %v382, %v387
    %v392 = vlaneseq
    %v393 = vshrl.u32 %v392, 7
    %v394 = vsub.s32 0, %v393
    %v395 = vrot.slane %v355, %v394
    %v397 = vadd.f32 %v389, %v395
    %v398 = vadd.f32 %v390, %v395
    %v399 = vmax.f32 %v397, 0.0
    %v400 = vmax.f32 %v398, 0.0
    %v401 = vld [vmem:[%s21] sm:$0xff]
    %v402 = vld [vmem:[%s21 + $0x8] sm:$0xff]
    %v403 = vld [vmem:[%s21 + $0x10] sm:$0xff]
    %v404 = vld [vmem:[%s21 + $0x18] sm:$0xff]
    %v405 = vld [vmem:[%s23] sm:$0x1]
    %v407 = vlaneseq
    %v408 = vshrl.u32 %v407, 7
    %v409 = vsub.s32 0, %v408
    %v410 = vrot.slane %v405, %v409
    %v413 = vsel %vm272, %v399, 0
    %v416 = vsel %vm272, %v400, 0
    %418 = vmatprep.subr.mxu0 0.0
    %419 = vmatpush1.msra.mxu0 %v401
    %420 = vmatprep.subr.mxu0 0.0
    %421 = vmatpush1.msra.mxu0 %v402
    %422 = vmatprep.subr.mxu0 0.0
    %423 = vmatpush1.msra.mxu0 %v403
    %424 = vmatprep.subr.mxu0 0.0
    %425 = vmatpush1.msra.mxu0 %v404
    %426 = vmatprep.subr.mxu0 0.0
    %427 = vmatpush1.msra.mxu0 0.0
    %428 = vmatprep.subr.mxu0 0.0
    %429 = vmatpush1.msra.mxu0 0.0
    %430 = vmatprep.subr.mxu0 0.0
    %431 = vmatpush1.msra.mxu0 0.0
    %432 = vmatprep.subr.mxu0 0.0
    %433 = vmatpush1.msra.mxu0 0.0
    %434 = vmatprep.subr.mxu0 0.0
    %435 = vmatpush1.msra.mxu0 0.0
    %436 = vmatprep.subr.mxu0 0.0
    %437 = vmatpush1.msra.mxu0 0.0
    %438 = vmatprep.subr.mxu0 0.0
    %439 = vmatpush1.msra.mxu0 0.0
    %440 = vmatprep.subr.mxu0 0.0
    %441 = vmatpush1.msra.mxu0 0.0
    %442 = vmatprep.subr.mxu0 0.0
    %443 = vmatpush1.msra.mxu0 0.0
    %444 = vmatprep.subr.mxu0 0.0
    %445 = vmatpush1.msra.mxu0 0.0
    %446 = vmatprep.subr.mxu0 0.0
    %447 = vmatpush1.msra.mxu0 0.0
    %448 = vmatprep.subr.mxu0 0.0
    %449 = vmatpush1.msra.mxu0 0.0
    %450 = vmatprep.subr.mxu0 0.0
    %451 = vmatpush1.msra.mxu0 0.0
    %452 = vmatprep.subr.mxu0 0.0
    %453 = vmatpush1.msra.mxu0 0.0
    %454 = vmatprep.subr.mxu0 0.0
    %455 = vmatpush1.msra.mxu0 0.0
    %456 = vmatprep.subr.mxu0 0.0
    %457 = vmatpush1.msra.mxu0 0.0
    %458 = vmatprep.subr.mxu0 0.0
    %459 = vmatpush1.msra.mxu0 0.0
    %460 = vmatprep.subr.mxu0 0.0
    %461 = vmatpush1.msra.mxu0 0.0
    %462 = vmatprep.subr.mxu0 0.0
    %463 = vmatpush1.msra.mxu0 0.0
    %464 = vmatprep.subr.mxu0 0.0
    %465 = vmatpush1.msra.mxu0 0.0
    %466 = vmatprep.subr.mxu0 0.0
    %467 = vmatpush1.msra.mxu0 0.0
    %468 = vmatprep.subr.mxu0 0.0
    %469 = vmatpush1.msra.mxu0 0.0
    %470 = vmatprep.subr.mxu0 0.0
    %471 = vmatpush1.msra.mxu0 0.0
    %472 = vmatprep.subr.mxu0 0.0
    %473 = vmatpush1.msra.mxu0 0.0
    %474 = vmatprep.subr.mxu0 0.0
    %475 = vmatpush1.msra.mxu0 0.0
    %476 = vmatprep.subr.mxu0 0.0
    %477 = vmatpush1.msra.mxu0 0.0
    %478 = vmatprep.subr.mxu0 0.0
    %479 = vmatpush1.msra.mxu0 0.0
    %480 = vmatprep.subr.mxu0 0.0
    %481 = vmatpush1.msra.mxu0 0.0
    %482 = vmatprep.mubr.f32.mxu0 0.0
    %483 = vmatmul.mubr.f32.gmra.mrb[0].mxu0 %v413
    %v484 = vpop.f32.mrb[0].mxu0
    %v485 = vadd.f32 %v410, %v484
    %v486 = vpop.f32.mrb[0].mxu0
    %487 = vmatprep.mubr.f32.mxu0 0.0
    %488 = vmatmul.mubr.f32.gmra.mrb[0].mxu0 %v416
    %v489 = vpop.f32.mrb[0].mxu0
    %v490 = vadd.f32 %v410, %v489
    %v491 = vpop.f32.mrb[0].mxu0
    %492 = vdwg.mxu0
    %vm493 = vcmask 130048
    %v495 = vsel %vm493, %v213, 0
    %v498 = vsel %vm493, %v214, 0
    %v501 = vsel %vm493, %v215, 0
    %v504 = vsel %vm493, %v216, 0
    %v507 = vsel %vm493, %v217, 0
    %v510 = vsel %vm493, %v218, 0
    %512 = vmatprep.subr.mxu0 0.0
    %513 = vmatpush1.msra.mxu0 %v485
    %514 = vmatprep.subr.mxu0 0.0
    %515 = vmatpush1.msra.mxu0 %v490
    %516 = vmatprep.subr.mxu0 0.0
    %517 = vmatpush1.msra.mxu0 0.0
    %518 = vmatprep.subr.mxu0 0.0
    %519 = vmatpush1.msra.mxu0 0.0
    %520 = vmatprep.subr.mxu0 0.0
    %521 = vmatpush1.msra.mxu0 0.0
    %522 = vmatprep.subr.mxu0 0.0
    %523 = vmatpush1.msra.mxu0 0.0
    %524 = vmatprep.subr.mxu0 0.0
    %525 = vmatpush1.msra.mxu0 0.0
    %526 = vmatprep.subr.mxu0 0.0
    %527 = vmatpush1.msra.mxu0 0.0
    %528 = vmatprep.subr.mxu0 0.0
    %529 = vmatpush1.msra.mxu0 0.0
    %530 = vmatprep.subr.mxu0 0.0
    %531 = vmatpush1.msra.mxu0 0.0
    %532 = vmatprep.subr.mxu0 0.0
    %533 = vmatpush1.msra.mxu0 0.0
    %534 = vmatprep.subr.mxu0 0.0
    %535 = vmatpush1.msra.mxu0 0.0
    %536 = vmatprep.subr.mxu0 0.0
    %537 = vmatpush1.msra.mxu0 0.0
    %538 = vmatprep.subr.mxu0 0.0
    %539 = vmatpush1.msra.mxu0 0.0
    %540 = vmatprep.subr.mxu0 0.0
    %541 = vmatpush1.msra.mxu0 0.0
    %542 = vmatprep.subr.mxu0 0.0
    %543 = vmatpush1.msra.mxu0 0.0
    %544 = vmatprep.subr.mxu0 0.0
    %545 = vmatpush1.msra.mxu0 0.0
    %546 = vmatprep.subr.mxu0 0.0
    %547 = vmatpush1.msra.mxu0 0.0
    %548 = vmatprep.subr.mxu0 0.0
    %549 = vmatpush1.msra.mxu0 0.0
    %550 = vmatprep.subr.mxu0 0.0
    %551 = vmatpush1.msra.mxu0 0.0
    %552 = vmatprep.subr.mxu0 0.0
    %553 = vmatpush1.msra.mxu0 0.0
    %554 = vmatprep.subr.mxu0 0.0
    %555 = vmatpush1.msra.mxu0 0.0
    %556 = vmatprep.subr.mxu0 0.0
    %557 = vmatpush1.msra.mxu0 0.0
    %558 = vmatprep.subr.mxu0 0.0
    %559 = vmatpush1.msra.mxu0 0.0
    %560 = vmatprep.subr.mxu0 0.0
    %561 = vmatpush1.msra.mxu0 0.0
    %562 = vmatprep.subr.mxu0 0.0
    %563 = vmatpush1.msra.mxu0 0.0
    %564 = vmatprep.subr.mxu0 0.0
    %565 = vmatpush1.msra.mxu0 0.0
    %566 = vmatprep.subr.mxu0 0.0
    %567 = vmatpush1.msra.mxu0 0.0
    %568 = vmatprep.subr.mxu0 0.0
    %569 = vmatpush1.msra.mxu0 0.0
    %570 = vmatprep.subr.mxu0 0.0
    %571 = vmatpush1.msra.mxu0 0.0
    %572 = vmatprep.subr.mxu0 0.0
    %573 = vmatpush1.msra.mxu0 0.0
    %574 = vmatprep.subr.mxu0 0.0
    %575 = vmatpush1.msra.mxu0 0.0
    %576 = vmatprep.mubr.f32.mxu0 0.0
    %577 = vmatmul.mubr.f32.gmra.mrb[0].mxu0 %v495
    %v578 = vpop.f32.mrb[0].mxu0
    %v579 = vadd.f32 0.0, %v578
    %v580 = vpop.f32.mrb[0].mxu0
    %581 = vmatprep.mubr.f32.mxu0 0.0
    %582 = vmatmul.mubr.f32.gmra.mrb[0].mxu0 %v498
    %v583 = vpop.f32.mrb[0].mxu0
    %v584 = vadd.f32 0.0, %v583
    %v585 = vpop.f32.mrb[0].mxu0
    %586 = vmatprep.mubr.f32.mxu0 0.0
    %587 = vmatmul.mubr.f32.gmra.mrb[0].mxu0 %v501
    %v588 = vpop.f32.mrb[0].mxu0
    %v589 = vadd.f32 0.0, %v588
    %v590 = vpop.f32.mrb[0].mxu0
    %591 = vmatprep.mubr.f32.mxu0 0.0
    %592 = vmatmul.mubr.f32.gmra.mrb[0].mxu0 %v504
    %v593 = vpop.f32.mrb[0].mxu0
    %v594 = vadd.f32 0.0, %v593
    %v595 = vpop.f32.mrb[0].mxu0
    %596 = vmatprep.mubr.f32.mxu0 0.0
    %597 = vmatmul.mubr.f32.gmra.mrb[0].mxu0 %v507
    %v598 = vpop.f32.mrb[0].mxu0
    %v599 = vadd.f32 0.0, %v598
    %v600 = vpop.f32.mrb[0].mxu0
    %601 = vmatprep.mubr.f32.mxu0 0.0
    %602 = vmatmul.mubr.f32.gmra.mrb[0].mxu0 %v510
    %v603 = vpop.f32.mrb[0].mxu0
    %v604 = vadd.f32 0.0, %v603
    %v605 = vpop.f32.mrb[0].mxu0
    %606 = vdwg.mxu0
    %v607 = vld [vmem:[%s25] sm:$0xf]
    %v608 = vld [vmem:[%s27] sm:$0xff]
    %v609 = vld [vmem:[%s27 + $0x8] sm:$0xff]
    %v611 = vsel %vm493, %v149, 0
    %v614 = vsel %vm493, %v150, 0
    %v617 = vsel %vm493, %v151, 0
    %v620 = vsel %vm493, %v152, 0
    %v623 = vsel %vm493, %v153, 0
    %v626 = vsel %vm493, %v154, 0
    %628 = vmatprep.subr.mxu0 0.0
    %629 = vmatpush1.msra.mxu0 %v608
    %630 = vmatprep.subr.mxu0 0.0
    %631 = vmatpush1.msra.mxu0 %v609
    %632 = vmatprep.subr.mxu0 0.0
    %633 = vmatpush1.msra.mxu0 0.0
    %634 = vmatprep.subr.mxu0 0.0
    %635 = vmatpush1.msra.mxu0 0.0
    %636 = vmatprep.subr.mxu0 0.0
    %637 = vmatpush1.msra.mxu0 0.0
    %638 = vmatprep.subr.mxu0 0.0
    %639 = vmatpush1.msra.mxu0 0.0
    %640 = vmatprep.subr.mxu0 0.0
    %641 = vmatpush1.msra.mxu0 0.0
    %642 = vmatprep.subr.mxu0 0.0
    %643 = vmatpush1.msra.mxu0 0.0
    %644 = vmatprep.subr.mxu0 0.0
    %645 = vmatpush1.msra.mxu0 0.0
    %646 = vmatprep.subr.mxu0 0.0
    %647 = vmatpush1.msra.mxu0 0.0
    %648 = vmatprep.subr.mxu0 0.0
    %649 = vmatpush1.msra.mxu0 0.0
    %650 = vmatprep.subr.mxu0 0.0
    %651 = vmatpush1.msra.mxu0 0.0
    %652 = vmatprep.subr.mxu0 0.0
    %653 = vmatpush1.msra.mxu0 0.0
    %654 = vmatprep.subr.mxu0 0.0
    %655 = vmatpush1.msra.mxu0 0.0
    %656 = vmatprep.subr.mxu0 0.0
    %657 = vmatpush1.msra.mxu0 0.0
    %658 = vmatprep.subr.mxu0 0.0
    %659 = vmatpush1.msra.mxu0 0.0
    %660 = vmatprep.subr.mxu0 0.0
    %661 = vmatpush1.msra.mxu0 0.0
    %662 = vmatprep.subr.mxu0 0.0
    %663 = vmatpush1.msra.mxu0 0.0
    %664 = vmatprep.subr.mxu0 0.0
    %665 = vmatpush1.msra.mxu0 0.0
    %666 = vmatprep.subr.mxu0 0.0
    %667 = vmatpush1.msra.mxu0 0.0
    %668 = vmatprep.subr.mxu0 0.0
    %669 = vmatpush1.msra.mxu0 0.0
    %670 = vmatprep.subr.mxu0 0.0
    %671 = vmatpush1.msra.mxu0 0.0
    %672 = vmatprep.subr.mxu0 0.0
    %673 = vmatpush1.msra.mxu0 0.0
    %674 = vmatprep.subr.mxu0 0.0
    %675 = vmatpush1.msra.mxu0 0.0
    %676 = vmatprep.subr.mxu0 0.0
    %677 = vmatpush1.msra.mxu0 0.0
    %678 = vmatprep.subr.mxu0 0.0
    %679 = vmatpush1.msra.mxu0 0.0
    %680 = vmatprep.subr.mxu0 0.0
    %681 = vmatpush1.msra.mxu0 0.0
    %682 = vmatprep.subr.mxu0 0.0
    %683 = vmatpush1.msra.mxu0 0.0
    %684 = vmatprep.subr.mxu0 0.0
    %685 = vmatpush1.msra.mxu0 0.0
    %686 = vmatprep.subr.mxu0 0.0
    %687 = vmatpush1.msra.mxu0 0.0
    %688 = vmatprep.subr.mxu0 0.0
    %689 = vmatpush1.msra.mxu0 0.0
    %690 = vmatprep.subr.mxu0 0.0
    %691 = vmatpush1.msra.mxu0 0.0
    %692 = vmatprep.mubr.f32.mxu0 0.0
    %693 = vmatmul.mubr.f32.gmra.mrb[0].mxu0 %v611
    %v694 = vpop.f32.mrb[0].mxu0
    %v695 = vadd.f32 0.0, %v694
    %v696 = vpop.f32.mrb[0].mxu0
    %697 = vmatprep.mubr.f32.mxu0 0.0
    %698 = vmatmul.mubr.f32.gmra.mrb[0].mxu0 %v614
    %v699 = vpop.f32.mrb[0].mxu0
    %v700 = vadd.f32 0.0, %v699
    %v701 = vpop.f32.mrb[0].mxu0
    %702 = vmatprep.mubr.f32.mxu0 0.0
    %703 = vmatmul.mubr.f32.gmra.mrb[0].mxu0 %v617
    %v704 = vpop.f32.mrb[0].mxu0
    %v705 = vadd.f32 0.0, %v704
    %v706 = vpop.f32.mrb[0].mxu0
    %707 = vmatprep.mubr.f32.mxu0 0.0
    %708 = vmatmul.mubr.f32.gmra.mrb[0].mxu0 %v620
    %v709 = vpop.f32.mrb[0].mxu0
    %v710 = vadd.f32 0.0, %v709
    %v711 = vpop.f32.mrb[0].mxu0
    %712 = vmatprep.mubr.f32.mxu0 0.0
    %713 = vmatmul.mubr.f32.gmra.mrb[0].mxu0 %v623
    %v714 = vpop.f32.mrb[0].mxu0
    %v715 = vadd.f32 0.0, %v714
    %v716 = vpop.f32.mrb[0].mxu0
    %717 = vmatprep.mubr.f32.mxu0 0.0
    %718 = vmatmul.mubr.f32.gmra.mrb[0].mxu0 %v626
    %v719 = vpop.f32.mrb[0].mxu0
    %v720 = vadd.f32 0.0, %v719
    %v721 = vpop.f32.mrb[0].mxu0
    %722 = vdwg.mxu0
    %vm723 = vcmask 31744
    %v725 = vsel %vm723, %v155, 0
    %v728 = vsel %vm723, %v156, 0
    %v731 = vsel %vm723, %v157, 0
    %v734 = vsel %vm723, %v158, 0
    %v737 = vsel %vm723, %v159, 0
    %v740 = vsel %vm723, %v160, 0
    %vm742 = vcmask 1043456
    %v744 = vsel %vm742, %v607, 0
    %746 = vmatprep.subr.mxu0 0.0
    %747 = vmatpush1.msra.mxu0 %v744
    %748 = vmatprep.subr.mxu0 0.0
    %749 = vmatpush1.msra.mxu0 0.0
    %750 = vmatprep.subr.mxu0 0.0
    %751 = vmatpush1.msra.mxu0 0.0
    %752 = vmatprep.subr.mxu0 0.0
    %753 = vmatpush1.msra.mxu0 0.0
    %754 = vmatprep.subr.mxu0 0.0
    %755 = vmatpush1.msra.mxu0 0.0
    %756 = vmatprep.subr.mxu0 0.0
    %757 = vmatpush1.msra.mxu0 0.0
    %758 = vmatprep.subr.mxu0 0.0
    %759 = vmatpush1.msra.mxu0 0.0
    %760 = vmatprep.subr.mxu0 0.0
    %761 = vmatpush1.msra.mxu0 0.0
    %762 = vmatprep.subr.mxu0 0.0
    %763 = vmatpush1.msra.mxu0 0.0
    %764 = vmatprep.subr.mxu0 0.0
    %765 = vmatpush1.msra.mxu0 0.0
    %766 = vmatprep.subr.mxu0 0.0
    %767 = vmatpush1.msra.mxu0 0.0
    %768 = vmatprep.subr.mxu0 0.0
    %769 = vmatpush1.msra.mxu0 0.0
    %770 = vmatprep.subr.mxu0 0.0
    %771 = vmatpush1.msra.mxu0 0.0
    %772 = vmatprep.subr.mxu0 0.0
    %773 = vmatpush1.msra.mxu0 0.0
    %774 = vmatprep.subr.mxu0 0.0
    %775 = vmatpush1.msra.mxu0 0.0
    %776 = vmatprep.subr.mxu0 0.0
    %777 = vmatpush1.msra.mxu0 0.0
    %778 = vmatprep.subr.mxu0 0.0
    %779 = vmatpush1.msra.mxu0 0.0
    %780 = vmatprep.subr.mxu0 0.0
    %781 = vmatpush1.msra.mxu0 0.0
    %782 = vmatprep.subr.mxu0 0.0
    %783 = vmatpush1.msra.mxu0 0.0
    %784 = vmatprep.subr.mxu0 0.0
    %785 = vmatpush1.msra.mxu0 0.0
    %786 = vmatprep.subr.mxu0 0.0
    %787 = vmatpush1.msra.mxu0 0.0
    %788 = vmatprep.subr.mxu0 0.0
    %789 = vmatpush1.msra.mxu0 0.0
    %790 = vmatprep.subr.mxu0 0.0
    %791 = vmatpush1.msra.mxu0 0.0
    %792 = vmatprep.subr.mxu0 0.0
    %793 = vmatpush1.msra.mxu0 0.0
    %794 = vmatprep.subr.mxu0 0.0
    %795 = vmatpush1.msra.mxu0 0.0
    %796 = vmatprep.subr.mxu0 0.0
    %797 = vmatpush1.msra.mxu0 0.0
    %798 = vmatprep.subr.mxu0 0.0
    %799 = vmatpush1.msra.mxu0 0.0
    %800 = vmatprep.subr.mxu0 0.0
    %801 = vmatpush1.msra.mxu0 0.0
    %802 = vmatprep.subr.mxu0 0.0
    %803 = vmatpush1.msra.mxu0 0.0
    %804 = vmatprep.subr.mxu0 0.0
    %805 = vmatpush1.msra.mxu0 0.0
    %806 = vmatprep.subr.mxu0 0.0
    %807 = vmatpush1.msra.mxu0 0.0
    %808 = vmatprep.subr.mxu0 0.0
    %809 = vmatpush1.msra.mxu0 0.0
    %810 = vmatprep.mubr.f32.mxu0 0.0
    %811 = vmatmul.mubr.f32.gmra.mrb[0].mxu0 %v725
    %v812 = vpop.f32.mrb[0].mxu0
    %v813 = vadd.f32 %v695, %v812
    %v814 = vpop.f32.mrb[0].mxu0
    %815 = vmatprep.mubr.f32.mxu0 0.0
    %816 = vmatmul.mubr.f32.gmra.mrb[0].mxu0 %v728
    %v817 = vpop.f32.mrb[0].mxu0
    %v818 = vadd.f32 %v700, %v817
    %v819 = vpop.f32.mrb[0].mxu0
    %820 = vmatprep.mubr.f32.mxu0 0.0
    %821 = vmatmul.mubr.f32.gmra.mrb[0].mxu0 %v731
    %v822 = vpop.f32.mrb[0].mxu0
    %v823 = vadd.f32 %v705, %v822
    %v824 = vpop.f32.mrb[0].mxu0
    %825 = vmatprep.mubr.f32.mxu0 0.0
    %826 = vmatmul.mubr.f32.gmra.mrb[0].mxu0 %v734
    %v827 = vpop.f32.mrb[0].mxu0
    %v828 = vadd.f32 %v710, %v827
    %v829 = vpop.f32.mrb[0].mxu0
    %830 = vmatprep.mubr.f32.mxu0 0.0
    %831 = vmatmul.mubr.f32.gmra.mrb[0].mxu0 %v737
    %v832 = vpop.f32.mrb[0].mxu0
    %v833 = vadd.f32 %v715, %v832
    %v834 = vpop.f32.mrb[0].mxu0
    %835 = vmatprep.mubr.f32.mxu0 0.0
    %836 = vmatmul.mubr.f32.gmra.mrb[0].mxu0 %v740
    %v837 = vpop.f32.mrb[0].mxu0
    %v838 = vadd.f32 %v720, %v837
    %v839 = vpop.f32.mrb[0].mxu0
    %840 = vdwg.mxu0
    %v841 = vld [vmem:[%s29] sm:$0xff]
    %v842 = vld [vmem:[%s29 + $0x8] sm:$0xff]
    %v843 = vld [vmem:[%s29 + $0x10] sm:$0xff]
    %v844 = vld [vmem:[%s29 + $0x18] sm:$0xff]
    %845 = vmatprep.subr.mxu0 0.0
    %846 = vmatpush1.msra.mxu0 %v841
    %847 = vmatprep.subr.mxu0 0.0
    %848 = vmatpush1.msra.mxu0 %v842
    %849 = vmatprep.subr.mxu0 0.0
    %850 = vmatpush1.msra.mxu0 %v843
    %851 = vmatprep.subr.mxu0 0.0
    %852 = vmatpush1.msra.mxu0 %v844
    %853 = vmatprep.subr.mxu0 0.0
    %854 = vmatpush1.msra.mxu0 0.0
    %855 = vmatprep.subr.mxu0 0.0
    %856 = vmatpush1.msra.mxu0 0.0
    %857 = vmatprep.subr.mxu0 0.0
    %858 = vmatpush1.msra.mxu0 0.0
    %859 = vmatprep.subr.mxu0 0.0
    %860 = vmatpush1.msra.mxu0 0.0
    %861 = vmatprep.subr.mxu0 0.0
    %862 = vmatpush1.msra.mxu0 0.0
    %863 = vmatprep.subr.mxu0 0.0
    %864 = vmatpush1.msra.mxu0 0.0
    %865 = vmatprep.subr.mxu0 0.0
    %866 = vmatpush1.msra.mxu0 0.0
    %867 = vmatprep.subr.mxu0 0.0
    %868 = vmatpush1.msra.mxu0 0.0
    %869 = vmatprep.subr.mxu0 0.0
    %870 = vmatpush1.msra.mxu0 0.0
    %871 = vmatprep.subr.mxu0 0.0
    %872 = vmatpush1.msra.mxu0 0.0
    %873 = vmatprep.subr.mxu0 0.0
    %874 = vmatpush1.msra.mxu0 0.0
    %875 = vmatprep.subr.mxu0 0.0
    %876 = vmatpush1.msra.mxu0 0.0
    %877 = vmatprep.subr.mxu0 0.0
    %878 = vmatpush1.msra.mxu0 0.0
    %879 = vmatprep.subr.mxu0 0.0
    %880 = vmatpush1.msra.mxu0 0.0
    %881 = vmatprep.subr.mxu0 0.0
    %882 = vmatpush1.msra.mxu0 0.0
    %883 = vmatprep.subr.mxu0 0.0
    %884 = vmatpush1.msra.mxu0 0.0
    %885 = vmatprep.subr.mxu0 0.0
    %886 = vmatpush1.msra.mxu0 0.0
    %887 = vmatprep.subr.mxu0 0.0
    %888 = vmatpush1.msra.mxu0 0.0
    %889 = vmatprep.subr.mxu0 0.0
    %890 = vmatpush1.msra.mxu0 0.0
    %891 = vmatprep.subr.mxu0 0.0
    %892 = vmatpush1.msra.mxu0 0.0
    %893 = vmatprep.subr.mxu0 0.0
    %894 = vmatpush1.msra.mxu0 0.0
    %895 = vmatprep.subr.mxu0 0.0
    %896 = vmatpush1.msra.mxu0 0.0
    %897 = vmatprep.subr.mxu0 0.0
    %898 = vmatpush1.msra.mxu0 0.0
    %899 = vmatprep.subr.mxu0 0.0
    %900 = vmatpush1.msra.mxu0 0.0
    %901 = vmatprep.subr.mxu0 0.0
    %902 = vmatpush1.msra.mxu0 0.0
    %903 = vmatprep.subr.mxu0 0.0
    %904 = vmatpush1.msra.mxu0 0.0
    %905 = vmatprep.subr.mxu0 0.0
    %906 = vmatpush1.msra.mxu0 0.0
    %907 = vmatprep.subr.mxu0 0.0
    %908 = vmatpush1.msra.mxu0 0.0
    %909 = vmatprep.mubr.f32.mxu0 0.0
    %910 = vmatmul.mubr.f32.gmra.mrb[0].mxu0 %v274
    %v911 = vpop.f32.mrb[0].mxu0
    %v912 = vadd.f32 0.0, %v911
    %v913 = vpop.f32.mrb[0].mxu0
    %914 = vmatprep.mubr.f32.mxu0 0.0
    %915 = vmatmul.mubr.f32.gmra.mrb[0].mxu0 %v277
    %v916 = vpop.f32.mrb[0].mxu0
    %v917 = vadd.f32 0.0, %v916
    %v918 = vpop.f32.mrb[0].mxu0
    %919 = vdwg.mxu0
    %920 = vmatprep.subr.mxu0 0.0
    %921 = vmatpush1.msra.mxu0 %v912
    %922 = vmatprep.subr.mxu0 0.0
    %923 = vmatpush1.msra.mxu0 %v917
    %924 = vmatprep.subr.mxu0 0.0
    %925 = vmatpush1.msra.mxu0 0.0
    %926 = vmatprep.subr.mxu0 0.0
    %927 = vmatpush1.msra.mxu0 0.0
    %928 = vmatprep.subr.mxu0 0.0
    %929 = vmatpush1.msra.mxu0 0.0
    %930 = vmatprep.subr.mxu0 0.0
    %931 = vmatpush1.msra.mxu0 0.0
    %932 = vmatprep.subr.mxu0 0.0
    %933 = vmatpush1.msra.mxu0 0.0
    %934 = vmatprep.subr.mxu0 0.0
    %935 = vmatpush1.msra.mxu0 0.0
    %936 = vmatprep.subr.mxu0 0.0
    %937 = vmatpush1.msra.mxu0 0.0
    %938 = vmatprep.subr.mxu0 0.0
    %939 = vmatpush1.msra.mxu0 0.0
    %940 = vmatprep.subr.mxu0 0.0
    %941 = vmatpush1.msra.mxu0 0.0
    %942 = vmatprep.subr.mxu0 0.0
    %943 = vmatpush1.msra.mxu0 0.0
    %944 = vmatprep.subr.mxu0 0.0
    %945 = vmatpush1.msra.mxu0 0.0
    %946 = vmatprep.subr.mxu0 0.0
    %947 = vmatpush1.msra.mxu0 0.0
    %948 = vmatprep.subr.mxu0 0.0
    %949 = vmatpush1.msra.mxu0 0.0
    %950 = vmatprep.subr.mxu0 0.0
    %951 = vmatpush1.msra.mxu0 0.0
    %952 = vmatprep.subr.mxu0 0.0
    %953 = vmatpush1.msra.mxu0 0.0
    %954 = vmatprep.subr.mxu0 0.0
    %955 = vmatpush1.msra.mxu0 0.0
    %956 = vmatprep.subr.mxu0 0.0
    %957 = vmatpush1.msra.mxu0 0.0
    %958 = vmatprep.subr.mxu0 0.0
    %959 = vmatpush1.msra.mxu0 0.0
    %960 = vmatprep.subr.mxu0 0.0
    %961 = vmatpush1.msra.mxu0 0.0
    %962 = vmatprep.subr.mxu0 0.0
    %963 = vmatpush1.msra.mxu0 0.0
    %964 = vmatprep.subr.mxu0 0.0
    %965 = vmatpush1.msra.mxu0 0.0
    %966 = vmatprep.subr.mxu0 0.0
    %967 = vmatpush1.msra.mxu0 0.0
    %968 = vmatprep.subr.mxu0 0.0
    %969 = vmatpush1.msra.mxu0 0.0
    %970 = vmatprep.subr.mxu0 0.0
    %971 = vmatpush1.msra.mxu0 0.0
    %972 = vmatprep.subr.mxu0 0.0
    %973 = vmatpush1.msra.mxu0 0.0
    %974 = vmatprep.subr.mxu0 0.0
    %975 = vmatpush1.msra.mxu0 0.0
    %976 = vmatprep.subr.mxu0 0.0
    %977 = vmatpush1.msra.mxu0 0.0
    %978 = vmatprep.subr.mxu0 0.0
    %979 = vmatpush1.msra.mxu0 0.0
    %980 = vmatprep.subr.mxu0 0.0
    %981 = vmatpush1.msra.mxu0 0.0
    %982 = vmatprep.subr.mxu0 0.0
    %983 = vmatpush1.msra.mxu0 0.0
    %984 = vmatprep.mubr.f32.mxu0 0.0
    %985 = vmatmul.mubr.f32.gmra.mrb[0].mxu0 %v495
    %v986 = vpop.f32.mrb[0].mxu0
    %v987 = vadd.f32 0.0, %v986
    %v988 = vpop.f32.mrb[0].mxu0
    %989 = vmatprep.mubr.f32.mxu0 0.0
    %990 = vmatmul.mubr.f32.gmra.mrb[0].mxu0 %v498
    %v991 = vpop.f32.mrb[0].mxu0
    %v992 = vadd.f32 0.0, %v991
    %v993 = vpop.f32.mrb[0].mxu0
    %994 = vmatprep.mubr.f32.mxu0 0.0
    %995 = vmatmul.mubr.f32.gmra.mrb[0].mxu0 %v501
    %v996 = vpop.f32.mrb[0].mxu0
    %v997 = vadd.f32 0.0, %v996
    %v998 = vpop.f32.mrb[0].mxu0
    %999 = vmatprep.mubr.f32.mxu0 0.0
    %1000 = vmatmul.mubr.f32.gmra.mrb[0].mxu0 %v504
    %v1001 = vpop.f32.mrb[0].mxu0
    %v1002 = vadd.f32 0.0, %v1001
    %v1003 = vpop.f32.mrb[0].mxu0
    %1004 = vmatprep.mubr.f32.mxu0 0.0
    %1005 = vmatmul.mubr.f32.gmra.mrb[0].mxu0 %v507
    %v1006 = vpop.f32.mrb[0].mxu0
    %v1007 = vadd.f32 0.0, %v1006
    %v1008 = vpop.f32.mrb[0].mxu0
    %1009 = vmatprep.mubr.f32.mxu0 0.0
    %1010 = vmatmul.mubr.f32.gmra.mrb[0].mxu0 %v510
    %v1011 = vpop.f32.mrb[0].mxu0
    %v1012 = vadd.f32 0.0, %v1011
    %v1013 = vpop.f32.mrb[0].mxu0
    %1014 = vdwg.mxu0
    %v1015 = vadd.f32 %v813, %v987
    %v1016 = vadd.f32 %v818, %v992
    %v1017 = vadd.f32 %v823, %v997
    %v1018 = vadd.f32 %v828, %v1002
    %v1019 = vadd.f32 %v833, %v1007
    %v1020 = vadd.f32 %v838, %v1012
    %v1021 = vld [vmem:[%s31] sm:$0xff]
    %v1022 = vld [vmem:[%s31 + $0x8] sm:$0xff]
    %v1023 = vld [vmem:[%s31 + $0x10] sm:$0xff]
    %v1024 = vld [vmem:[%s31 + $0x18] sm:$0xff]
    %1025 = vmatprep.subr.mxu0 0.0
    %1026 = vmatpush1.msra.mxu0 %v1021
    %1027 = vmatprep.subr.mxu0 0.0
    %1028 = vmatpush1.msra.mxu0 %v1022
    %1029 = vmatprep.subr.mxu0 0.0
    %1030 = vmatpush1.msra.mxu0 %v1023
    %1031 = vmatprep.subr.mxu0 0.0
    %1032 = vmatpush1.msra.mxu0 %v1024
    %1033 = vmatprep.subr.mxu0 0.0
    %1034 = vmatpush1.msra.mxu0 0.0
    %1035 = vmatprep.subr.mxu0 0.0
    %1036 = vmatpush1.msra.mxu0 0.0
    %1037 = vmatprep.subr.mxu0 0.0
    %1038 = vmatpush1.msra.mxu0 0.0
    %1039 = vmatprep.subr.mxu0 0.0
    %1040 = vmatpush1.msra.mxu0 0.0
    %1041 = vmatprep.subr.mxu0 0.0
    %1042 = vmatpush1.msra.mxu0 0.0
    %1043 = vmatprep.subr.mxu0 0.0
    %1044 = vmatpush1.msra.mxu0 0.0
    %1045 = vmatprep.subr.mxu0 0.0
    %1046 = vmatpush1.msra.mxu0 0.0
    %1047 = vmatprep.subr.mxu0 0.0
    %1048 = vmatpush1.msra.mxu0 0.0
    %1049 = vmatprep.subr.mxu0 0.0
    %1050 = vmatpush1.msra.mxu0 0.0
    %1051 = vmatprep.subr.mxu0 0.0
    %1052 = vmatpush1.msra.mxu0 0.0
    %1053 = vmatprep.subr.mxu0 0.0
    %1054 = vmatpush1.msra.mxu0 0.0
    %1055 = vmatprep.subr.mxu0 0.0
    %1056 = vmatpush1.msra.mxu0 0.0
    %1057 = vmatprep.subr.mxu0 0.0
    %1058 = vmatpush1.msra.mxu0 0.0
    %1059 = vmatprep.subr.mxu0 0.0
    %1060 = vmatpush1.msra.mxu0 0.0
    %1061 = vmatprep.subr.mxu0 0.0
    %1062 = vmatpush1.msra.mxu0 0.0
    %1063 = vmatprep.subr.mxu0 0.0
    %1064 = vmatpush1.msra.mxu0 0.0
    %1065 = vmatprep.subr.mxu0 0.0
    %1066 = vmatpush1.msra.mxu0 0.0
    %1067 = vmatprep.subr.mxu0 0.0
    %1068 = vmatpush1.msra.mxu0 0.0
    %1069 = vmatprep.subr.mxu0 0.0
    %1070 = vmatpush1.msra.mxu0 0.0
    %1071 = vmatprep.subr.mxu0 0.0
    %1072 = vmatpush1.msra.mxu0 0.0
    %1073 = vmatprep.subr.mxu0 0.0
    %1074 = vmatpush1.msra.mxu0 0.0
    %1075 = vmatprep.subr.mxu0 0.0
    %1076 = vmatpush1.msra.mxu0 0.0
    %1077 = vmatprep.subr.mxu0 0.0
    %1078 = vmatpush1.msra.mxu0 0.0
    %1079 = vmatprep.subr.mxu0 0.0
    %1080 = vmatpush1.msra.mxu0 0.0
    %1081 = vmatprep.subr.mxu0 0.0
    %1082 = vmatpush1.msra.mxu0 0.0
    %1083 = vmatprep.subr.mxu0 0.0
    %1084 = vmatpush1.msra.mxu0 0.0
    %1085 = vmatprep.subr.mxu0 0.0
    %1086 = vmatpush1.msra.mxu0 0.0
    %1087 = vmatprep.subr.mxu0 0.0
    %1088 = vmatpush1.msra.mxu0 0.0
    %1089 = vmatprep.mubr.f32.mxu0 0.0
    %1090 = vmatmul.mubr.f32.gmra.mrb[0].mxu0 %v274
    %v1091 = vpop.f32.mrb[0].mxu0
    %v1092 = vadd.f32 0.0, %v1091
    %v1093 = vpop.f32.mrb[0].mxu0
    %1094 = vmatprep.mubr.f32.mxu0 0.0
    %1095 = vmatmul.mubr.f32.gmra.mrb[0].mxu0 %v277
    %v1096 = vpop.f32.mrb[0].mxu0
    %v1097 = vadd.f32 0.0, %v1096
    %v1098 = vpop.f32.mrb[0].mxu0
    %1099 = vdwg.mxu0
    %v1101 = vsel %vm493, %v255, 0
    %v1104 = vsel %vm493, %v256, 0
    %v1107 = vsel %vm493, %v257, 0
    %v1110 = vsel %vm493, %v258, 0
    %v1113 = vsel %vm493, %v259, 0
    %v1116 = vsel %vm493, %v260, 0
    %1118 = vmatprep.subr.mxu0 0.0
    %1119 = vmatpush1.msra.mxu0 %v1092
    %1120 = vmatprep.subr.mxu0 0.0
    %1121 = vmatpush1.msra.mxu0 %v1097
    %1122 = vmatprep.subr.mxu0 0.0
    %1123 = vmatpush1.msra.mxu0 0.0
    %1124 = vmatprep.subr.mxu0 0.0
    %1125 = vmatpush1.msra.mxu0 0.0
    %1126 = vmatprep.subr.mxu0 0.0
    %1127 = vmatpush1.msra.mxu0 0.0
    %1128 = vmatprep.subr.mxu0 0.0
    %1129 = vmatpush1.msra.mxu0 0.0
    %1130 = vmatprep.subr.mxu0 0.0
    %1131 = vmatpush1.msra.mxu0 0.0
    %1132 = vmatprep.subr.mxu0 0.0
    %1133 = vmatpush1.msra.mxu0 0.0
    %1134 = vmatprep.subr.mxu0 0.0
    %1135 = vmatpush1.msra.mxu0 0.0
    %1136 = vmatprep.subr.mxu0 0.0
    %1137 = vmatpush1.msra.mxu0 0.0
    %1138 = vmatprep.subr.mxu0 0.0
    %1139 = vmatpush1.msra.mxu0 0.0
    %1140 = vmatprep.subr.mxu0 0.0
    %1141 = vmatpush1.msra.mxu0 0.0
    %1142 = vmatprep.subr.mxu0 0.0
    %1143 = vmatpush1.msra.mxu0 0.0
    %1144 = vmatprep.subr.mxu0 0.0
    %1145 = vmatpush1.msra.mxu0 0.0
    %1146 = vmatprep.subr.mxu0 0.0
    %1147 = vmatpush1.msra.mxu0 0.0
    %1148 = vmatprep.subr.mxu0 0.0
    %1149 = vmatpush1.msra.mxu0 0.0
    %1150 = vmatprep.subr.mxu0 0.0
    %1151 = vmatpush1.msra.mxu0 0.0
    %1152 = vmatprep.subr.mxu0 0.0
    %1153 = vmatpush1.msra.mxu0 0.0
    %1154 = vmatprep.subr.mxu0 0.0
    %1155 = vmatpush1.msra.mxu0 0.0
    %1156 = vmatprep.subr.mxu0 0.0
    %1157 = vmatpush1.msra.mxu0 0.0
    %1158 = vmatprep.subr.mxu0 0.0
    %1159 = vmatpush1.msra.mxu0 0.0
    %1160 = vmatprep.subr.mxu0 0.0
    %1161 = vmatpush1.msra.mxu0 0.0
    %1162 = vmatprep.subr.mxu0 0.0
    %1163 = vmatpush1.msra.mxu0 0.0
    %1164 = vmatprep.subr.mxu0 0.0
    %1165 = vmatpush1.msra.mxu0 0.0
    %1166 = vmatprep.subr.mxu0 0.0
    %1167 = vmatpush1.msra.mxu0 0.0
    %1168 = vmatprep.subr.mxu0 0.0
    %1169 = vmatpush1.msra.mxu0 0.0
    %1170 = vmatprep.subr.mxu0 0.0
    %1171 = vmatpush1.msra.mxu0 0.0
    %1172 = vmatprep.subr.mxu0 0.0
    %1173 = vmatpush1.msra.mxu0 0.0
    %1174 = vmatprep.subr.mxu0 0.0
    %1175 = vmatpush1.msra.mxu0 0.0
    %1176 = vmatprep.subr.mxu0 0.0
    %1177 = vmatpush1.msra.mxu0 0.0
    %1178 = vmatprep.subr.mxu0 0.0
    %1179 = vmatpush1.msra.mxu0 0.0
    %1180 = vmatprep.subr.mxu0 0.0
    %1181 = vmatpush1.msra.mxu0 0.0
    %1182 = vmatprep.mubr.f32.mxu0 0.0
    %1183 = vmatmul.mubr.f32.gmra.mrb[0].mxu0 %v1101
    %v1184 = vpop.f32.mrb[0].mxu0
    %v1185 = vadd.f32 0.0, %v1184
    %v1186 = vpop.f32.mrb[0].mxu0
    %1187 = vmatprep.mubr.f32.mxu0 0.0
    %1188 = vmatmul.mubr.f32.gmra.mrb[0].mxu0 %v1104
    %v1189 = vpop.f32.mrb[0].mxu0
    %v1190 = vadd.f32 0.0, %v1189
    %v1191 = vpop.f32.mrb[0].mxu0
    %1192 = vmatprep.mubr.f32.mxu0 0.0
    %1193 = vmatmul.mubr.f32.gmra.mrb[0].mxu0 %v1107
    %v1194 = vpop.f32.mrb[0].mxu0
    %v1195 = vadd.f32 0.0, %v1194
    %v1196 = vpop.f32.mrb[0].mxu0
    %1197 = vmatprep.mubr.f32.mxu0 0.0
    %1198 = vmatmul.mubr.f32.gmra.mrb[0].mxu0 %v1110
    %v1199 = vpop.f32.mrb[0].mxu0
    %v1200 = vadd.f32 0.0, %v1199
    %v1201 = vpop.f32.mrb[0].mxu0
    %1202 = vmatprep.mubr.f32.mxu0 0.0
    %1203 = vmatmul.mubr.f32.gmra.mrb[0].mxu0 %v1113
    %v1204 = vpop.f32.mrb[0].mxu0
    %v1205 = vadd.f32 0.0, %v1204
    %v1206 = vpop.f32.mrb[0].mxu0
    %1207 = vmatprep.mubr.f32.mxu0 0.0
    %1208 = vmatmul.mubr.f32.gmra.mrb[0].mxu0 %v1116
    %v1209 = vpop.f32.mrb[0].mxu0
    %v1210 = vadd.f32 0.0, %v1209
    %v1211 = vpop.f32.mrb[0].mxu0
    %1212 = vdwg.mxu0
    %v1213 = vadd.f32 %v1015, %v1185
    %v1214 = vadd.f32 %v1016, %v1190
    %v1215 = vadd.f32 %v1017, %v1195
    %v1216 = vadd.f32 %v1018, %v1200
    %v1217 = vadd.f32 %v1019, %v1205
    %v1218 = vadd.f32 %v1020, %v1210
    %v1219 = vld [vmem:[%s33] sm:$0x1]
    %v1221 = vlaneseq
    %v1222 = vshrl.u32 %v1221, 7
    %v1223 = vsub.s32 0, %v1222
    %v1224 = vrot.slane %v1219, %v1223
    %v1226 = vadd.f32 %v1213, %v1224
    %v1227 = vadd.f32 %v1214, %v1224
    %v1228 = vadd.f32 %v1215, %v1224
    %v1229 = vadd.f32 %v1216, %v1224
    %v1230 = vadd.f32 %v1217, %v1224
    %v1231 = vadd.f32 %v1218, %v1224
    %v1232 = vld [vmem:[%s39] sm:$0xff]
    %v1233 = vld [vmem:[%s39 + $0x8] sm:$0xff]
    %v1234 = vld [vmem:[%s39 + $0x10] sm:$0xff]
    %v1235 = vld [vmem:[%s39 + $0x18] sm:$0xff]
    %v1236 = vld [vmem:[%s39 + $0x20] sm:$0xff]
    %v1237 = vld [vmem:[%s39 + $0x28] sm:$0xff]
    %v1238 = vld [vmem:[%s39 + $0x30] sm:$0xff]
    %v1239 = vld [vmem:[%s39 + $0x38] sm:$0xff]
    %vm1240 = vcmask 523264
    %v1242 = vsel %vm1240, %v1226, 0
    %v1245 = vsel %vm1240, %v1227, 0
    %v1248 = vsel %vm1240, %v1228, 0
    %v1251 = vsel %vm1240, %v1229, 0
    %v1254 = vsel %vm1240, %v1230, 0
    %v1257 = vsel %vm1240, %v1231, 0
    %1259 = vmatprep.subr.mxu0 0.0
    %1260 = vmatpush1.msra.mxu0 %v1232
    %1261 = vmatprep.subr.mxu0 0.0
    %1262 = vmatpush1.msra.mxu0 %v1233
    %1263 = vmatprep.subr.mxu0 0.0
    %1264 = vmatpush1.msra.mxu0 %v1234
    %1265 = vmatprep.subr.mxu0 0.0
    %1266 = vmatpush1.msra.mxu0 %v1235
    %1267 = vmatprep.subr.mxu0 0.0
    %1268 = vmatpush1.msra.mxu0 %v1236
    %1269 = vmatprep.subr.mxu0 0.0
    %1270 = vmatpush1.msra.mxu0 %v1237
    %1271 = vmatprep.subr.mxu0 0.0
    %1272 = vmatpush1.msra.mxu0 %v1238
    %1273 = vmatprep.subr.mxu0 0.0
    %1274 = vmatpush1.msra.mxu0 %v1239
    %1275 = vmatprep.subr.mxu0 0.0
    %1276 = vmatpush1.msra.mxu0 0.0
    %1277 = vmatprep.subr.mxu0 0.0
    %1278 = vmatpush1.msra.mxu0 0.0
    %1279 = vmatprep.subr.mxu0 0.0
    %1280 = vmatpush1.msra.mxu0 0.0
    %1281 = vmatprep.subr.mxu0 0.0
    %1282 = vmatpush1.msra.mxu0 0.0
    %1283 = vmatprep.subr.mxu0 0.0
    %1284 = vmatpush1.msra.mxu0 0.0
    %1285 = vmatprep.subr.mxu0 0.0
    %1286 = vmatpush1.msra.mxu0 0.0
    %1287 = vmatprep.subr.mxu0 0.0
    %1288 = vmatpush1.msra.mxu0 0.0
    %1289 = vmatprep.subr.mxu0 0.0
    %1290 = vmatpush1.msra.mxu0 0.0
    %1291 = vmatprep.subr.mxu0 0.0
    %1292 = vmatpush1.msra.mxu0 0.0
    %1293 = vmatprep.subr.mxu0 0.0
    %1294 = vmatpush1.msra.mxu0 0.0
    %1295 = vmatprep.subr.mxu0 0.0
    %1296 = vmatpush1.msra.mxu0 0.0
    %1297 = vmatprep.subr.mxu0 0.0
    %1298 = vmatpush1.msra.mxu0 0.0
    %1299 = vmatprep.subr.mxu0 0.0
    %1300 = vmatpush1.msra.mxu0 0.0
    %1301 = vmatprep.subr.mxu0 0.0
    %1302 = vmatpush1.msra.mxu0 0.0
    %1303 = vmatprep.subr.mxu0 0.0
    %1304 = vmatpush1.msra.mxu0 0.0
    %1305 = vmatprep.subr.mxu0 0.0
    %1306 = vmatpush1.msra.mxu0 0.0
    %1307 = vmatprep.subr.mxu0 0.0
    %1308 = vmatpush1.msra.mxu0 0.0
    %1309 = vmatprep.subr.mxu0 0.0
    %1310 = vmatpush1.msra.mxu0 0.0
    %1311 = vmatprep.subr.mxu0 0.0
    %1312 = vmatpush1.msra.mxu0 0.0
    %1313 = vmatprep.subr.mxu0 0.0
    %1314 = vmatpush1.msra.mxu0 0.0
    %1315 = vmatprep.subr.mxu0 0.0
    %1316 = vmatpush1.msra.mxu0 0.0
    %1317 = vmatprep.subr.mxu0 0.0
    %1318 = vmatpush1.msra.mxu0 0.0
    %1319 = vmatprep.subr.mxu0 0.0
    %1320 = vmatpush1.msra.mxu0 0.0
    %1321 = vmatprep.subr.mxu0 0.0
    %1322 = vmatpush1.msra.mxu0 0.0
    %1323 = vmatprep.mubr.f32.mxu0 0.0
    %1324 = vmatmul.mubr.f32.gmra.mrb[0].mxu0 %v1242
    %v1325 = vpop.f32.mrb[0].mxu0
    %v1326 = vadd.f32 0.0, %v1325
    %v1327 = vpop.f32.mrb[0].mxu0
    %1328 = vmatprep.mubr.f32.mxu0 0.0
    %1329 = vmatmul.mubr.f32.gmra.mrb[0].mxu0 %v1245
    %v1330 = vpop.f32.mrb[0].mxu0
    %v1331 = vadd.f32 0.0, %v1330
    %v1332 = vpop.f32.mrb[0].mxu0
    %1333 = vmatprep.mubr.f32.mxu0 0.0
    %1334 = vmatmul.mubr.f32.gmra.mrb[0].mxu0 %v1248
    %v1335 = vpop.f32.mrb[0].mxu0
    %v1336 = vadd.f32 0.0, %v1335
    %v1337 = vpop.f32.mrb[0].mxu0
    %1338 = vmatprep.mubr.f32.mxu0 0.0
    %1339 = vmatmul.mubr.f32.gmra.mrb[0].mxu0 %v1251
    %v1340 = vpop.f32.mrb[0].mxu0
    %v1341 = vadd.f32 0.0, %v1340
    %v1342 = vpop.f32.mrb[0].mxu0
    %1343 = vmatprep.mubr.f32.mxu0 0.0
    %1344 = vmatmul.mubr.f32.gmra.mrb[0].mxu0 %v1254
    %v1345 = vpop.f32.mrb[0].mxu0
    %v1346 = vadd.f32 0.0, %v1345
    %v1347 = vpop.f32.mrb[0].mxu0
    %1348 = vmatprep.mubr.f32.mxu0 0.0
    %1349 = vmatmul.mubr.f32.gmra.mrb[0].mxu0 %v1257
    %v1350 = vpop.f32.mrb[0].mxu0
    %v1351 = vadd.f32 0.0, %v1350
    %v1352 = vpop.f32.mrb[0].mxu0
    %1353 = vdwg.mxu0
    %v1354 = vsub.f32 %v1226, %v1326
    %v1355 = vsub.f32 %v1227, %v1331
    %v1356 = vsub.f32 %v1228, %v1336
    %v1357 = vsub.f32 %v1229, %v1341
    %v1358 = vsub.f32 %v1230, %v1346
    %v1359 = vsub.f32 %v1231, %v1351
    %v1360 = vmul.f32 %v1354, %v1354
    %v1361 = vmul.f32 %v1355, %v1355
    %v1362 = vmul.f32 %v1356, %v1356
    %v1363 = vmul.f32 %v1357, %v1357
    %v1364 = vmul.f32 %v1358, %v1358
    %v1365 = vmul.f32 %v1359, %v1359
    %v1367 = vsel %vm1240, %v1360, 0
    %v1370 = vsel %vm1240, %v1361, 0
    %v1373 = vsel %vm1240, %v1362, 0
    %v1376 = vsel %vm1240, %v1363, 0
    %v1379 = vsel %vm1240, %v1364, 0
    %v1382 = vsel %vm1240, %v1365, 0
    %1384 = vmatprep.subr.mxu0 0.0
    %1385 = vmatpush1.msra.mxu0 %v1232
    %1386 = vmatprep.subr.mxu0 0.0
    %1387 = vmatpush1.msra.mxu0 %v1233
    %1388 = vmatprep.subr.mxu0 0.0
    %1389 = vmatpush1.msra.mxu0 %v1234
    %1390 = vmatprep.subr.mxu0 0.0
    %1391 = vmatpush1.msra.mxu0 %v1235
    %1392 = vmatprep.subr.mxu0 0.0
    %1393 = vmatpush1.msra.mxu0 %v1236
    %1394 = vmatprep.subr.mxu0 0.0
    %1395 = vmatpush1.msra.mxu0 %v1237
    %1396 = vmatprep.subr.mxu0 0.0
    %1397 = vmatpush1.msra.mxu0 %v1238
    %1398 = vmatprep.subr.mxu0 0.0
    %1399 = vmatpush1.msra.mxu0 %v1239
    %1400 = vmatprep.subr.mxu0 0.0
    %1401 = vmatpush1.msra.mxu0 0.0
    %1402 = vmatprep.subr.mxu0 0.0
    %1403 = vmatpush1.msra.mxu0 0.0
    %1404 = vmatprep.subr.mxu0 0.0
    %1405 = vmatpush1.msra.mxu0 0.0
    %1406 = vmatprep.subr.mxu0 0.0
    %1407 = vmatpush1.msra.mxu0 0.0
    %1408 = vmatprep.subr.mxu0 0.0
    %1409 = vmatpush1.msra.mxu0 0.0
    %1410 = vmatprep.subr.mxu0 0.0
    %1411 = vmatpush1.msra.mxu0 0.0
    %1412 = vmatprep.subr.mxu0 0.0
    %1413 = vmatpush1.msra.mxu0 0.0
    %1414 = vmatprep.subr.mxu0 0.0
    %1415 = vmatpush1.msra.mxu0 0.0
    %1416 = vmatprep.subr.mxu0 0.0
    %1417 = vmatpush1.msra.mxu0 0.0
    %1418 = vmatprep.subr.mxu0 0.0
    %1419 = vmatpush1.msra.mxu0 0.0
    %1420 = vmatprep.subr.mxu0 0.0
    %1421 = vmatpush1.msra.mxu0 0.0
    %1422 = vmatprep.subr.mxu0 0.0
    %1423 = vmatpush1.msra.mxu0 0.0
    %1424 = vmatprep.subr.mxu0 0.0
    %1425 = vmatpush1.msra.mxu0 0.0
    %1426 = vmatprep.subr.mxu0 0.0
    %1427 = vmatpush1.msra.mxu0 0.0
    %1428 = vmatprep.subr.mxu0 0.0
    %1429 = vmatpush1.msra.mxu0 0.0
    %1430 = vmatprep.subr.mxu0 0.0
    %1431 = vmatpush1.msra.mxu0 0.0
    %1432 = vmatprep.subr.mxu0 0.0
    %1433 = vmatpush1.msra.mxu0 0.0
    %1434 = vmatprep.subr.mxu0 0.0
    %1435 = vmatpush1.msra.mxu0 0.0
    %1436 = vmatprep.subr.mxu0 0.0
    %1437 = vmatpush1.msra.mxu0 0.0
    %1438 = vmatprep.subr.mxu0 0.0
    %1439 = vmatpush1.msra.mxu0 0.0
    %1440 = vmatprep.subr.mxu0 0.0
    %1441 = vmatpush1.msra.mxu0 0.0
    %1442 = vmatprep.subr.mxu0 0.0
    %1443 = vmatpush1.msra.mxu0 0.0
    %1444 = vmatprep.subr.mxu0 0.0
    %1445 = vmatpush1.msra.mxu0 0.0
    %1446 = vmatprep.subr.mxu0 0.0
    %1447 = vmatpush1.msra.mxu0 0.0
    %1448 = vmatprep.mubr.f32.mxu0 0.0
    %1449 = vmatmul.mubr.f32.gmra.mrb[0].mxu0 %v1367
    %v1450 = vpop.f32.mrb[0].mxu0
    %v1451 = vadd.f32 1e-05, %v1450
    %v1452 = vpop.f32.mrb[0].mxu0
    %1453 = vmatprep.mubr.f32.mxu0 0.0
    %1454 = vmatmul.mubr.f32.gmra.mrb[0].mxu0 %v1370
    %v1455 = vpop.f32.mrb[0].mxu0
    %v1456 = vadd.f32 1e-05, %v1455
    %v1457 = vpop.f32.mrb[0].mxu0
    %1458 = vmatprep.mubr.f32.mxu0 0.0
    %1459 = vmatmul.mubr.f32.gmra.mrb[0].mxu0 %v1373
    %v1460 = vpop.f32.mrb[0].mxu0
    %v1461 = vadd.f32 1e-05, %v1460
    %v1462 = vpop.f32.mrb[0].mxu0
    %1463 = vmatprep.mubr.f32.mxu0 0.0
    %1464 = vmatmul.mubr.f32.gmra.mrb[0].mxu0 %v1376
    %v1465 = vpop.f32.mrb[0].mxu0
    %v1466 = vadd.f32 1e-05, %v1465
    %v1467 = vpop.f32.mrb[0].mxu0
    %1468 = vmatprep.mubr.f32.mxu0 0.0
    %1469 = vmatmul.mubr.f32.gmra.mrb[0].mxu0 %v1379
    %v1470 = vpop.f32.mrb[0].mxu0
    %v1471 = vadd.f32 1e-05, %v1470
    %v1472 = vpop.f32.mrb[0].mxu0
    %1473 = vmatprep.mubr.f32.mxu0 0.0
    %1474 = vmatmul.mubr.f32.gmra.mrb[0].mxu0 %v1382
    %v1475 = vpop.f32.mrb[0].mxu0
    %v1476 = vadd.f32 1e-05, %v1475
    %v1477 = vpop.f32.mrb[0].mxu0
    %1478 = vdwg.mxu0
    %v1479 = vrsqrt.pop %v1451
    %v1480 = vrsqrt.pop %v1456
    %v1481 = vrsqrt.pop %v1461
    %v1482 = vrsqrt.pop %v1466
    %v1483 = vrsqrt.pop %v1471
    %v1484 = vrsqrt.pop %v1476
    %v1485 = vmul.f32 %v1354, %v1479
    %v1486 = vmul.f32 %v1355, %v1480
    %v1487 = vmul.f32 %v1356, %v1481
    %v1488 = vmul.f32 %v1357, %v1482
    %v1489 = vmul.f32 %v1358, %v1483
    %v1490 = vmul.f32 %v1359, %v1484
    %v1491 = vld [vmem:[%s35] sm:$0x1]
    %v1493 = vlaneseq
    %v1494 = vshrl.u32 %v1493, 7
    %v1495 = vsub.s32 0, %v1494
    %v1496 = vrot.slane %v1491, %v1495
    %v1498 = vmul.f32 %v1485, %v1496
    %v1499 = vmul.f32 %v1486, %v1496
    %v1500 = vmul.f32 %v1487, %v1496
    %v1501 = vmul.f32 %v1488, %v1496
    %v1502 = vmul.f32 %v1489, %v1496
    %v1503 = vmul.f32 %v1490, %v1496
    %v1504 = vld [vmem:[%s37] sm:$0x1]
    %v1506 = vlaneseq
    %v1507 = vshrl.u32 %v1506, 7
    %v1508 = vsub.s32 0, %v1507
    %v1509 = vrot.slane %v1504, %v1508
    %v1511 = vadd.f32 %v1498, %v1509
    %v1512 = vadd.f32 %v1499, %v1509
    %v1513 = vadd.f32 %v1500, %v1509
    %v1514 = vadd.f32 %v1501, %v1509
    %v1515 = vadd.f32 %v1502, %v1509
    %v1516 = vadd.f32 %v1503, %v1509
    %v1517 = vmax.f32 %v1511, 0.0
    %v1518 = vmax.f32 %v1512, 0.0
    %v1519 = vmax.f32 %v1513, 0.0
    %v1520 = vmax.f32 %v1514, 0.0
    %v1521 = vmax.f32 %v1515, 0.0
    %v1522 = vmax.f32 %v1516, 0.0
    %v1523 = vld [vmem:[%s41] sm:$0xff]
    %v1524 = vld [vmem:[%s41 + $0x8] sm:$0xff]
    %v1525 = vld [vmem:[%s41 + $0x10] sm:$0xff]
    %v1526 = vld [vmem:[%s41 + $0x18] sm:$0xff]
    %v1527 = vld [vmem:[%s41 + $0x20] sm:$0xff]
    %v1528 = vld [vmem:[%s41 + $0x28] sm:$0xff]
    %v1529 = vld [vmem:[%s41 + $0x30] sm:$0xff]
    %v1530 = vld [vmem:[%s41 + $0x38] sm:$0xff]
    %v1531 = vld [vmem:[%s43] sm:$0x1]
    %v1533 = vlaneseq
    %v1534 = vshrl.u32 %v1533, 7
    %v1535 = vsub.s32 0, %v1534
    %v1536 = vrot.slane %v1531, %v1535
    %v1539 = vsel %vm1240, %v1517, 0
    %v1542 = vsel %vm1240, %v1518, 0
    %v1545 = vsel %vm1240, %v1519, 0
    %v1548 = vsel %vm1240, %v1520, 0
    %v1551 = vsel %vm1240, %v1521, 0
    %v1554 = vsel %vm1240, %v1522, 0
    %1556 = vmatprep.subr.mxu0 0.0
    %1557 = vmatpush1.msra.mxu0 %v1523
    %1558 = vmatprep.subr.mxu0 0.0
    %1559 = vmatpush1.msra.mxu0 %v1524
    %1560 = vmatprep.subr.mxu0 0.0
    %1561 = vmatpush1.msra.mxu0 %v1525
    %1562 = vmatprep.subr.mxu0 0.0
    %1563 = vmatpush1.msra.mxu0 %v1526
    %1564 = vmatprep.subr.mxu0 0.0
    %1565 = vmatpush1.msra.mxu0 %v1527
    %1566 = vmatprep.subr.mxu0 0.0
    %1567 = vmatpush1.msra.mxu0 %v1528
    %1568 = vmatprep.subr.mxu0 0.0
    %1569 = vmatpush1.msra.mxu0 %v1529
    %1570 = vmatprep.subr.mxu0 0.0
    %1571 = vmatpush1.msra.mxu0 %v1530
    %1572 = vmatprep.subr.mxu0 0.0
    %1573 = vmatpush1.msra.mxu0 0.0
    %1574 = vmatprep.subr.mxu0 0.0
    %1575 = vmatpush1.msra.mxu0 0.0
    %1576 = vmatprep.subr.mxu0 0.0
    %1577 = vmatpush1.msra.mxu0 0.0
    %1578 = vmatprep.subr.mxu0 0.0
    %1579 = vmatpush1.msra.mxu0 0.0
    %1580 = vmatprep.subr.mxu0 0.0
    %1581 = vmatpush1.msra.mxu0 0.0
    %1582 = vmatprep.subr.mxu0 0.0
    %1583 = vmatpush1.msra.mxu0 0.0
    %1584 = vmatprep.subr.mxu0 0.0
    %1585 = vmatpush1.msra.mxu0 0.0
    %1586 = vmatprep.subr.mxu0 0.0
    %1587 = vmatpush1.msra.mxu0 0.0
    %1588 = vmatprep.subr.mxu0 0.0
    %1589 = vmatpush1.msra.mxu0 0.0
    %1590 = vmatprep.subr.mxu0 0.0
    %1591 = vmatpush1.msra.mxu0 0.0
    %1592 = vmatprep.subr.mxu0 0.0
    %1593 = vmatpush1.msra.mxu0 0.0
    %1594 = vmatprep.subr.mxu0 0.0
    %1595 = vmatpush1.msra.mxu0 0.0
    %1596 = vmatprep.subr.mxu0 0.0
    %1597 = vmatpush1.msra.mxu0 0.0
    %1598 = vmatprep.subr.mxu0 0.0
    %1599 = vmatpush1.msra.mxu0 0.0
    %1600 = vmatprep.subr.mxu0 0.0
    %1601 = vmatpush1.msra.mxu0 0.0
    %1602 = vmatprep.subr.mxu0 0.0
    %1603 = vmatpush1.msra.mxu0 0.0
    %1604 = vmatprep.subr.mxu0 0.0
    %1605 = vmatpush1.msra.mxu0 0.0
    %1606 = vmatprep.subr.mxu0 0.0
    %1607 = vmatpush1.msra.mxu0 0.0
    %1608 = vmatprep.subr.mxu0 0.0
    %1609 = vmatpush1.msra.mxu0 0.0
    %1610 = vmatprep.subr.mxu0 0.0
    %1611 = vmatpush1.msra.mxu0 0.0
    %1612 = vmatprep.subr.mxu0 0.0
    %1613 = vmatpush1.msra.mxu0 0.0
    %1614 = vmatprep.subr.mxu0 0.0
    %1615 = vmatpush1.msra.mxu0 0.0
    %1616 = vmatprep.subr.mxu0 0.0
    %1617 = vmatpush1.msra.mxu0 0.0
    %1618 = vmatprep.subr.mxu0 0.0
    %1619 = vmatpush1.msra.mxu0 0.0
    %1620 = vmatprep.mubr.f32.mxu0 0.0
    %1621 = vmatmul.mubr.f32.gmra.mrb[0].mxu0 %v1539
    %v1622 = vpop.f32.mrb[0].mxu0
    %v1623 = vadd.f32 %v1536, %v1622
    %v1624 = vpop.f32.mrb[0].mxu0
    %1625 = vmatprep.mubr.f32.mxu0 0.0
    %1626 = vmatmul.mubr.f32.gmra.mrb[0].mxu0 %v1542
    %v1627 = vpop.f32.mrb[0].mxu0
    %v1628 = vadd.f32 %v1536, %v1627
    %v1629 = vpop.f32.mrb[0].mxu0
    %1630 = vmatprep.mubr.f32.mxu0 0.0
    %1631 = vmatmul.mubr.f32.gmra.mrb[0].mxu0 %v1545
    %v1632 = vpop.f32.mrb[0].mxu0
    %v1633 = vadd.f32 %v1536, %v1632
    %v1634 = vpop.f32.mrb[0].mxu0
    %1635 = vmatprep.mubr.f32.mxu0 0.0
    %1636 = vmatmul.mubr.f32.gmra.mrb[0].mxu0 %v1548
    %v1637 = vpop.f32.mrb[0].mxu0
    %v1638 = vadd.f32 %v1536, %v1637
    %v1639 = vpop.f32.mrb[0].mxu0
    %1640 = vmatprep.mubr.f32.mxu0 0.0
    %1641 = vmatmul.mubr.f32.gmra.mrb[0].mxu0 %v1551
    %v1642 = vpop.f32.mrb[0].mxu0
    %v1643 = vadd.f32 %v1536, %v1642
    %v1644 = vpop.f32.mrb[0].mxu0
    %1645 = vmatprep.mubr.f32.mxu0 0.0
    %1646 = vmatmul.mubr.f32.gmra.mrb[0].mxu0 %v1554
    %v1647 = vpop.f32.mrb[0].mxu0
    %v1648 = vadd.f32 %v1536, %v1647
    %v1649 = vpop.f32.mrb[0].mxu0
    %1650 = vdwg.mxu0
    %v1651 = vld [vmem:[%s45] sm:$0xff]
    %v1652 = vld [vmem:[%s45 + $0x8] sm:$0xff]
    %v1653 = vld [vmem:[%s45 + $0x10] sm:$0xff]
    %v1654 = vld [vmem:[%s45 + $0x18] sm:$0xff]
    %v1655 = vld [vmem:[%s45 + $0x20] sm:$0xff]
    %v1656 = vld [vmem:[%s45 + $0x28] sm:$0xff]
    %v1657 = vld [vmem:[%s45 + $0x30] sm:$0xff]
    %v1658 = vld [vmem:[%s45 + $0x38] sm:$0xff]
    %v1659 = vld [vmem:[%s47] sm:$0x1]
    %v1661 = vlaneseq
    %v1662 = vshrl.u32 %v1661, 7
    %v1663 = vsub.s32 0, %v1662
    %v1664 = vrot.slane %v1659, %v1663
    %1666 = vmatprep.subr.mxu0 0.0
    %1667 = vmatpush1.msra.mxu0 %v1651
    %1668 = vmatprep.subr.mxu0 0.0
    %1669 = vmatpush1.msra.mxu0 %v1652
    %1670 = vmatprep.subr.mxu0 0.0
    %1671 = vmatpush1.msra.mxu0 %v1653
    %1672 = vmatprep.subr.mxu0 0.0
    %1673 = vmatpush1.msra.mxu0 %v1654
    %1674 = vmatprep.subr.mxu0 0.0
    %1675 = vmatpush1.msra.mxu0 %v1655
    %1676 = vmatprep.subr.mxu0 0.0
    %1677 = vmatpush1.msra.mxu0 %v1656
    %1678 = vmatprep.subr.mxu0 0.0
    %1679 = vmatpush1.msra.mxu0 %v1657
    %1680 = vmatprep.subr.mxu0 0.0
    %1681 = vmatpush1.msra.mxu0 %v1658
    %1682 = vmatprep.subr.mxu0 0.0
    %1683 = vmatpush1.msra.mxu0 0.0
    %1684 = vmatprep.subr.mxu0 0.0
    %1685 = vmatpush1.msra.mxu0 0.0
    %1686 = vmatprep.subr.mxu0 0.0
    %1687 = vmatpush1.msra.mxu0 0.0
    %1688 = vmatprep.subr.mxu0 0.0
    %1689 = vmatpush1.msra.mxu0 0.0
    %1690 = vmatprep.subr.mxu0 0.0
    %1691 = vmatpush1.msra.mxu0 0.0
    %1692 = vmatprep.subr.mxu0 0.0
    %1693 = vmatpush1.msra.mxu0 0.0
    %1694 = vmatprep.subr.mxu0 0.0
    %1695 = vmatpush1.msra.mxu0 0.0
    %1696 = vmatprep.subr.mxu0 0.0
    %1697 = vmatpush1.msra.mxu0 0.0
    %1698 = vmatprep.subr.mxu0 0.0
    %1699 = vmatpush1.msra.mxu0 0.0
    %1700 = vmatprep.subr.mxu0 0.0
    %1701 = vmatpush1.msra.mxu0 0.0
    %1702 = vmatprep.subr.mxu0 0.0
    %1703 = vmatpush1.msra.mxu0 0.0
    %1704 = vmatprep.subr.mxu0 0.0
    %1705 = vmatpush1.msra.mxu0 0.0
    %1706 = vmatprep.subr.mxu0 0.0
    %1707 = vmatpush1.msra.mxu0 0.0
    %1708 = vmatprep.subr.mxu0 0.0
    %1709 = vmatpush1.msra.mxu0 0.0
    %1710 = vmatprep.subr.mxu0 0.0
    %1711 = vmatpush1.msra.mxu0 0.0
    %1712 = vmatprep.subr.mxu0 0.0
    %1713 = vmatpush1.msra.mxu0 0.0
    %1714 = vmatprep.subr.mxu0 0.0
    %1715 = vmatpush1.msra.mxu0 0.0
    %1716 = vmatprep.subr.mxu0 0.0
    %1717 = vmatpush1.msra.mxu0 0.0
    %1718 = vmatprep.subr.mxu0 0.0
    %1719 = vmatpush1.msra.mxu0 0.0
    %1720 = vmatprep.subr.mxu0 0.0
    %1721 = vmatpush1.msra.mxu0 0.0
    %1722 = vmatprep.subr.mxu0 0.0
    %1723 = vmatpush1.msra.mxu0 0.0
    %1724 = vmatprep.subr.mxu0 0.0
    %1725 = vmatpush1.msra.mxu0 0.0
    %1726 = vmatprep.subr.mxu0 0.0
    %1727 = vmatpush1.msra.mxu0 0.0
    %1728 = vmatprep.subr.mxu0 0.0
    %1729 = vmatpush1.msra.mxu0 0.0
    %1730 = vmatprep.mubr.f32.mxu0 0.0
    %1731 = vmatmul.mubr.f32.gmra.mrb[0].mxu0 %v1539
    %v1732 = vpop.f32.mrb[0].mxu0
    %v1733 = vadd.f32 %v1664, %v1732
    %v1734 = vpop.f32.mrb[0].mxu0
    %1735 = vmatprep.mubr.f32.mxu0 0.0
    %1736 = vmatmul.mubr.f32.gmra.mrb[0].mxu0 %v1542
    %v1737 = vpop.f32.mrb[0].mxu0
    %v1738 = vadd.f32 %v1664, %v1737
    %v1739 = vpop.f32.mrb[0].mxu0
    %1740 = vmatprep.mubr.f32.mxu0 0.0
    %1741 = vmatmul.mubr.f32.gmra.mrb[0].mxu0 %v1545
    %v1742 = vpop.f32.mrb[0].mxu0
    %v1743 = vadd.f32 %v1664, %v1742
    %v1744 = vpop.f32.mrb[0].mxu0
    %1745 = vmatprep.mubr.f32.mxu0 0.0
    %1746 = vmatmul.mubr.f32.gmra.mrb[0].mxu0 %v1548
    %v1747 = vpop.f32.mrb[0].mxu0
    %v1748 = vadd.f32 %v1664, %v1747
    %v1749 = vpop.f32.mrb[0].mxu0
    %1750 = vmatprep.mubr.f32.mxu0 0.0
    %1751 = vmatmul.mubr.f32.gmra.mrb[0].mxu0 %v1551
    %v1752 = vpop.f32.mrb[0].mxu0
    %v1753 = vadd.f32 %v1664, %v1752
    %v1754 = vpop.f32.mrb[0].mxu0
    %1755 = vmatprep.mubr.f32.mxu0 0.0
    %1756 = vmatmul.mubr.f32.gmra.mrb[0].mxu0 %v1554
    %v1757 = vpop.f32.mrb[0].mxu0
    %v1758 = vadd.f32 %v1664, %v1757
    %v1759 = vpop.f32.mrb[0].mxu0
    %1760 = vdwg.mxu0
    %v1761 = vld [vmem:[%s49] sm:$0xff]
    %v1762 = vld [vmem:[%s49 + $0x8] sm:$0xff]
    %v1763 = vld [vmem:[%s51] sm:$0x1]
    %v1765 = vlaneseq
    %v1766 = vshrl.u32 %v1765, 7
    %v1767 = vsub.s32 0, %v1766
    %v1768 = vrot.slane %v1763, %v1767
    %1770 = vmatprep.subr.mxu0 0.0
    %1771 = vmatpush1.msra.mxu0 %v1761
    %1772 = vmatprep.subr.mxu0 0.0
    %1773 = vmatpush1.msra.mxu0 %v1762
    %1774 = vmatprep.subr.mxu0 0.0
    %1775 = vmatpush1.msra.mxu0 0.0
    %1776 = vmatprep.subr.mxu0 0.0
    %1777 = vmatpush1.msra.mxu0 0.0
    %1778 = vmatprep.subr.mxu0 0.0
    %1779 = vmatpush1.msra.mxu0 0.0
    %1780 = vmatprep.subr.mxu0 0.0
    %1781 = vmatpush1.msra.mxu0 0.0
    %1782 = vmatprep.subr.mxu0 0.0
    %1783 = vmatpush1.msra.mxu0 0.0
    %1784 = vmatprep.subr.mxu0 0.0
    %1785 = vmatpush1.msra.mxu0 0.0
    %1786 = vmatprep.subr.mxu0 0.0
    %1787 = vmatpush1.msra.mxu0 0.0
    %1788 = vmatprep.subr.mxu0 0.0
    %1789 = vmatpush1.msra.mxu0 0.0
    %1790 = vmatprep.subr.mxu0 0.0
    %1791 = vmatpush1.msra.mxu0 0.0
    %1792 = vmatprep.subr.mxu0 0.0
    %1793 = vmatpush1.msra.mxu0 0.0
    %1794 = vmatprep.subr.mxu0 0.0
    %1795 = vmatpush1.msra.mxu0 0.0
    %1796 = vmatprep.subr.mxu0 0.0
    %1797 = vmatpush1.msra.mxu0 0.0
    %1798 = vmatprep.subr.mxu0 0.0
    %1799 = vmatpush1.msra.mxu0 0.0
    %1800 = vmatprep.subr.mxu0 0.0
    %1801 = vmatpush1.msra.mxu0 0.0
    %1802 = vmatprep.subr.mxu0 0.0
    %1803 = vmatpush1.msra.mxu0 0.0
    %1804 = vmatprep.subr.mxu0 0.0
    %1805 = vmatpush1.msra.mxu0 0.0
    %1806 = vmatprep.subr.mxu0 0.0
    %1807 = vmatpush1.msra.mxu0 0.0
    %1808 = vmatprep.subr.mxu0 0.0
    %1809 = vmatpush1.msra.mxu0 0.0
    %1810 = vmatprep.subr.mxu0 0.0
    %1811 = vmatpush1.msra.mxu0 0.0
    %1812 = vmatprep.subr.mxu0 0.0
    %1813 = vmatpush1.msra.mxu0 0.0
    %1814 = vmatprep.subr.mxu0 0.0
    %1815 = vmatpush1.msra.mxu0 0.0
    %1816 = vmatprep.subr.mxu0 0.0
    %1817 = vmatpush1.msra.mxu0 0.0
    %1818 = vmatprep.subr.mxu0 0.0
    %1819 = vmatpush1.msra.mxu0 0.0
    %1820 = vmatprep.subr.mxu0 0.0
    %1821 = vmatpush1.msra.mxu0 0.0
    %1822 = vmatprep.subr.mxu0 0.0
    %1823 = vmatpush1.msra.mxu0 0.0
    %1824 = vmatprep.subr.mxu0 0.0
    %1825 = vmatpush1.msra.mxu0 0.0
    %1826 = vmatprep.subr.mxu0 0.0
    %1827 = vmatpush1.msra.mxu0 0.0
    %1828 = vmatprep.subr.mxu0 0.0
    %1829 = vmatpush1.msra.mxu0 0.0
    %1830 = vmatprep.subr.mxu0 0.0
    %1831 = vmatpush1.msra.mxu0 0.0
    %1832 = vmatprep.subr.mxu0 0.0
    %1833 = vmatpush1.msra.mxu0 0.0
    %1834 = vmatprep.mubr.f32.mxu0 0.0
    %1835 = vmatmul.mubr.f32.gmra.mrb[0].mxu0 %v611
    %v1836 = vpop.f32.mrb[0].mxu0
    %v1837 = vadd.f32 %v1768, %v1836
    %v1838 = vpop.f32.mrb[0].mxu0
    %1839 = vmatprep.mubr.f32.mxu0 0.0
    %1840 = vmatmul.mubr.f32.gmra.mrb[0].mxu0 %v614
    %v1841 = vpop.f32.mrb[0].mxu0
    %v1842 = vadd.f32 %v1768, %v1841
    %v1843 = vpop.f32.mrb[0].mxu0
    %1844 = vmatprep.mubr.f32.mxu0 0.0
    %1845 = vmatmul.mubr.f32.gmra.mrb[0].mxu0 %v617
    %v1846 = vpop.f32.mrb[0].mxu0
    %v1847 = vadd.f32 %v1768, %v1846
    %v1848 = vpop.f32.mrb[0].mxu0
    %1849 = vmatprep.mubr.f32.mxu0 0.0
    %1850 = vmatmul.mubr.f32.gmra.mrb[0].mxu0 %v620
    %v1851 = vpop.f32.mrb[0].mxu0
    %v1852 = vadd.f32 %v1768, %v1851
    %v1853 = vpop.f32.mrb[0].mxu0
    %1854 = vmatprep.mubr.f32.mxu0 0.0
    %1855 = vmatmul.mubr.f32.gmra.mrb[0].mxu0 %v623
    %v1856 = vpop.f32.mrb[0].mxu0
    %v1857 = vadd.f32 %v1768, %v1856
    %v1858 = vpop.f32.mrb[0].mxu0
    %1859 = vmatprep.mubr.f32.mxu0 0.0
    %1860 = vmatmul.mubr.f32.gmra.mrb[0].mxu0 %v626
    %v1861 = vpop.f32.mrb[0].mxu0
    %v1862 = vadd.f32 %v1768, %v1861
    %v1863 = vpop.f32.mrb[0].mxu0
    %1864 = vdwg.mxu0
    %v1865 = vxor.u32 %v1837, 2147483648
    %v1866 = vxor.u32 %v1842, 2147483648
    %v1867 = vxor.u32 %v1847, 2147483648
    %v1868 = vxor.u32 %v1852, 2147483648
    %v1869 = vxor.u32 %v1857, 2147483648
    %v1870 = vxor.u32 %v1862, 2147483648
    %v1871 = vmul.f32 %v1865, 1.442695
    %v1872 = vpow.pop %v1871
    %v1873 = vmul.f32 %v1866, 1.442695
    %v1874 = vpow.pop %v1873
    %v1875 = vmul.f32 %v1867, 1.442695
    %v1876 = vpow.pop %v1875
    %v1877 = vmul.f32 %v1868, 1.442695
    %v1878 = vpow.pop %v1877
    %v1879 = vmul.f32 %v1869, 1.442695
    %v1880 = vpow.pop %v1879
    %v1881 = vmul.f32 %v1870, 1.442695
    %v1882 = vpow.pop %v1881
    %v1883 = vadd.f32 %v1872, 1.0
    %v1884 = vadd.f32 %v1874, 1.0
    %v1885 = vadd.f32 %v1876, 1.0
    %v1886 = vadd.f32 %v1878, 1.0
    %v1887 = vadd.f32 %v1880, 1.0
    %v1888 = vadd.f32 %v1882, 1.0
    %v1889 = vrcp.pop %v1883
    %v1890 = vmul.f32 1.0, %v1889
    %v1891 = vrcp.pop %v1884
    %v1892 = vmul.f32 1.0, %v1891
    %v1893 = vrcp.pop %v1885
    %v1894 = vmul.f32 1.0, %v1893
    %v1895 = vrcp.pop %v1886
    %v1896 = vmul.f32 1.0, %v1895
    %v1897 = vrcp.pop %v1887
    %v1898 = vmul.f32 1.0, %v1897
    %v1899 = vrcp.pop %v1888
    %v1900 = vmul.f32 1.0, %v1899
    %v1901 = vmul.f32 %v1733, %v1890
    %v1902 = vmul.f32 %v1738, %v1892
    %v1903 = vmul.f32 %v1743, %v1894
    %v1904 = vmul.f32 %v1748, %v1896
    %v1905 = vmul.f32 %v1753, %v1898
    %v1906 = vmul.f32 %v1758, %v1900
    %v1907 = vmul.f32 %v579, %v1623
    %v1908 = vmul.f32 %v584, %v1628
    %v1909 = vmul.f32 %v589, %v1633
    %v1910 = vmul.f32 %v594, %v1638
    %v1911 = vmul.f32 %v599, %v1643
    %v1912 = vmul.f32 %v604, %v1648
    %v1913 = vld [vmem:[%s53] sm:$0xff]
    %v1914 = vld [vmem:[%s53 + $0x8] sm:$0xff]
    %v1915 = vld [vmem:[%s53 + $0x10] sm:$0xff]
    %v1916 = vld [vmem:[%s53 + $0x18] sm:$0xff]
    %v1918 = vsel %vm272, %v1907, 0
    %v1921 = vsel %vm272, %v1908, 0
    %v1924 = vsel %vm272, %v1909, 0
    %v1927 = vsel %vm272, %v1910, 0
    %v1930 = vsel %vm272, %v1911, 0
    %v1933 = vsel %vm272, %v1912, 0
    %1935 = vmatprep.subr.mxu0 0.0
    %1936 = vmatpush1.msra.mxu0 %v1913
    %1937 = vmatprep.subr.mxu0 0.0
    %1938 = vmatpush1.msra.mxu0 %v1914
    %1939 = vmatprep.subr.mxu0 0.0
    %1940 = vmatpush1.msra.mxu0 %v1915
    %1941 = vmatprep.subr.mxu0 0.0
    %1942 = vmatpush1.msra.mxu0 %v1916
    %1943 = vmatprep.subr.mxu0 0.0
    %1944 = vmatpush1.msra.mxu0 0.0
    %1945 = vmatprep.subr.mxu0 0.0
    %1946 = vmatpush1.msra.mxu0 0.0
    %1947 = vmatprep.subr.mxu0 0.0
    %1948 = vmatpush1.msra.mxu0 0.0
    %1949 = vmatprep.subr.mxu0 0.0
    %1950 = vmatpush1.msra.mxu0 0.0
    %1951 = vmatprep.subr.mxu0 0.0
    %1952 = vmatpush1.msra.mxu0 0.0
    %1953 = vmatprep.subr.mxu0 0.0
    %1954 = vmatpush1.msra.mxu0 0.0
    %1955 = vmatprep.subr.mxu0 0.0
    %1956 = vmatpush1.msra.mxu0 0.0
    %1957 = vmatprep.subr.mxu0 0.0
    %1958 = vmatpush1.msra.mxu0 0.0
    %1959 = vmatprep.subr.mxu0 0.0
    %1960 = vmatpush1.msra.mxu0 0.0
    %1961 = vmatprep.subr.mxu0 0.0
    %1962 = vmatpush1.msra.mxu0 0.0
    %1963 = vmatprep.subr.mxu0 0.0
    %1964 = vmatpush1.msra.mxu0 0.0
    %1965 = vmatprep.subr.mxu0 0.0
    %1966 = vmatpush1.msra.mxu0 0.0
    %1967 = vmatprep.subr.mxu0 0.0
    %1968 = vmatpush1.msra.mxu0 0.0
    %1969 = vmatprep.subr.mxu0 0.0
    %1970 = vmatpush1.msra.mxu0 0.0
    %1971 = vmatprep.subr.mxu0 0.0
    %1972 = vmatpush1.msra.mxu0 0.0
    %1973 = vmatprep.subr.mxu0 0.0
    %1974 = vmatpush1.msra.mxu0 0.0
    %1975 = vmatprep.subr.mxu0 0.0
    %1976 = vmatpush1.msra.mxu0 0.0
    %1977 = vmatprep.subr.mxu0 0.0
    %1978 = vmatpush1.msra.mxu0 0.0
    %1979 = vmatprep.subr.mxu0 0.0
    %1980 = vmatpush1.msra.mxu0 0.0
    %1981 = vmatprep.subr.mxu0 0.0
    %1982 = vmatpush1.msra.mxu0 0.0
    %1983 = vmatprep.subr.mxu0 0.0
    %1984 = vmatpush1.msra.mxu0 0.0
    %1985 = vmatprep.subr.mxu0 0.0
    %1986 = vmatpush1.msra.mxu0 0.0
    %1987 = vmatprep.subr.mxu0 0.0
    %1988 = vmatpush1.msra.mxu0 0.0
    %1989 = vmatprep.subr.mxu0 0.0
    %1990 = vmatpush1.msra.mxu0 0.0
    %1991 = vmatprep.subr.mxu0 0.0
    %1992 = vmatpush1.msra.mxu0 0.0
    %1993 = vmatprep.subr.mxu0 0.0
    %1994 = vmatpush1.msra.mxu0 0.0
    %1995 = vmatprep.subr.mxu0 0.0
    %1996 = vmatpush1.msra.mxu0 0.0
    %1997 = vmatprep.subr.mxu0 0.0
    %1998 = vmatpush1.msra.mxu0 0.0
    %1999 = vmatprep.mubr.f32.mxu0 0.0
    %2000 = vmatmul.mubr.f32.gmra.mrb[0].mxu0 %v1918
    %v2001 = vpop.f32.mrb[0].mxu0
    %v2002 = vadd.f32 0.0, %v2001
    %v2003 = vpop.f32.mrb[0].mxu0
    %2004 = vmatprep.mubr.f32.mxu0 0.0
    %2005 = vmatmul.mubr.f32.gmra.mrb[0].mxu0 %v1921
    %v2006 = vpop.f32.mrb[0].mxu0
    %v2007 = vadd.f32 0.0, %v2006
    %v2008 = vpop.f32.mrb[0].mxu0
    %2009 = vmatprep.mubr.f32.mxu0 0.0
    %2010 = vmatmul.mubr.f32.gmra.mrb[0].mxu0 %v1924
    %v2011 = vpop.f32.mrb[0].mxu0
    %v2012 = vadd.f32 0.0, %v2011
    %v2013 = vpop.f32.mrb[0].mxu0
    %2014 = vmatprep.mubr.f32.mxu0 0.0
    %2015 = vmatmul.mubr.f32.gmra.mrb[0].mxu0 %v1927
    %v2016 = vpop.f32.mrb[0].mxu0
    %v2017 = vadd.f32 0.0, %v2016
    %v2018 = vpop.f32.mrb[0].mxu0
    %2019 = vmatprep.mubr.f32.mxu0 0.0
    %2020 = vmatmul.mubr.f32.gmra.mrb[0].mxu0 %v1930
    %v2021 = vpop.f32.mrb[0].mxu0
    %v2022 = vadd.f32 0.0, %v2021
    %v2023 = vpop.f32.mrb[0].mxu0
    %2024 = vmatprep.mubr.f32.mxu0 0.0
    %2025 = vmatmul.mubr.f32.gmra.mrb[0].mxu0 %v1933
    %v2026 = vpop.f32.mrb[0].mxu0
    %v2027 = vadd.f32 0.0, %v2026
    %v2028 = vpop.f32.mrb[0].mxu0
    %2029 = vdwg.mxu0
    %v2030 = vsub.f32 %v173, 1.0
    %v2031 = vsub.f32 %v174, 1.0
    %v2032 = vmul.f32 %v2030, 1e+30
    %v2033 = vmul.f32 %v2031, 1e+30
    %2034 = vxpose.xlu0.b32.start [1/16] %v2002, 128
    %2035 = vxpose.xlu0.b32.cont [2/16] %v2007, 128
    %2036 = vxpose.xlu0.b32.cont [3/16] %v2012, 128
    %2037 = vxpose.xlu0.b32.cont [4/16] %v2017, 128
    %2038 = vxpose.xlu0.b32.cont [5/16] %v2022, 128
    %2039 = vxpose.xlu0.b32.cont [6/16] %v2027, 128
    %2040 = vxpose.xlu0.b32.cont [7/16] 0.0, 128
    %2041 = vxpose.xlu0.b32.cont [8/16] 0.0, 128
    %2042 = vxpose.xlu0.b32.cont [9/16] 0.0, 128
    %2043 = vxpose.xlu0.b32.cont [10/16] 0.0, 128
    %2044 = vxpose.xlu0.b32.cont [11/16] 0.0, 128
    %2045 = vxpose.xlu0.b32.cont [12/16] 0.0, 128
    %2046 = vxpose.xlu0.b32.cont [13/16] 0.0, 128
    %2047 = vxpose.xlu0.b32.cont [14/16] 0.0, 128
    %2048 = vxpose.xlu0.b32.cont [15/16] 0.0, 128
    %2049 = vxpose.xlu0.b32.end [16/16] 0.0, 128
    %v2050 = vpop.trf.xlu0
    %v2051 = vpop.trf.xlu0
    %v2052 = vpop.trf.xlu0
    %v2053 = vpop.trf.xlu0
    %v2054 = vpop.trf.xlu0
    %v2055 = vpop.trf.xlu0
    %v2056 = vpop.trf.xlu0
    %v2057 = vpop.trf.xlu0
    %v2058 = vpop.trf.xlu0
    %v2059 = vpop.trf.xlu0
    %v2060 = vpop.trf.xlu0
    %v2061 = vpop.trf.xlu0
    %v2062 = vpop.trf.xlu0
    %v2063 = vpop.trf.xlu0
    %v2064 = vpop.trf.xlu0
    %v2065 = vpop.trf.xlu0
    %v2068 = vcombine.high %v2032, %v2032
    %v2070 = vunpack.c.l.s4 1966171168
    %v2071 = vunpack.c.0.s8 %v2070
    %v2072 = vlaneseq
    %v2073 = vshrl.u32 %v2072, 7
    %v2074 = vsub.s32 %v2071, %v2073
    %v2075 = vrot.slane %v2032, %v2074
    %v2077 = vunpack.c.l.s4 1966171168
    %v2078 = vunpack.c.0.s8 %v2077
    %v2079 = vlaneseq
    %v2080 = vshrl.u32 %v2079, 7
    %v2081 = vsub.s32 %v2078, %v2080
    %v2082 = vrot.slane %v2068, %v2081
    %v2083 = vcombine.high %v2075, %v2075
    %v2084 = vcombine.high %v2082, %v2082
    %v2086 = vunpack.c.l.s4 1966171168
    %v2087 = vunpack.c.0.s8 %v2086
    %v2088 = vlaneseq
    %v2089 = vshrl.u32 %v2088, 7
    %v2090 = vsub.s32 %v2087, %v2089
    %v2091 = vrot.slane %v2075, %v2090
    %v2093 = vunpack.c.l.s4 1966171168
    %v2094 = vunpack.c.0.s8 %v2093
    %v2095 = vlaneseq
    %v2096 = vshrl.u32 %v2095, 7
    %v2097 = vsub.s32 %v2094, %v2096
    %v2098 = vrot.slane %v2082, %v2097
    %v2100 = vunpack.c.l.s4 1966171168
    %v2101 = vunpack.c.0.s8 %v2100
    %v2102 = vlaneseq
    %v2103 = vshrl.u32 %v2102, 7
    %v2104 = vsub.s32 %v2101, %v2103
    %v2105 = vrot.slane %v2083, %v2104
    %v2107 = vunpack.c.l.s4 1966171168
    %v2108 = vunpack.c.0.s8 %v2107
    %v2109 = vlaneseq
    %v2110 = vshrl.u32 %v2109, 7
    %v2111 = vsub.s32 %v2108, %v2110
    %v2112 = vrot.slane %v2084, %v2111
    %v2113 = vcombine.high %v2091, %v2091
    %v2114 = vcombine.high %v2098, %v2098
    %v2115 = vcombine.high %v2105, %v2105
    %v2116 = vcombine.high %v2112, %v2112
    %v2117 = vcombine.high %v2033, %v2033
    %v2119 = vunpack.c.l.s4 1966171168
    %v2120 = vunpack.c.0.s8 %v2119
    %v2121 = vlaneseq
    %v2122 = vshrl.u32 %v2121, 7
    %v2123 = vsub.s32 %v2120, %v2122
    %v2124 = vrot.slane %v2033, %v2123
    %v2126 = vunpack.c.l.s4 1966171168
    %v2127 = vunpack.c.0.s8 %v2126
    %v2128 = vlaneseq
    %v2129 = vshrl.u32 %v2128, 7
    %v2130 = vsub.s32 %v2127, %v2129
    %v2131 = vrot.slane %v2117, %v2130
    %v2132 = vcombine.high %v2124, %v2124
    %v2133 = vcombine.high %v2131, %v2131
    %v2135 = vunpack.c.l.s4 1966171168
    %v2136 = vunpack.c.0.s8 %v2135
    %v2137 = vlaneseq
    %v2138 = vshrl.u32 %v2137, 7
    %v2139 = vsub.s32 %v2136, %v2138
    %v2140 = vrot.slane %v2124, %v2139
    %v2142 = vunpack.c.l.s4 1966171168
    %v2143 = vunpack.c.0.s8 %v2142
    %v2144 = vlaneseq
    %v2145 = vshrl.u32 %v2144, 7
    %v2146 = vsub.s32 %v2143, %v2145
    %v2147 = vrot.slane %v2131, %v2146
    %v2149 = vunpack.c.l.s4 1966171168
    %v2150 = vunpack.c.0.s8 %v2149
    %v2151 = vlaneseq
    %v2152 = vshrl.u32 %v2151, 7
    %v2153 = vsub.s32 %v2150, %v2152
    %v2154 = vrot.slane %v2132, %v2153
    %v2156 = vunpack.c.l.s4 1966171168
    %v2157 = vunpack.c.0.s8 %v2156
    %v2158 = vlaneseq
    %v2159 = vshrl.u32 %v2158, 7
    %v2160 = vsub.s32 %v2157, %v2159
    %v2161 = vrot.slane %v2133, %v2160
    %v2162 = vcombine.high %v2140, %v2140
    %v2163 = vcombine.high %v2147, %v2147
    %v2164 = vcombine.high %v2154, %v2154
    %v2165 = vcombine.high %v2161, %v2161
    %v2166 = vlaneseq
    %v2167 = vshrl.u32 %v2166, 7
    %v2168 = vsub.s32 0, %v2167
    %v2169 = vrot.slane %v2091, %v2168
    %v2170 = vlaneseq
    %v2171 = vshrl.u32 %v2170, 7
    %v2172 = vsub.s32 0, %v2171
    %v2173 = vrot.slane %v2105, %v2172
    %v2174 = vlaneseq
    %v2175 = vshrl.u32 %v2174, 7
    %v2176 = vsub.s32 0, %v2175
    %v2177 = vrot.slane %v2113, %v2176
    %v2178 = vlaneseq
    %v2179 = vshrl.u32 %v2178, 7
    %v2180 = vsub.s32 0, %v2179
    %v2181 = vrot.slane %v2115, %v2180
    %v2182 = vlaneseq
    %v2183 = vshrl.u32 %v2182, 7
    %v2184 = vsub.s32 0, %v2183
    %v2185 = vrot.slane %v2098, %v2184
    %v2186 = vlaneseq
    %v2187 = vshrl.u32 %v2186, 7
    %v2188 = vsub.s32 0, %v2187
    %v2189 = vrot.slane %v2112, %v2188
    %v2190 = vlaneseq
    %v2191 = vshrl.u32 %v2190, 7
    %v2192 = vsub.s32 0, %v2191
    %v2193 = vrot.slane %v2114, %v2192
    %v2194 = vlaneseq
    %v2195 = vshrl.u32 %v2194, 7
    %v2196 = vsub.s32 0, %v2195
    %v2197 = vrot.slane %v2116, %v2196
    %v2198 = vlaneseq
    %v2199 = vshrl.u32 %v2198, 7
    %v2200 = vsub.s32 0, %v2199
    %v2201 = vrot.slane %v2140, %v2200
    %v2202 = vlaneseq
    %v2203 = vshrl.u32 %v2202, 7
    %v2204 = vsub.s32 0, %v2203
    %v2205 = vrot.slane %v2154, %v2204
    %v2206 = vlaneseq
    %v2207 = vshrl.u32 %v2206, 7
    %v2208 = vsub.s32 0, %v2207
    %v2209 = vrot.slane %v2162, %v2208
    %v2210 = vlaneseq
    %v2211 = vshrl.u32 %v2210, 7
    %v2212 = vsub.s32 0, %v2211
    %v2213 = vrot.slane %v2164, %v2212
    %v2214 = vlaneseq
    %v2215 = vshrl.u32 %v2214, 7
    %v2216 = vsub.s32 0, %v2215
    %v2217 = vrot.slane %v2147, %v2216
    %v2218 = vlaneseq
    %v2219 = vshrl.u32 %v2218, 7
    %v2220 = vsub.s32 0, %v2219
    %v2221 = vrot.slane %v2161, %v2220
    %v2222 = vlaneseq
    %v2223 = vshrl.u32 %v2222, 7
    %v2224 = vsub.s32 0, %v2223
    %v2225 = vrot.slane %v2163, %v2224
    %v2226 = vlaneseq
    %v2227 = vshrl.u32 %v2226, 7
    %v2228 = vsub.s32 0, %v2227
    %v2229 = vrot.slane %v2165, %v2228
    %v2246 = vadd.f32 %v2050, %v2169
    %v2247 = vadd.f32 %v2050, %v2173
    %v2248 = vadd.f32 %v2050, %v2177
    %v2249 = vadd.f32 %v2050, %v2181
    %v2250 = vadd.f32 %v2050, %v2185
    %v2251 = vadd.f32 %v2050, %v2189
    %v2252 = vadd.f32 %v2050, %v2193
    %v2253 = vadd.f32 %v2050, %v2197
    %v2254 = vadd.f32 %v2050, %v2201
    %v2255 = vadd.f32 %v2050, %v2205
    %v2256 = vadd.f32 %v2050, %v2209
    %v2257 = vadd.f32 %v2050, %v2213
    %v2258 = vadd.f32 %v2050, %v2217
    %v2259 = vadd.f32 %v2050, %v2221
    %v2260 = vadd.f32 %v2050, %v2225
    %v2261 = vadd.f32 %v2050, %v2229
    %vm2262 = vcmask 388096
    %v2263 = vsel %vm2262, %v2246, -inf
    %2264 = vmax.xlane.f32.xlu0 %v2263
    %v2265 = vpop.xlane.xlu0 %2264
    %v2266 = vsel %vm2262, %v2247, -inf
    %2267 = vmax.xlane.f32.xlu0 %v2266
    %v2268 = vpop.xlane.xlu0 %2267
    %v2269 = vsel %vm2262, %v2248, -inf
    %2270 = vmax.xlane.f32.xlu0 %v2269
    %v2271 = vpop.xlane.xlu0 %2270
    %v2272 = vsel %vm2262, %v2249, -inf
    %2273 = vmax.xlane.f32.xlu0 %v2272
    %v2274 = vpop.xlane.xlu0 %2273
    %v2275 = vsel %vm2262, %v2250, -inf
    %2276 = vmax.xlane.f32.xlu0 %v2275
    %v2277 = vpop.xlane.xlu0 %2276
    %v2278 = vsel %vm2262, %v2251, -inf
    %2279 = vmax.xlane.f32.xlu0 %v2278
    %v2280 = vpop.xlane.xlu0 %2279
    %v2281 = vsel %vm2262, %v2252, -inf
    %2282 = vmax.xlane.f32.xlu0 %v2281
    %v2283 = vpop.xlane.xlu0 %2282
    %v2284 = vsel %vm2262, %v2253, -inf
    %2285 = vmax.xlane.f32.xlu0 %v2284
    %v2286 = vpop.xlane.xlu0 %2285
    %v2287 = vsel %vm2262, %v2254, -inf
    %2288 = vmax.xlane.f32.xlu0 %v2287
    %v2289 = vpop.xlane.xlu0 %2288
    %v2290 = vsel %vm2262, %v2255, -inf
    %2291 = vmax.xlane.f32.xlu0 %v2290
    %v2292 = vpop.xlane.xlu0 %2291
    %v2293 = vsel %vm2262, %v2256, -inf
    %2294 = vmax.xlane.f32.xlu0 %v2293
    %v2295 = vpop.xlane.xlu0 %2294
    %v2296 = vsel %vm2262, %v2257, -inf
    %2297 = vmax.xlane.f32.xlu0 %v2296
    %v2298 = vpop.xlane.xlu0 %2297
    %v2299 = vsel %vm2262, %v2258, -inf
    %2300 = vmax.xlane.f32.xlu0 %v2299
    %v2301 = vpop.xlane.xlu0 %2300
    %v2302 = vsel %vm2262, %v2259, -inf
    %2303 = vmax.xlane.f32.xlu0 %v2302
    %v2304 = vpop.xlane.xlu0 %2303
    %v2305 = vsel %vm2262, %v2260, -inf
    %2306 = vmax.xlane.f32.xlu0 %v2305
    %v2307 = vpop.xlane.xlu0 %2306
    %v2308 = vsel %vm2262, %v2261, -inf
    %2309 = vmax.xlane.f32.xlu0 %v2308
    %v2310 = vpop.xlane.xlu0 %2309
    %v2327 = vlaneseq
    %v2328 = vshrl.u32 %v2327, 7
    %v2329 = vsub.s32 %v176, %v2328
    %v2330 = vrot.slane %v2265, %v2329
    %v2331 = vlaneseq
    %v2332 = vshrl.u32 %v2331, 7
    %v2333 = vsub.s32 %v176, %v2332
    %v2334 = vrot.slane %v2268, %v2333
    %v2335 = vlaneseq
    %v2336 = vshrl.u32 %v2335, 7
    %v2337 = vsub.s32 %v176, %v2336
    %v2338 = vrot.slane %v2271, %v2337
    %v2339 = vlaneseq
    %v2340 = vshrl.u32 %v2339, 7
    %v2341 = vsub.s32 %v176, %v2340
    %v2342 = vrot.slane %v2274, %v2341
    %v2343 = vlaneseq
    %v2344 = vshrl.u32 %v2343, 7
    %v2345 = vsub.s32 %v176, %v2344
    %v2346 = vrot.slane %v2277, %v2345
    %v2347 = vlaneseq
    %v2348 = vshrl.u32 %v2347, 7
    %v2349 = vsub.s32 %v176, %v2348
    %v2350 = vrot.slane %v2280, %v2349
    %v2351 = vlaneseq
    %v2352 = vshrl.u32 %v2351, 7
    %v2353 = vsub.s32 %v176, %v2352
    %v2354 = vrot.slane %v2283, %v2353
    %v2355 = vlaneseq
    %v2356 = vshrl.u32 %v2355, 7
    %v2357 = vsub.s32 %v176, %v2356
    %v2358 = vrot.slane %v2286, %v2357
    %v2359 = vlaneseq
    %v2360 = vshrl.u32 %v2359, 7
    %v2361 = vsub.s32 %v176, %v2360
    %v2362 = vrot.slane %v2289, %v2361
    %v2363 = vlaneseq
    %v2364 = vshrl.u32 %v2363, 7
    %v2365 = vsub.s32 %v176, %v2364
    %v2366 = vrot.slane %v2292, %v2365
    %v2367 = vlaneseq
    %v2368 = vshrl.u32 %v2367, 7
    %v2369 = vsub.s32 %v176, %v2368
    %v2370 = vrot.slane %v2295, %v2369
    %v2371 = vlaneseq
    %v2372 = vshrl.u32 %v2371, 7
    %v2373 = vsub.s32 %v176, %v2372
    %v2374 = vrot.slane %v2298, %v2373
    %v2375 = vlaneseq
    %v2376 = vshrl.u32 %v2375, 7
    %v2377 = vsub.s32 %v176, %v2376
    %v2378 = vrot.slane %v2301, %v2377
    %v2379 = vlaneseq
    %v2380 = vshrl.u32 %v2379, 7
    %v2381 = vsub.s32 %v176, %v2380
    %v2382 = vrot.slane %v2304, %v2381
    %v2383 = vlaneseq
    %v2384 = vshrl.u32 %v2383, 7
    %v2385 = vsub.s32 %v176, %v2384
    %v2386 = vrot.slane %v2307, %v2385
    %v2387 = vlaneseq
    %v2388 = vshrl.u32 %v2387, 7
    %v2389 = vsub.s32 %v176, %v2388
    %v2390 = vrot.slane %v2310, %v2389
    %vm2391 = vcmask 1041409
    %v2392 = vsel %vm2391, %v2334, %v2330
    %vm2393 = vcmask 1042434
    %v2394 = vsel %vm2393, %v2338, %v2392
    %vm2395 = vcmask 1043459
    %v2396 = vsel %vm2395, %v2342, %v2394
    %vm2397 = vcmask 1044484
    %v2398 = vsel %vm2397, %v2346, %v2396
    %vm2399 = vcmask 1045509
    %v2400 = vsel %vm2399, %v2350, %v2398
    %vm2401 = vcmask 1046534
    %v2402 = vsel %vm2401, %v2354, %v2400
    %vm2403 = vcmask 1047559
    %v2404 = vsel %vm2403, %v2358, %v2402
    %v2405 = vsel %vm2391, %v2366, %v2362
    %v2406 = vsel %vm2393, %v2370, %v2405
    %v2407 = vsel %vm2395, %v2374, %v2406
    %v2408 = vsel %vm2397, %v2378, %v2407
    %v2409 = vsel %vm2399, %v2382, %v2408
    %v2410 = vsel %vm2401, %v2386, %v2409
    %v2411 = vsel %vm2403, %v2390, %v2410
    %2414 = vmatprep.subr.mxu0 0.0
    %2415 = vmatpush1.msra.mxu0 %v2404
    %2416 = vmatprep.subr.mxu0 0.0
    %2417 = vmatpush1.msra.mxu0 %v2411
    %2418 = vmatprep.subr.mxu0 0.0
    %2419 = vmatpush1.msra.mxu0 0.0
    %2420 = vmatprep.subr.mxu0 0.0
    %2421 = vmatpush1.msra.mxu0 0.0
    %2422 = vmatprep.subr.mxu0 0.0
    %2423 = vmatpush1.msra.mxu0 0.0
    %2424 = vmatprep.subr.mxu0 0.0
    %2425 = vmatpush1.msra.mxu0 0.0
    %2426 = vmatprep.subr.mxu0 0.0
    %2427 = vmatpush1.msra.mxu0 0.0
    %2428 = vmatprep.subr.mxu0 0.0
    %2429 = vmatpush1.msra.mxu0 0.0
    %2430 = vmatprep.subr.mxu0 0.0
    %2431 = vmatpush1.msra.mxu0 0.0
    %2432 = vmatprep.subr.mxu0 0.0
    %2433 = vmatpush1.msra.mxu0 0.0
    %2434 = vmatprep.subr.mxu0 0.0
    %2435 = vmatpush1.msra.mxu0 0.0
    %2436 = vmatprep.subr.mxu0 0.0
    %2437 = vmatpush1.msra.mxu0 0.0
    %2438 = vmatprep.subr.mxu0 0.0
    %2439 = vmatpush1.msra.mxu0 0.0
    %2440 = vmatprep.subr.mxu0 0.0
    %2441 = vmatpush1.msra.mxu0 0.0
    %2442 = vmatprep.subr.mxu0 0.0
    %2443 = vmatpush1.msra.mxu0 0.0
    %2444 = vmatprep.subr.mxu0 0.0
    %2445 = vmatpush1.msra.mxu0 0.0
    %2446 = vmatprep.subr.mxu0 0.0
    %2447 = vmatpush1.msra.mxu0 0.0
    %2448 = vmatprep.subr.mxu0 0.0
    %2449 = vmatpush1.msra.mxu0 0.0
    %2450 = vmatprep.subr.mxu0 0.0
    %2451 = vmatpush1.msra.mxu0 0.0
    %2452 = vmatprep.subr.mxu0 0.0
    %2453 = vmatpush1.msra.mxu0 0.0
    %2454 = vmatprep.subr.mxu0 0.0
    %2455 = vmatpush1.msra.mxu0 0.0
    %2456 = vmatprep.subr.mxu0 0.0
    %2457 = vmatpush1.msra.mxu0 0.0
    %2458 = vmatprep.subr.mxu0 0.0
    %2459 = vmatpush1.msra.mxu0 0.0
    %2460 = vmatprep.subr.mxu0 0.0
    %2461 = vmatpush1.msra.mxu0 0.0
    %2462 = vmatprep.subr.mxu0 0.0
    %2463 = vmatpush1.msra.mxu0 0.0
    %2464 = vmatprep.subr.mxu0 0.0
    %2465 = vmatpush1.msra.mxu0 0.0
    %2466 = vmatprep.subr.mxu0 0.0
    %2467 = vmatpush1.msra.mxu0 0.0
    %2468 = vmatprep.subr.mxu0 0.0
    %2469 = vmatpush1.msra.mxu0 0.0
    %2470 = vmatprep.subr.mxu0 0.0
    %2471 = vmatpush1.msra.mxu0 0.0
    %2472 = vmatprep.subr.mxu0 0.0
    %2473 = vmatpush1.msra.mxu0 0.0
    %2474 = vmatprep.subr.mxu0 0.0
    %2475 = vmatpush1.msra.mxu0 0.0
    %2476 = vmatprep.subr.mxu0 0.0
    %2477 = vmatpush1.msra.mxu0 0.0
    %2478 = vmatprep.mubr.f32.mxu0 0.0
    %2479 = vmatmul.mubr.f32.gmra.mrb[0].mxu0 %v495
    %v2480 = vpop.f32.mrb[0].mxu0
    %v2481 = vadd.f32 0.0, %v2480
    %v2482 = vpop.f32.mrb[0].mxu0
    %2483 = vmatprep.mubr.f32.mxu0 0.0
    %2484 = vmatmul.mubr.f32.gmra.mrb[0].mxu0 %v498
    %v2485 = vpop.f32.mrb[0].mxu0
    %v2486 = vadd.f32 0.0, %v2485
    %v2487 = vpop.f32.mrb[0].mxu0
    %2488 = vmatprep.mubr.f32.mxu0 0.0
    %2489 = vmatmul.mubr.f32.gmra.mrb[0].mxu0 %v501
    %v2490 = vpop.f32.mrb[0].mxu0
    %v2491 = vadd.f32 0.0, %v2490
    %v2492 = vpop.f32.mrb[0].mxu0
    %2493 = vmatprep.mubr.f32.mxu0 0.0
    %2494 = vmatmul.mubr.f32.gmra.mrb[0].mxu0 %v504
    %v2495 = vpop.f32.mrb[0].mxu0
    %v2496 = vadd.f32 0.0, %v2495
    %v2497 = vpop.f32.mrb[0].mxu0
    %2498 = vmatprep.mubr.f32.mxu0 0.0
    %2499 = vmatmul.mubr.f32.gmra.mrb[0].mxu0 %v507
    %v2500 = vpop.f32.mrb[0].mxu0
    %v2501 = vadd.f32 0.0, %v2500
    %v2502 = vpop.f32.mrb[0].mxu0
    %2503 = vmatprep.mubr.f32.mxu0 0.0
    %2504 = vmatmul.mubr.f32.gmra.mrb[0].mxu0 %v510
    %v2505 = vpop.f32.mrb[0].mxu0
    %v2506 = vadd.f32 0.0, %v2505
    %v2507 = vpop.f32.mrb[0].mxu0
    %2508 = vdwg.mxu0
    %v2509 = vsub.f32 %v2002, %v2481
    %v2510 = vsub.f32 %v2007, %v2486
    %v2511 = vsub.f32 %v2012, %v2491
    %v2512 = vsub.f32 %v2017, %v2496
    %v2513 = vsub.f32 %v2022, %v2501
    %v2514 = vsub.f32 %v2027, %v2506
    %v2515 = vmul.f32 %v2509, 1.442695
    %v2516 = vpow.pop %v2515
    %v2517 = vmul.f32 %v2510, 1.442695
    %v2518 = vpow.pop %v2517
    %v2519 = vmul.f32 %v2511, 1.442695
    %v2520 = vpow.pop %v2519
    %v2521 = vmul.f32 %v2512, 1.442695
    %v2522 = vpow.pop %v2521
    %v2523 = vmul.f32 %v2513, 1.442695
    %v2524 = vpow.pop %v2523
    %v2525 = vmul.f32 %v2514, 1.442695
    %v2526 = vpow.pop %v2525
    %vm2527 = vcmask 392192
    %v2529 = vsel %vm2527, %v173, 0
    %v2532 = vsel %vm2527, %v174, 0
    %2534 = vmatprep.subr.mxu0 0.0
    %2535 = vmatpush1.msra.mxu0 %v2516
    %2536 = vmatprep.subr.mxu0 0.0
    %2537 = vmatpush1.msra.mxu0 %v2518
    %2538 = vmatprep.subr.mxu0 0.0
    %2539 = vmatpush1.msra.mxu0 %v2520
    %2540 = vmatprep.subr.mxu0 0.0
    %2541 = vmatpush1.msra.mxu0 %v2522
    %2542 = vmatprep.subr.mxu0 0.0
    %2543 = vmatpush1.msra.mxu0 %v2524
    %2544 = vmatprep.subr.mxu0 0.0
    %2545 = vmatpush1.msra.mxu0 %v2526
    %2546 = vmatprep.subr.mxu0 0.0
    %2547 = vmatpush1.msra.mxu0 0.0
    %2548 = vmatprep.subr.mxu0 0.0
    %2549 = vmatpush1.msra.mxu0 0.0
    %2550 = vmatprep.subr.mxu0 0.0
    %2551 = vmatpush1.msra.mxu0 0.0
    %2552 = vmatprep.subr.mxu0 0.0
    %2553 = vmatpush1.msra.mxu0 0.0
    %2554 = vmatprep.subr.mxu0 0.0
    %2555 = vmatpush1.msra.mxu0 0.0
    %2556 = vmatprep.subr.mxu0 0.0
    %2557 = vmatpush1.msra.mxu0 0.0
    %2558 = vmatprep.subr.mxu0 0.0
    %2559 = vmatpush1.msra.mxu0 0.0
    %2560 = vmatprep.subr.mxu0 0.0
    %2561 = vmatpush1.msra.mxu0 0.0
    %2562 = vmatprep.subr.mxu0 0.0
    %2563 = vmatpush1.msra.mxu0 0.0
    %2564 = vmatprep.subr.mxu0 0.0
    %2565 = vmatpush1.msra.mxu0 0.0
    %2566 = vmatprep.subr.mxu0 0.0
    %2567 = vmatpush1.msra.mxu0 0.0
    %2568 = vmatprep.subr.mxu0 0.0
    %2569 = vmatpush1.msra.mxu0 0.0
    %2570 = vmatprep.subr.mxu0 0.0
    %2571 = vmatpush1.msra.mxu0 0.0
    %2572 = vmatprep.subr.mxu0 0.0
    %2573 = vmatpush1.msra.mxu0 0.0
    %2574 = vmatprep.subr.mxu0 0.0
    %2575 = vmatpush1.msra.mxu0 0.0
    %2576 = vmatprep.subr.mxu0 0.0
    %2577 = vmatpush1.msra.mxu0 0.0
    %2578 = vmatprep.subr.mxu0 0.0
    %2579 = vmatpush1.msra.mxu0 0.0
    %2580 = vmatprep.subr.mxu0 0.0
    %2581 = vmatpush1.msra.mxu0 0.0
    %2582 = vmatprep.subr.mxu0 0.0
    %2583 = vmatpush1.msra.mxu0 0.0
    %2584 = vmatprep.subr.mxu0 0.0
    %2585 = vmatpush1.msra.mxu0 0.0
    %2586 = vmatprep.subr.mxu0 0.0
    %2587 = vmatpush1.msra.mxu0 0.0
    %2588 = vmatprep.subr.mxu0 0.0
    %2589 = vmatpush1.msra.mxu0 0.0
    %2590 = vmatprep.subr.mxu0 0.0
    %2591 = vmatpush1.msra.mxu0 0.0
    %2592 = vmatprep.subr.mxu0 0.0
    %2593 = vmatpush1.msra.mxu0 0.0
    %2594 = vmatprep.subr.mxu0 0.0
    %2595 = vmatpush1.msra.mxu0 0.0
    %2596 = vmatprep.subr.mxu0 0.0
    %2597 = vmatpush1.msra.mxu0 0.0
    %2598 = vmatprep.mubr.f32.mxu0 0.0
    %2599 = vmatmul.mubr.f32.gmra.mrb[0].mxu0 %v2529
    %v2600 = vpop.f32.mrb[0].mxu0
    %v2601 = vadd.f32 0.0, %v2600
    %v2602 = vpop.f32.mrb[0].mxu0
    %2603 = vmatprep.mubr.f32.mxu0 0.0
    %2604 = vmatmul.mubr.f32.gmra.mrb[0].mxu0 %v2532
    %v2605 = vpop.f32.mrb[0].mxu0
    %v2606 = vadd.f32 0.0, %v2605
    %v2607 = vpop.f32.mrb[0].mxu0
    %2608 = vdwg.mxu0
    %2609 = vmatprep.subr.mxu0 0.0
    %2610 = vmatpush1.msra.mxu0 %v2601
    %2611 = vmatprep.subr.mxu0 0.0
    %2612 = vmatpush1.msra.mxu0 %v2606
    %2613 = vmatprep.subr.mxu0 0.0
    %2614 = vmatpush1.msra.mxu0 0.0
    %2615 = vmatprep.subr.mxu0 0.0
    %2616 = vmatpush1.msra.mxu0 0.0
    %2617 = vmatprep.subr.mxu0 0.0
    %2618 = vmatpush1.msra.mxu0 0.0
    %2619 = vmatprep.subr.mxu0 0.0
    %2620 = vmatpush1.msra.mxu0 0.0
    %2621 = vmatprep.subr.mxu0 0.0
    %2622 = vmatpush1.msra.mxu0 0.0
    %2623 = vmatprep.subr.mxu0 0.0
    %2624 = vmatpush1.msra.mxu0 0.0
    %2625 = vmatprep.subr.mxu0 0.0
    %2626 = vmatpush1.msra.mxu0 0.0
    %2627 = vmatprep.subr.mxu0 0.0
    %2628 = vmatpush1.msra.mxu0 0.0
    %2629 = vmatprep.subr.mxu0 0.0
    %2630 = vmatpush1.msra.mxu0 0.0
    %2631 = vmatprep.subr.mxu0 0.0
    %2632 = vmatpush1.msra.mxu0 0.0
    %2633 = vmatprep.subr.mxu0 0.0
    %2634 = vmatpush1.msra.mxu0 0.0
    %2635 = vmatprep.subr.mxu0 0.0
    %2636 = vmatpush1.msra.mxu0 0.0
    %2637 = vmatprep.subr.mxu0 0.0
    %2638 = vmatpush1.msra.mxu0 0.0
    %2639 = vmatprep.subr.mxu0 0.0
    %2640 = vmatpush1.msra.mxu0 0.0
    %2641 = vmatprep.subr.mxu0 0.0
    %2642 = vmatpush1.msra.mxu0 0.0
    %2643 = vmatprep.subr.mxu0 0.0
    %2644 = vmatpush1.msra.mxu0 0.0
    %2645 = vmatprep.subr.mxu0 0.0
    %2646 = vmatpush1.msra.mxu0 0.0
    %2647 = vmatprep.subr.mxu0 0.0
    %2648 = vmatpush1.msra.mxu0 0.0
    %2649 = vmatprep.subr.mxu0 0.0
    %2650 = vmatpush1.msra.mxu0 0.0
    %2651 = vmatprep.subr.mxu0 0.0
    %2652 = vmatpush1.msra.mxu0 0.0
    %2653 = vmatprep.subr.mxu0 0.0
    %2654 = vmatpush1.msra.mxu0 0.0
    %2655 = vmatprep.subr.mxu0 0.0
    %2656 = vmatpush1.msra.mxu0 0.0
    %2657 = vmatprep.subr.mxu0 0.0
    %2658 = vmatpush1.msra.mxu0 0.0
    %2659 = vmatprep.subr.mxu0 0.0
    %2660 = vmatpush1.msra.mxu0 0.0
    %2661 = vmatprep.subr.mxu0 0.0
    %2662 = vmatpush1.msra.mxu0 0.0
    %2663 = vmatprep.subr.mxu0 0.0
    %2664 = vmatpush1.msra.mxu0 0.0
    %2665 = vmatprep.subr.mxu0 0.0
    %2666 = vmatpush1.msra.mxu0 0.0
    %2667 = vmatprep.subr.mxu0 0.0
    %2668 = vmatpush1.msra.mxu0 0.0
    %2669 = vmatprep.subr.mxu0 0.0
    %2670 = vmatpush1.msra.mxu0 0.0
    %2671 = vmatprep.subr.mxu0 0.0
    %2672 = vmatpush1.msra.mxu0 0.0
    %2673 = vmatprep.mubr.f32.mxu0 0.0
    %2674 = vmatmul.mubr.f32.gmra.mrb[0].mxu0 %v495
    %v2675 = vpop.f32.mrb[0].mxu0
    %v2676 = vadd.f32 0.0, %v2675
    %v2677 = vpop.f32.mrb[0].mxu0
    %2678 = vmatprep.mubr.f32.mxu0 0.0
    %2679 = vmatmul.mubr.f32.gmra.mrb[0].mxu0 %v498
    %v2680 = vpop.f32.mrb[0].mxu0
    %v2681 = vadd.f32 0.0, %v2680
    %v2682 = vpop.f32.mrb[0].mxu0
    %2683 = vmatprep.mubr.f32.mxu0 0.0
    %2684 = vmatmul.mubr.f32.gmra.mrb[0].mxu0 %v501
    %v2685 = vpop.f32.mrb[0].mxu0
    %v2686 = vadd.f32 0.0, %v2685
    %v2687 = vpop.f32.mrb[0].mxu0
    %2688 = vmatprep.mubr.f32.mxu0 0.0
    %2689 = vmatmul.mubr.f32.gmra.mrb[0].mxu0 %v504
    %v2690 = vpop.f32.mrb[0].mxu0
    %v2691 = vadd.f32 0.0, %v2690
    %v2692 = vpop.f32.mrb[0].mxu0
    %2693 = vmatprep.mubr.f32.mxu0 0.0
    %2694 = vmatmul.mubr.f32.gmra.mrb[0].mxu0 %v507
    %v2695 = vpop.f32.mrb[0].mxu0
    %v2696 = vadd.f32 0.0, %v2695
    %v2697 = vpop.f32.mrb[0].mxu0
    %2698 = vmatprep.mubr.f32.mxu0 0.0
    %2699 = vmatmul.mubr.f32.gmra.mrb[0].mxu0 %v510
    %v2700 = vpop.f32.mrb[0].mxu0
    %v2701 = vadd.f32 0.0, %v2700
    %v2702 = vpop.f32.mrb[0].mxu0
    %2703 = vdwg.mxu0
    %v2704 = vrcp.pop %v2676
    %v2705 = vrcp.pop %v2681
    %v2706 = vrcp.pop %v2686
    %v2707 = vrcp.pop %v2691
    %v2708 = vrcp.pop %v2696
    %v2709 = vrcp.pop %v2701
    %v2710 = vmul.f32 %v2516, %v2704
    %v2711 = vmul.f32 %v2518, %v2705
    %v2712 = vmul.f32 %v2520, %v2706
    %v2713 = vmul.f32 %v2522, %v2707
    %v2714 = vmul.f32 %v2524, %v2708
    %v2715 = vmul.f32 %v2526, %v2709
    %v2716 = vld [vmem:[%s55] sm:$0xf]
    %v2718 = vsel %vm723, %v2710, 0
    %v2721 = vsel %vm723, %v2711, 0
    %v2724 = vsel %vm723, %v2712, 0
    %v2727 = vsel %vm723, %v2713, 0
    %v2730 = vsel %vm723, %v2714, 0
    %v2733 = vsel %vm723, %v2715, 0
    %v2736 = vsel %vm742, %v2716, 0
    %2738 = vmatprep.subr.mxu0 0.0
    %2739 = vmatpush1.msra.mxu0 %v2736
    %2740 = vmatprep.subr.mxu0 0.0
    %2741 = vmatpush1.msra.mxu0 0.0
    %2742 = vmatprep.subr.mxu0 0.0
    %2743 = vmatpush1.msra.mxu0 0.0
    %2744 = vmatprep.subr.mxu0 0.0
    %2745 = vmatpush1.msra.mxu0 0.0
    %2746 = vmatprep.subr.mxu0 0.0
    %2747 = vmatpush1.msra.mxu0 0.0
    %2748 = vmatprep.subr.mxu0 0.0
    %2749 = vmatpush1.msra.mxu0 0.0
    %2750 = vmatprep.subr.mxu0 0.0
    %2751 = vmatpush1.msra.mxu0 0.0
    %2752 = vmatprep.subr.mxu0 0.0
    %2753 = vmatpush1.msra.mxu0 0.0
    %2754 = vmatprep.subr.mxu0 0.0
    %2755 = vmatpush1.msra.mxu0 0.0
    %2756 = vmatprep.subr.mxu0 0.0
    %2757 = vmatpush1.msra.mxu0 0.0
    %2758 = vmatprep.subr.mxu0 0.0
    %2759 = vmatpush1.msra.mxu0 0.0
    %2760 = vmatprep.subr.mxu0 0.0
    %2761 = vmatpush1.msra.mxu0 0.0
    %2762 = vmatprep.subr.mxu0 0.0
    %2763 = vmatpush1.msra.mxu0 0.0
    %2764 = vmatprep.subr.mxu0 0.0
    %2765 = vmatpush1.msra.mxu0 0.0
    %2766 = vmatprep.subr.mxu0 0.0
    %2767 = vmatpush1.msra.mxu0 0.0
    %2768 = vmatprep.subr.mxu0 0.0
    %2769 = vmatpush1.msra.mxu0 0.0
    %2770 = vmatprep.subr.mxu0 0.0
    %2771 = vmatpush1.msra.mxu0 0.0
    %2772 = vmatprep.subr.mxu0 0.0
    %2773 = vmatpush1.msra.mxu0 0.0
    %2774 = vmatprep.subr.mxu0 0.0
    %2775 = vmatpush1.msra.mxu0 0.0
    %2776 = vmatprep.subr.mxu0 0.0
    %2777 = vmatpush1.msra.mxu0 0.0
    %2778 = vmatprep.subr.mxu0 0.0
    %2779 = vmatpush1.msra.mxu0 0.0
    %2780 = vmatprep.subr.mxu0 0.0
    %2781 = vmatpush1.msra.mxu0 0.0
    %2782 = vmatprep.subr.mxu0 0.0
    %2783 = vmatpush1.msra.mxu0 0.0
    %2784 = vmatprep.subr.mxu0 0.0
    %2785 = vmatpush1.msra.mxu0 0.0
    %2786 = vmatprep.subr.mxu0 0.0
    %2787 = vmatpush1.msra.mxu0 0.0
    %2788 = vmatprep.subr.mxu0 0.0
    %2789 = vmatpush1.msra.mxu0 0.0
    %2790 = vmatprep.subr.mxu0 0.0
    %2791 = vmatpush1.msra.mxu0 0.0
    %2792 = vmatprep.subr.mxu0 0.0
    %2793 = vmatpush1.msra.mxu0 0.0
    %2794 = vmatprep.subr.mxu0 0.0
    %2795 = vmatpush1.msra.mxu0 0.0
    %2796 = vmatprep.subr.mxu0 0.0
    %2797 = vmatpush1.msra.mxu0 0.0
    %2798 = vmatprep.subr.mxu0 0.0
    %2799 = vmatpush1.msra.mxu0 0.0
    %2800 = vmatprep.subr.mxu0 0.0
    %2801 = vmatpush1.msra.mxu0 0.0
    %2802 = vmatprep.mubr.f32.mxu0 0.0
    %2803 = vmatmul.mubr.f32.gmra.mrb[0].mxu0 %v2718
    %v2804 = vpop.f32.mrb[0].mxu0
    %v2805 = vadd.f32 0.0, %v2804
    %v2806 = vpop.f32.mrb[0].mxu0
    %2807 = vmatprep.mubr.f32.mxu0 0.0
    %2808 = vmatmul.mubr.f32.gmra.mrb[0].mxu0 %v2721
    %v2809 = vpop.f32.mrb[0].mxu0
    %v2810 = vadd.f32 0.0, %v2809
    %v2811 = vpop.f32.mrb[0].mxu0
    %2812 = vmatprep.mubr.f32.mxu0 0.0
    %2813 = vmatmul.mubr.f32.gmra.mrb[0].mxu0 %v2724
    %v2814 = vpop.f32.mrb[0].mxu0
    %v2815 = vadd.f32 0.0, %v2814
    %v2816 = vpop.f32.mrb[0].mxu0
    %2817 = vmatprep.mubr.f32.mxu0 0.0
    %2818 = vmatmul.mubr.f32.gmra.mrb[0].mxu0 %v2727
    %v2819 = vpop.f32.mrb[0].mxu0
    %v2820 = vadd.f32 0.0, %v2819
    %v2821 = vpop.f32.mrb[0].mxu0
    %2822 = vmatprep.mubr.f32.mxu0 0.0
    %2823 = vmatmul.mubr.f32.gmra.mrb[0].mxu0 %v2730
    %v2824 = vpop.f32.mrb[0].mxu0
    %v2825 = vadd.f32 0.0, %v2824
    %v2826 = vpop.f32.mrb[0].mxu0
    %2827 = vmatprep.mubr.f32.mxu0 0.0
    %2828 = vmatmul.mubr.f32.gmra.mrb[0].mxu0 %v2733
    %v2829 = vpop.f32.mrb[0].mxu0
    %v2830 = vadd.f32 0.0, %v2829
    %v2831 = vpop.f32.mrb[0].mxu0
    %2832 = vdwg.mxu0
    %v2833 = vmul.f32 %v2805, %v1901
    %v2834 = vmul.f32 %v2810, %v1902
    %v2835 = vmul.f32 %v2815, %v1903
    %v2836 = vmul.f32 %v2820, %v1904
    %v2837 = vmul.f32 %v2825, %v1905
    %v2838 = vmul.f32 %v2830, %v1906
    %2839 = vmatprep.subr.mxu0 0.0
    %2840 = vmatpush1.msra.mxu0 %v2833
    %2841 = vmatprep.subr.mxu0 0.0
    %2842 = vmatpush1.msra.mxu0 %v2834
    %2843 = vmatprep.subr.mxu0 0.0
    %2844 = vmatpush1.msra.mxu0 %v2835
    %2845 = vmatprep.subr.mxu0 0.0
    %2846 = vmatpush1.msra.mxu0 %v2836
    %2847 = vmatprep.subr.mxu0 0.0
    %2848 = vmatpush1.msra.mxu0 %v2837
    %2849 = vmatprep.subr.mxu0 0.0
    %2850 = vmatpush1.msra.mxu0 %v2838
    %2851 = vmatprep.subr.mxu0 0.0
    %2852 = vmatpush1.msra.mxu0 0.0
    %2853 = vmatprep.subr.mxu0 0.0
    %2854 = vmatpush1.msra.mxu0 0.0
    %2855 = vmatprep.subr.mxu0 0.0
    %2856 = vmatpush1.msra.mxu0 0.0
    %2857 = vmatprep.subr.mxu0 0.0
    %2858 = vmatpush1.msra.mxu0 0.0
    %2859 = vmatprep.subr.mxu0 0.0
    %2860 = vmatpush1.msra.mxu0 0.0
    %2861 = vmatprep.subr.mxu0 0.0
    %2862 = vmatpush1.msra.mxu0 0.0
    %2863 = vmatprep.subr.mxu0 0.0
    %2864 = vmatpush1.msra.mxu0 0.0
    %2865 = vmatprep.subr.mxu0 0.0
    %2866 = vmatpush1.msra.mxu0 0.0
    %2867 = vmatprep.subr.mxu0 0.0
    %2868 = vmatpush1.msra.mxu0 0.0
    %2869 = vmatprep.subr.mxu0 0.0
    %2870 = vmatpush1.msra.mxu0 0.0
    %2871 = vmatprep.subr.mxu0 0.0
    %2872 = vmatpush1.msra.mxu0 0.0
    %2873 = vmatprep.subr.mxu0 0.0
    %2874 = vmatpush1.msra.mxu0 0.0
    %2875 = vmatprep.subr.mxu0 0.0
    %2876 = vmatpush1.msra.mxu0 0.0
    %2877 = vmatprep.subr.mxu0 0.0
    %2878 = vmatpush1.msra.mxu0 0.0
    %2879 = vmatprep.subr.mxu0 0.0
    %2880 = vmatpush1.msra.mxu0 0.0
    %2881 = vmatprep.subr.mxu0 0.0
    %2882 = vmatpush1.msra.mxu0 0.0
    %2883 = vmatprep.subr.mxu0 0.0
    %2884 = vmatpush1.msra.mxu0 0.0
    %2885 = vmatprep.subr.mxu0 0.0
    %2886 = vmatpush1.msra.mxu0 0.0
    %2887 = vmatprep.subr.mxu0 0.0
    %2888 = vmatpush1.msra.mxu0 0.0
    %2889 = vmatprep.subr.mxu0 0.0
    %2890 = vmatpush1.msra.mxu0 0.0
    %2891 = vmatprep.subr.mxu0 0.0
    %2892 = vmatpush1.msra.mxu0 0.0
    %2893 = vmatprep.subr.mxu0 0.0
    %2894 = vmatpush1.msra.mxu0 0.0
    %2895 = vmatprep.subr.mxu0 0.0
    %2896 = vmatpush1.msra.mxu0 0.0
    %2897 = vmatprep.subr.mxu0 0.0
    %2898 = vmatpush1.msra.mxu0 0.0
    %2899 = vmatprep.subr.mxu0 0.0
    %2900 = vmatpush1.msra.mxu0 0.0
    %2901 = vmatprep.subr.mxu0 0.0
    %2902 = vmatpush1.msra.mxu0 0.0
    %2903 = vmatprep.mubr.f32.mxu0 0.0
    %2904 = vmatmul.mubr.f32.gmra.mrb[0].mxu0 %v2529
    %v2905 = vpop.f32.mrb[0].mxu0
    %v2906 = vadd.f32 0.0, %v2905
    %v2907 = vpop.f32.mrb[0].mxu0
    %2908 = vmatprep.mubr.f32.mxu0 0.0
    %2909 = vmatmul.mubr.f32.gmra.mrb[0].mxu0 %v2532
    %v2910 = vpop.f32.mrb[0].mxu0
    %v2911 = vadd.f32 0.0, %v2910
    %v2912 = vpop.f32.mrb[0].mxu0
    %2913 = vdwg.mxu0
    %v2914 = vld [vmem:[%s57] sm:$0xff]
    %v2915 = vld [vmem:[%s57 + $0x8] sm:$0xff]
    %v2916 = vld [vmem:[%s57 + $0x10] sm:$0xff]
    %v2917 = vld [vmem:[%s57 + $0x18] sm:$0xff]
    %v2918 = vld [vmem:[%s59] sm:$0xff]
    %v2919 = vld [vmem:[%s59 + $0x8] sm:$0xff]
    %v2920 = vld [vmem:[%s59 + $0x10] sm:$0xff]
    %v2921 = vld [vmem:[%s59 + $0x18] sm:$0xff]
    %2922 = vmatprep.subr.mxu0 0.0
    %2923 = vmatpush1.msra.mxu0 %v2918
    %2924 = vmatprep.subr.mxu0 0.0
    %2925 = vmatpush1.msra.mxu0 %v2919
    %2926 = vmatprep.subr.mxu0 0.0
    %2927 = vmatpush1.msra.mxu0 %v2920
    %2928 = vmatprep.subr.mxu0 0.0
    %2929 = vmatpush1.msra.mxu0 %v2921
    %2930 = vmatprep.subr.mxu0 0.0
    %2931 = vmatpush1.msra.mxu0 0.0
    %2932 = vmatprep.subr.mxu0 0.0
    %2933 = vmatpush1.msra.mxu0 0.0
    %2934 = vmatprep.subr.mxu0 0.0
    %2935 = vmatpush1.msra.mxu0 0.0
    %2936 = vmatprep.subr.mxu0 0.0
    %2937 = vmatpush1.msra.mxu0 0.0
    %2938 = vmatprep.subr.mxu0 0.0
    %2939 = vmatpush1.msra.mxu0 0.0
    %2940 = vmatprep.subr.mxu0 0.0
    %2941 = vmatpush1.msra.mxu0 0.0
    %2942 = vmatprep.subr.mxu0 0.0
    %2943 = vmatpush1.msra.mxu0 0.0
    %2944 = vmatprep.subr.mxu0 0.0
    %2945 = vmatpush1.msra.mxu0 0.0
    %2946 = vmatprep.subr.mxu0 0.0
    %2947 = vmatpush1.msra.mxu0 0.0
    %2948 = vmatprep.subr.mxu0 0.0
    %2949 = vmatpush1.msra.mxu0 0.0
    %2950 = vmatprep.subr.mxu0 0.0
    %2951 = vmatpush1.msra.mxu0 0.0
    %2952 = vmatprep.subr.mxu0 0.0
    %2953 = vmatpush1.msra.mxu0 0.0
    %2954 = vmatprep.subr.mxu0 0.0
    %2955 = vmatpush1.msra.mxu0 0.0
    %2956 = vmatprep.subr.mxu0 0.0
    %2957 = vmatpush1.msra.mxu0 0.0
    %2958 = vmatprep.subr.mxu0 0.0
    %2959 = vmatpush1.msra.mxu0 0.0
    %2960 = vmatprep.subr.mxu0 0.0
    %2961 = vmatpush1.msra.mxu0 0.0
    %2962 = vmatprep.subr.mxu0 0.0
    %2963 = vmatpush1.msra.mxu0 0.0
    %2964 = vmatprep.subr.mxu0 0.0
    %2965 = vmatpush1.msra.mxu0 0.0
    %2966 = vmatprep.subr.mxu0 0.0
    %2967 = vmatpush1.msra.mxu0 0.0
    %2968 = vmatprep.subr.mxu0 0.0
    %2969 = vmatpush1.msra.mxu0 0.0
    %2970 = vmatprep.subr.mxu0 0.0
    %2971 = vmatpush1.msra.mxu0 0.0
    %2972 = vmatprep.subr.mxu0 0.0
    %2973 = vmatpush1.msra.mxu0 0.0
    %2974 = vmatprep.subr.mxu0 0.0
    %2975 = vmatpush1.msra.mxu0 0.0
    %2976 = vmatprep.subr.mxu0 0.0
    %2977 = vmatpush1.msra.mxu0 0.0
    %2978 = vmatprep.subr.mxu0 0.0
    %2979 = vmatpush1.msra.mxu0 0.0
    %2980 = vmatprep.subr.mxu0 0.0
    %2981 = vmatpush1.msra.mxu0 0.0
    %2982 = vmatprep.subr.mxu0 0.0
    %2983 = vmatpush1.msra.mxu0 0.0
    %2984 = vmatprep.subr.mxu0 0.0
    %2985 = vmatpush1.msra.mxu0 0.0
    %2986 = vmatprep.mubr.f32.mxu0 0.0
    %2987 = vmatmul.mubr.f32.gmra.mrb[0].mxu0 %v274
    %v2988 = vpop.f32.mrb[0].mxu0
    %v2989 = vadd.f32 0.0, %v2988
    %v2990 = vpop.f32.mrb[0].mxu0
    %2991 = vmatprep.mubr.f32.mxu0 0.0
    %2992 = vmatmul.mubr.f32.gmra.mrb[0].mxu0 %v277
    %v2993 = vpop.f32.mrb[0].mxu0
    %v2994 = vadd.f32 0.0, %v2993
    %v2995 = vpop.f32.mrb[0].mxu0
    %2996 = vdwg.mxu0
    %v2998 = vsel %vm272, %v2906, 0
    %v3001 = vsel %vm272, %v2911, 0
    %3003 = vmatprep.subr.mxu0 0.0
    %3004 = vmatpush1.msra.mxu0 %v2914
    %3005 = vmatprep.subr.mxu0 0.0
    %3006 = vmatpush1.msra.mxu0 %v2915
    %3007 = vmatprep.subr.mxu0 0.0
    %3008 = vmatpush1.msra.mxu0 %v2916
    %3009 = vmatprep.subr.mxu0 0.0
    %3010 = vmatpush1.msra.mxu0 %v2917
    %3011 = vmatprep.subr.mxu0 0.0
    %3012 = vmatpush1.msra.mxu0 0.0
    %3013 = vmatprep.subr.mxu0 0.0
    %3014 = vmatpush1.msra.mxu0 0.0
    %3015 = vmatprep.subr.mxu0 0.0
    %3016 = vmatpush1.msra.mxu0 0.0
    %3017 = vmatprep.subr.mxu0 0.0
    %3018 = vmatpush1.msra.mxu0 0.0
    %3019 = vmatprep.subr.mxu0 0.0
    %3020 = vmatpush1.msra.mxu0 0.0
    %3021 = vmatprep.subr.mxu0 0.0
    %3022 = vmatpush1.msra.mxu0 0.0
    %3023 = vmatprep.subr.mxu0 0.0
    %3024 = vmatpush1.msra.mxu0 0.0
    %3025 = vmatprep.subr.mxu0 0.0
    %3026 = vmatpush1.msra.mxu0 0.0
    %3027 = vmatprep.subr.mxu0 0.0
    %3028 = vmatpush1.msra.mxu0 0.0
    %3029 = vmatprep.subr.mxu0 0.0
    %3030 = vmatpush1.msra.mxu0 0.0
    %3031 = vmatprep.subr.mxu0 0.0
    %3032 = vmatpush1.msra.mxu0 0.0
    %3033 = vmatprep.subr.mxu0 0.0
    %3034 = vmatpush1.msra.mxu0 0.0
    %3035 = vmatprep.subr.mxu0 0.0
    %3036 = vmatpush1.msra.mxu0 0.0
    %3037 = vmatprep.subr.mxu0 0.0
    %3038 = vmatpush1.msra.mxu0 0.0
    %3039 = vmatprep.subr.mxu0 0.0
    %3040 = vmatpush1.msra.mxu0 0.0
    %3041 = vmatprep.subr.mxu0 0.0
    %3042 = vmatpush1.msra.mxu0 0.0
    %3043 = vmatprep.subr.mxu0 0.0
    %3044 = vmatpush1.msra.mxu0 0.0
    %3045 = vmatprep.subr.mxu0 0.0
    %3046 = vmatpush1.msra.mxu0 0.0
    %3047 = vmatprep.subr.mxu0 0.0
    %3048 = vmatpush1.msra.mxu0 0.0
    %3049 = vmatprep.subr.mxu0 0.0
    %3050 = vmatpush1.msra.mxu0 0.0
    %3051 = vmatprep.subr.mxu0 0.0
    %3052 = vmatpush1.msra.mxu0 0.0
    %3053 = vmatprep.subr.mxu0 0.0
    %3054 = vmatpush1.msra.mxu0 0.0
    %3055 = vmatprep.subr.mxu0 0.0
    %3056 = vmatpush1.msra.mxu0 0.0
    %3057 = vmatprep.subr.mxu0 0.0
    %3058 = vmatpush1.msra.mxu0 0.0
    %3059 = vmatprep.subr.mxu0 0.0
    %3060 = vmatpush1.msra.mxu0 0.0
    %3061 = vmatprep.subr.mxu0 0.0
    %3062 = vmatpush1.msra.mxu0 0.0
    %3063 = vmatprep.subr.mxu0 0.0
    %3064 = vmatpush1.msra.mxu0 0.0
    %3065 = vmatprep.subr.mxu0 0.0
    %3066 = vmatpush1.msra.mxu0 0.0
    %3067 = vmatprep.mubr.f32.mxu0 0.0
    %3068 = vmatmul.mubr.f32.gmra.mrb[0].mxu0 %v2998
    %v3069 = vpop.f32.mrb[0].mxu0
    %v3070 = vadd.f32 %v2989, %v3069
    %v3071 = vpop.f32.mrb[0].mxu0
    %3072 = vmatprep.mubr.f32.mxu0 0.0
    %3073 = vmatmul.mubr.f32.gmra.mrb[0].mxu0 %v3001
    %v3074 = vpop.f32.mrb[0].mxu0
    %v3075 = vadd.f32 %v2994, %v3074
    %v3076 = vpop.f32.mrb[0].mxu0
    %3077 = vdwg.mxu0
    %v3078 = vld [vmem:[%s61] sm:$0x1]
    %v3080 = vlaneseq
    %v3081 = vshrl.u32 %v3080, 7
    %v3082 = vsub.s32 0, %v3081
    %v3083 = vrot.slane %v3078, %v3082
    %v3085 = vadd.f32 %v3070, %v3083
    %v3086 = vadd.f32 %v3075, %v3083
    %v3087 = vld [vmem:[%s63] sm:$0x1]
    %v3088 = vld [vmem:[%s65] sm:$0x1]
    %v3089 = vsel %vm272, %v3085, 0.0
    %3090 = vadd.xlane.f32.xlu0 %v3089
    %v3091 = vpop.xlane.xlu0 %3090
    %v3092 = vsel %vm272, %v3086, 0.0
    %3093 = vadd.xlane.f32.xlu0 %v3092
    %v3094 = vpop.xlane.xlu0 %3093
    %v3095 = vmul.f32 %v3091, %v362
    %v3096 = vmul.f32 %v3094, %v362
    %v3097 = vsub.f32 %v3085, %v3095
    %v3098 = vsub.f32 %v3086, %v3096
    %v3099 = vmul.f32 %v3097, %v3097
    %v3100 = vmul.f32 %v3098, %v3098
    %v3101 = vsel %vm272, %v3099, 0.0
    %3102 = vadd.xlane.f32.xlu0 %v3101
    %v3103 = vpop.xlane.xlu0 %3102
    %v3104 = vsel %vm272, %v3100, 0.0
    %3105 = vadd.xlane.f32.xlu0 %v3104
    %v3106 = vpop.xlane.xlu0 %3105
    %v3107 = vmul.f32 %v3103, %v362
    %v3108 = vmul.f32 %v3106, %v362
    %v3109 = vadd.f32 %v3107, 1e-05
    %v3110 = vadd.f32 %v3108, 1e-05
    %v3111 = vrsqrt.pop %v3109
    %v3112 = vrsqrt.pop %v3110
    %v3113 = vmul.f32 %v3097, %v3111
    %v3114 = vmul.f32 %v3098, %v3112
    %v3116 = vlaneseq
    %v3117 = vshrl.u32 %v3116, 7
    %v3118 = vsub.s32 0, %v3117
    %v3119 = vrot.slane %v3087, %v3118
    %v3121 = vmul.f32 %v3113, %v3119
    %v3122 = vmul.f32 %v3114, %v3119
    %v3124 = vlaneseq
    %v3125 = vshrl.u32 %v3124, 7
    %v3126 = vsub.s32 0, %v3125
    %v3127 = vrot.slane %v3088, %v3126
    %v3129 = vadd.f32 %v3121, %v3127
    %v3130 = vadd.f32 %v3122, %v3127
    %v3131 = vmax.f32 %v3129, 0.0
    %v3132 = vmax.f32 %v3130, 0.0
    %v3133 = vld [vmem:[%s67] sm:$0xff]
    %v3134 = vld [vmem:[%s67 + $0x8] sm:$0xff]
    %v3135 = vld [vmem:[%s67 + $0x10] sm:$0xff]
    %v3136 = vld [vmem:[%s67 + $0x18] sm:$0xff]
    %v3137 = vld [vmem:[%s69] sm:$0x1]
    %v3139 = vlaneseq
    %v3140 = vshrl.u32 %v3139, 7
    %v3141 = vsub.s32 0, %v3140
    %v3142 = vrot.slane %v3137, %v3141
    %v3145 = vsel %vm272, %v3131, 0
    %v3148 = vsel %vm272, %v3132, 0
    %3150 = vmatprep.subr.mxu0 0.0
    %3151 = vmatpush1.msra.mxu0 %v3133
    %3152 = vmatprep.subr.mxu0 0.0
    %3153 = vmatpush1.msra.mxu0 %v3134
    %3154 = vmatprep.subr.mxu0 0.0
    %3155 = vmatpush1.msra.mxu0 %v3135
    %3156 = vmatprep.subr.mxu0 0.0
    %3157 = vmatpush1.msra.mxu0 %v3136
    %3158 = vmatprep.subr.mxu0 0.0
    %3159 = vmatpush1.msra.mxu0 0.0
    %3160 = vmatprep.subr.mxu0 0.0
    %3161 = vmatpush1.msra.mxu0 0.0
    %3162 = vmatprep.subr.mxu0 0.0
    %3163 = vmatpush1.msra.mxu0 0.0
    %3164 = vmatprep.subr.mxu0 0.0
    %3165 = vmatpush1.msra.mxu0 0.0
    %3166 = vmatprep.subr.mxu0 0.0
    %3167 = vmatpush1.msra.mxu0 0.0
    %3168 = vmatprep.subr.mxu0 0.0
    %3169 = vmatpush1.msra.mxu0 0.0
    %3170 = vmatprep.subr.mxu0 0.0
    %3171 = vmatpush1.msra.mxu0 0.0
    %3172 = vmatprep.subr.mxu0 0.0
    %3173 = vmatpush1.msra.mxu0 0.0
    %3174 = vmatprep.subr.mxu0 0.0
    %3175 = vmatpush1.msra.mxu0 0.0
    %3176 = vmatprep.subr.mxu0 0.0
    %3177 = vmatpush1.msra.mxu0 0.0
    %3178 = vmatprep.subr.mxu0 0.0
    %3179 = vmatpush1.msra.mxu0 0.0
    %3180 = vmatprep.subr.mxu0 0.0
    %3181 = vmatpush1.msra.mxu0 0.0
    %3182 = vmatprep.subr.mxu0 0.0
    %3183 = vmatpush1.msra.mxu0 0.0
    %3184 = vmatprep.subr.mxu0 0.0
    %3185 = vmatpush1.msra.mxu0 0.0
    %3186 = vmatprep.subr.mxu0 0.0
    %3187 = vmatpush1.msra.mxu0 0.0
    %3188 = vmatprep.subr.mxu0 0.0
    %3189 = vmatpush1.msra.mxu0 0.0
    %3190 = vmatprep.subr.mxu0 0.0
    %3191 = vmatpush1.msra.mxu0 0.0
    %3192 = vmatprep.subr.mxu0 0.0
    %3193 = vmatpush1.msra.mxu0 0.0
    %3194 = vmatprep.subr.mxu0 0.0
    %3195 = vmatpush1.msra.mxu0 0.0
    %3196 = vmatprep.subr.mxu0 0.0
    %3197 = vmatpush1.msra.mxu0 0.0
    %3198 = vmatprep.subr.mxu0 0.0
    %3199 = vmatpush1.msra.mxu0 0.0
    %3200 = vmatprep.subr.mxu0 0.0
    %3201 = vmatpush1.msra.mxu0 0.0
    %3202 = vmatprep.subr.mxu0 0.0
    %3203 = vmatpush1.msra.mxu0 0.0
    %3204 = vmatprep.subr.mxu0 0.0
    %3205 = vmatpush1.msra.mxu0 0.0
    %3206 = vmatprep.subr.mxu0 0.0
    %3207 = vmatpush1.msra.mxu0 0.0
    %3208 = vmatprep.subr.mxu0 0.0
    %3209 = vmatpush1.msra.mxu0 0.0
    %3210 = vmatprep.subr.mxu0 0.0
    %3211 = vmatpush1.msra.mxu0 0.0
    %3212 = vmatprep.subr.mxu0 0.0
    %3213 = vmatpush1.msra.mxu0 0.0
    %3214 = vmatprep.mubr.f32.mxu0 0.0
    %3215 = vmatmul.mubr.f32.gmra.mrb[0].mxu0 %v3145
    %v3216 = vpop.f32.mrb[0].mxu0
    %v3217 = vadd.f32 %v3142, %v3216
    %v3218 = vpop.f32.mrb[0].mxu0
    %3219 = vmatprep.mubr.f32.mxu0 0.0
    %3220 = vmatmul.mubr.f32.gmra.mrb[0].mxu0 %v3148
    %v3221 = vpop.f32.mrb[0].mxu0
    %v3222 = vadd.f32 %v3142, %v3221
    %v3223 = vpop.f32.mrb[0].mxu0
    %3224 = vdwg.mxu0
    %v3225 = vadd.f32 %v3217, %v147
    %v3226 = vadd.f32 %v3222, %v148
    %3227 = vst.msk [vmem:[#allocation2] sm:$0xff] %vm272, %v3225
    %3228 = vst.msk [vmem:[#allocation2 + $0x8] sm:$0xff] %vm272, %v3226
    // Predicated region
    $region142: #{forward_pallas.1} parent=1 // pred_check
      _
    $region143: #{forward_pallas.1} parent=1 // pred_check_branch
      %3230 = sbr.rel (0) target = $region145
    $region144: #{forward_pallas.1} parent=1 // pred_region
      %s3232 = ssub.s32 256, 256
      %3233 = vsyncadd [#allocation3], %s3232
      %s3234 = sshll.u32 [#allocation2], 4
      %s3235 = int_to_ptr.vmem [resolvable:$true] %s3234
      %3240 = dma.vmem_to_hbm [thread:$0]  %s3235, 256, %s71, [#allocation3], 128, 128, 8
    $region145: #{forward_pallas.1} parent=1 // pred_fallthru
      _
    // Predicated region
    $region146: #{forward_pallas.1} parent=1 // pred_check
      _
    $region147: #{forward_pallas.1} parent=1 // pred_check_branch
      %3242 = sbr.rel (0) target = $region149
    $region148: #{forward_pallas.1} parent=1 // pred_region
      %3243 = dma.done [#allocation3], 256
    $region149: #{forward_pallas.1} parent=1 // pred_fallthru
      _
    %3244 = vsyncpa [#allocation3], 1

</llo_original>
